<compile_context>
chip_gen: v5e
topology: v5e:2x2
jax: 0.10.0
libtpu: 0.0.40
codegen_flags: <defaults>
</compile_context>

<pallas_src>
import jax
import jax.numpy as jnp
from jax.experimental import pallas as pl
from jax.experimental.pallas import tpu as pltpu


# ----------------------------------------------------------------------------
# Pallas kernel: fused  Y = relu(X @ W + b)  (bf16 operands, f32 epilogue)
# ----------------------------------------------------------------------------
def _conv_gemm_kernel(x_ref, w_ref, b_ref, o_ref):
    y = jnp.dot(x_ref[...], w_ref[...], preferred_element_type=jnp.float32)
    y = jnp.maximum(y + b_ref[...], 0.0)
    o_ref[...] = y.astype(o_ref.dtype)


def conv_gemm(patches, w2d, b, *, tm=None):
    """relu(patches @ w2d + b), optionally tiled over rows.

    patches: (M, K) bf16, w2d: (K, O) bf16, b: (O,) f32  ->  (M, O) bf16.
    """
    M, K = patches.shape
    O = w2d.shape[1]
    if tm is None or tm >= M:
        tm, grid_m, Mp = M, 1, M
    else:
        grid_m = pl.cdiv(M, tm)
        Mp = grid_m * tm
        if Mp != M:                     # zero-pad rows so blocks tile exactly
            patches = jnp.pad(patches, ((0, Mp - M), (0, 0)))
    out = pl.pallas_call(
        _conv_gemm_kernel,
        out_shape=jax.ShapeDtypeStruct((Mp, O), jnp.bfloat16),
        grid=(grid_m,),
        in_specs=[
            pl.BlockSpec((tm, K), lambda i: (i, 0)),   # patch rows (tiled)
            pl.BlockSpec((K, O), lambda i: (0, 0)),    # weight (resident)
            pl.BlockSpec((1, O), lambda i: (0, 0)),    # bias (resident)
        ],
        out_specs=pl.BlockSpec((tm, O), lambda i: (i, 0)),
        compiler_params=pltpu.CompilerParams(
            dimension_semantics=("parallel",)),        # lets 2 TCs split M on v7x
    )(patches, w2d, b.reshape(1, O))
    return out[:M] if Mp != M else out


# ----------------------------------------------------------------------------
# Pallas kernel: fused layer4-GEMM (K streamed) + FC tail + softmax
# ----------------------------------------------------------------------------
def _tail_kernel(x4_ref, w4_ref, b4_ref, w5_ref, b5_ref, w6_ref, b6_ref,
                 w7_ref, b7_ref, o_ref, acc_ref):
    k = pl.program_id(0)

    @pl.when(k == 0)
    def _():
        acc_ref[...] = jnp.zeros_like(acc_ref)

    # Stream the 4096x512 bf16 layer-4 weight through VMEM in K-chunks.
    acc_ref[...] += jnp.dot(x4_ref[...], w4_ref[...],
                            preferred_element_type=jnp.float32)

    @pl.when(k == pl.num_programs(0) - 1)
    def _():
        h = jnp.maximum(acc_ref[...] + b4_ref[...], 0.0)              # layer4 + relu
        h = jnp.dot(h.astype(jnp.bfloat16), w5_ref[...],
                    preferred_element_type=jnp.float32) + b5_ref[...]
        h = jnp.maximum(h, 0.0)                                       # layer5 + relu
        h = jnp.dot(h.astype(jnp.bfloat16), w6_ref[...],
                    preferred_element_type=jnp.float32) + b6_ref[...]
        h = jnp.maximum(h, 0.0)                                       # layer6 + relu
        logits = jnp.dot(h.astype(jnp.bfloat16), w7_ref[...],
                         preferred_element_type=jnp.float32) + b7_ref[...]
        m = jnp.max(logits, axis=-1, keepdims=True)                   # softmax (f32)
        e = jnp.exp(logits - m)
        o_ref[...] = (e / jnp.sum(e, axis=-1, keepdims=True)).astype(o_ref.dtype)


def tail_fused(x4, w4, b4, w5, b5, w6, b6, w7, b7, *, tk=512):
    """x4: (N, 4096) bf16 -> (N, 6) f32 softmax probabilities."""
    n, k4 = x4.shape
    nk = k4 // tk
    return pl.pallas_call(
        _tail_kernel,
        out_shape=jax.ShapeDtypeStruct((n, 6), jnp.float32),
        grid=(nk,),
        in_specs=[
            pl.BlockSpec((n, tk), lambda k: (0, k)),      # x4 K-chunk
            pl.BlockSpec((tk, 512), lambda k: (k, 0)),    # w4 K-chunk (streamed)
            pl.BlockSpec((1, 512), lambda k: (0, 0)),     # b4       (resident)
            pl.BlockSpec((512, 128), lambda k: (0, 0)),   # w5       (resident)
            pl.BlockSpec((1, 128), lambda k: (0, 0)),     # b5
            pl.BlockSpec((128, 32), lambda k: (0, 0)),    # w6
            pl.BlockSpec((1, 32), lambda k: (0, 0)),      # b6
            pl.BlockSpec((32, 6), lambda k: (0, 0)),      # w7
            pl.BlockSpec((1, 6), lambda k: (0, 0)),       # b7
        ],
        out_specs=pl.BlockSpec((n, 6), lambda k: (0, 0)),
        scratch_shapes=[pltpu.VMEM((n, 512), jnp.float32)],   # layer-4 accumulator
        compiler_params=pltpu.CompilerParams(
            dimension_semantics=("arbitrary",)),              # K is a reduction
    )(x4, w4, b4.reshape(1, 512), w5, b5.reshape(1, 128),
      w6, b6.reshape(1, 32), w7, b7.reshape(1, 6))


# ----------------------------------------------------------------------------
# im2col glue (NHWC, (kh, kw, C) patch order -> no activation transposes)
# TODO(synk): fold the strided-window patch extraction into the conv kernels
#             (needs in-kernel strided gather support).
# ----------------------------------------------------------------------------
def im2col_nhwc(x, kh, kw, stride, padding):
    """x: (N, H, W, C) -> (N*oh*ow, kh*kw*C) with features in (kh, kw, C) order."""
    if padding > 0:
        x = jnp.pad(x, ((0, 0), (padding, padding), (padding, padding), (0, 0)))
    n, h, w, c = x.shape
    oh = (h - kh) // stride + 1
    ow = (w - kw) // stride + 1
    cols = []
    for i in range(kh):
        for j in range(kw):
            cols.append(x[:, i:i + stride * oh:stride, j:j + stride * ow:stride, :])
    cols = jnp.stack(cols, axis=3)                     # (N, oh, ow, kh*kw, C)
    return cols.reshape(n * oh * ow, kh * kw * c), oh, ow


def conv2d_relu_nhwc(x, w2d, b, kh, kw, stride, padding, *, tm=None):
    """x: (N, H, W, C) bf16; w2d: (kh*kw*C, O) bf16 -> (N, oh, ow, O) bf16."""
    n = x.shape[0]
    o = w2d.shape[1]
    patches, oh, ow = im2col_nhwc(x, kh, kw, stride, padding)
    y = conv_gemm(patches, w2d, b, tm=tm)
    return y.reshape(n, oh, ow, o)


# ----------------------------------------------------------------------------
# Parameter init (PyTorch layout / default-style uniform bounds) + bf16 packing
# ----------------------------------------------------------------------------
def _init_conv(key, out_c, in_c, kh, kw):
    fan_in = in_c * kh * kw
    bound = 1.0 / fan_in ** 0.5
    kw_, kb_ = jax.random.split(key)
    w = jax.random.uniform(kw_, (out_c, in_c, kh, kw), jnp.float32, -bound, bound)
    b = jax.random.uniform(kb_, (out_c,), jnp.float32, -bound, bound)
    return w, b


def _init_linear(key, in_f, out_f):
    bound = 1.0 / in_f ** 0.5
    kw_, kb_ = jax.random.split(key)
    w = jax.random.uniform(kw_, (in_f, out_f), jnp.float32, -bound, bound)  # == torch W.T
    b = jax.random.uniform(kb_, (out_f,), jnp.float32, -bound, bound)
    return w, b


def init_pick_params(key):
    ks = jax.random.split(key, 7)
    p = {}
    p["w1"], p["b1"] = _init_conv(ks[0], 32, 2, 8, 8)
    p["w2"], p["b2"] = _init_conv(ks[1], 64, 32, 4, 4)
    p["w3"], p["b3"] = _init_conv(ks[2], 64, 64, 3, 3)
    p["w4"], p["b4"] = _init_conv(ks[3], 512, 64, 8, 8)
    p["w5"], p["b5"] = _init_linear(ks[4], 512, 128)
    p["w6"], p["b6"] = _init_linear(ks[5], 128, 32)
    p["w7"], p["b7"] = _init_linear(ks[6], 32, 6)
    return p


def _pack_conv(w):
    # (O, C, kh, kw) -> (kh*kw*C, O) bf16, matching the (kh, kw, C) patch order.
    o, c, kh, kw = w.shape
    return w.transpose(2, 3, 1, 0).reshape(kh * kw * c, o).astype(jnp.bfloat16)


def pack_pick_params(p):
    """One-time repack into bf16 GEMM layout (halves HBM bytes, native MXU rate)."""
    q = {}
    for i in (1, 2, 3, 4):
        q[f"w{i}"] = _pack_conv(p[f"w{i}"])
        q[f"b{i}"] = p[f"b{i}"].astype(jnp.float32)
    for i in (5, 6, 7):
        q[f"w{i}"] = p[f"w{i}"].astype(jnp.bfloat16)
        q[f"b{i}"] = p[f"b{i}"].astype(jnp.float32)
    return q


# ----------------------------------------------------------------------------
# Forward pass (mirrors Pick.forward)
# ----------------------------------------------------------------------------
@jax.jit
def pick_forward(packed, x_nchw):
    """x_nchw: (N, 2, 120, 120) f32 -> (N, 6) softmax probabilities (f32)."""
    x = x_nchw.transpose(0, 2, 3, 1).astype(jnp.bfloat16)                    # NHWC once
    x = conv2d_relu_nhwc(x, packed["w1"], packed["b1"], 8, 8, 4, 0, tm=896)  # (N,29,29,32)
    x = conv2d_relu_nhwc(x, packed["w2"], packed["b2"], 4, 4, 3, 1)          # (N,10,10,64)
    x = conv2d_relu_nhwc(x, packed["w3"], packed["b3"], 3, 3, 1, 0)          # (N, 8, 8,64)
    x4 = x.reshape(x.shape[0], -1)                                           # (N, 4096)
    return tail_fused(x4, packed["w4"], packed["b4"], packed["w5"], packed["b5"],
                      packed["w6"], packed["b6"], packed["w7"], packed["b7"])


if __name__ == "__main__":
    key = jax.random.PRNGKey(0)
    k_param, k_x = jax.random.split(key)

    params = init_pick_params(k_param)
    packed = pack_pick_params(params)

    # batch=2, in_channels=2, spatial 120x120 (required so the flatten yields 512 features)
    x = jax.random.normal(k_x, (2, 2, 120, 120), dtype=jnp.float32)

    out = jax.block_until_ready(pick_forward(packed, x))

    assert out.shape == (2, 6), out.shape
    assert bool(jnp.all(jnp.isfinite(out)))
    # softmax rows must sum to 1
    assert bool(jnp.allclose(jnp.sum(out, axis=-1), 1.0, atol=1e-4))
    print("KERNEL_OK")
</pallas_src>

<mosaic_0001>
module attributes {stable_mosaic.version = 11 : i64} {
  func.func @_conv_gemm_kernel(%arg0: i32, %arg1: memref<896x128xbf16, #tpu.memory_space<vmem>>, %arg2: memref<128x32xbf16, #tpu.memory_space<vmem>>, %arg3: memref<1x32xf32, #tpu.memory_space<vmem>>, %arg4: memref<896x32xbf16, #tpu.memory_space<vmem>>) attributes {dimension_semantics = [#tpu.dimension_semantics<parallel>], iteration_bounds = array<i64: 2>, scalar_prefetch = 0 : i64, scratch_operands = 0 : i64, tpu.core_type = #tpu.core_type<tc>, window_params = [{transform_indices = @transform_0, window_bounds = array<i64: 896, 128>}, {pipeline_mode = #tpu.pipeline_mode<synchronous>, transform_indices = @transform_1, window_bounds = array<i64: 128, 32>}, {pipeline_mode = #tpu.pipeline_mode<synchronous>, transform_indices = @transform_2, window_bounds = array<i64: 1, 32>}, {transform_indices = @transform_3, window_bounds = array<i64: 896, 32>}]} {
    %c0 = arith.constant 0 : index
    %c0_0 = arith.constant 0 : index
    %0 = vector.load %arg1[%c0, %c0_0] : memref<896x128xbf16, #tpu.memory_space<vmem>>, vector<896x128xbf16>
    %c0_1 = arith.constant 0 : index
    %c0_2 = arith.constant 0 : index
    %1 = vector.load %arg2[%c0_1, %c0_2] : memref<128x32xbf16, #tpu.memory_space<vmem>>, vector<128x32xbf16>
    %cst = arith.constant dense<0.000000e+00> : vector<896x32xf32>
    %2 = tpu.matmul %0, %1, %cst {dimension_numbers = #tpu.dot_dimension_numbers<[1], [0], [0], [1], [0, 0, 1, 1], [], []>} : vector<896x128xbf16>, vector<128x32xbf16>, vector<896x32xf32> -> vector<896x32xf32>
    %c0_3 = arith.constant 0 : index
    %c0_4 = arith.constant 0 : index
    %3 = vector.load %arg3[%c0_3, %c0_4] : memref<1x32xf32, #tpu.memory_space<vmem>>, vector<1x32xf32>
    %4 = vector.broadcast %3 : vector<1x32xf32> to vector<896x32xf32>
    %5 = arith.addf %2, %4 : vector<896x32xf32>
    %cst_5 = arith.constant 0.000000e+00 : f32
    %6 = vector.broadcast %cst_5 : f32 to vector<896x32xf32>
    %7 = arith.maximumf %5, %6 : vector<896x32xf32>
    %8 = arith.truncf %7 : vector<896x32xf32> to vector<896x32xbf16>
    %c0_6 = arith.constant 0 : index
    %c0_7 = arith.constant 0 : index
    %9 = vector.load %arg4[%c0_6, %c0_7] : memref<896x32xbf16, #tpu.memory_space<vmem>>, vector<896x32xbf16>
    tpu.vector_store %arg4[%c0_6, %c0_7], %8 {strides = array<i32>} : memref<896x32xbf16, #tpu.memory_space<vmem>>, vector<896x32xbf16>,
    return
  }
  func.func @transform_0(%arg0: i32) -> (i32, i32) {
    %c0_i32 = arith.constant 0 : i32
    %c0_i32_0 = arith.constant 0 : i32
    return %arg0, %c0_i32 : i32, i32
  }
  func.func @transform_1(%arg0: i32) -> (i32, i32) {
    %c0_i32 = arith.constant 0 : i32
    %c0_i32_0 = arith.constant 0 : i32
    %c0_i32_1 = arith.constant 0 : i32
    return %c0_i32, %c0_i32_0 : i32, i32
  }
  func.func @transform_2(%arg0: i32) -> (i32, i32) {
    %c0_i32 = arith.constant 0 : i32
    %c0_i32_0 = arith.constant 0 : i32
    %c0_i32_1 = arith.constant 0 : i32
    return %c0_i32, %c0_i32_0 : i32, i32
  }
  func.func @transform_3(%arg0: i32) -> (i32, i32) {
    %c0_i32 = arith.constant 0 : i32
    %c0_i32_0 = arith.constant 0 : i32
    return %arg0, %c0_i32 : i32, i32
  }
}

module attributes {stable_mosaic.version = 11 : i64} {
  func.func @_conv_gemm_kernel(%arg0: i32, %arg1: memref<200x512xbf16, #tpu.memory_space<vmem>>, %arg2: memref<512x64xbf16, #tpu.memory_space<vmem>>, %arg3: memref<1x64xf32, #tpu.memory_space<vmem>>, %arg4: memref<200x64xbf16, #tpu.memory_space<vmem>>) attributes {dimension_semantics = [#tpu.dimension_semantics<parallel>], iteration_bounds = array<i64: 1>, scalar_prefetch = 0 : i64, scratch_operands = 0 : i64, tpu.core_type = #tpu.core_type<tc>, window_params = [{transform_indices = @transform_0, window_bounds = array<i64: 200, 512>}, {pipeline_mode = #tpu.pipeline_mode<synchronous>, transform_indices = @transform_1, window_bounds = array<i64: 512, 64>}, {pipeline_mode = #tpu.pipeline_mode<synchronous>, transform_indices = @transform_2, window_bounds = array<i64: 1, 64>}, {transform_indices = @transform_3, window_bounds = array<i64: 200, 64>}]} {
    %c0 = arith.constant 0 : index
    %c0_0 = arith.constant 0 : index
    %0 = vector.load %arg1[%c0, %c0_0] : memref<200x512xbf16, #tpu.memory_space<vmem>>, vector<200x512xbf16>
    %c0_1 = arith.constant 0 : index
    %c0_2 = arith.constant 0 : index
    %1 = vector.load %arg2[%c0_1, %c0_2] : memref<512x64xbf16, #tpu.memory_space<vmem>>, vector<512x64xbf16>
    %cst = arith.constant dense<0.000000e+00> : vector<200x64xf32>
    %2 = tpu.matmul %0, %1, %cst {dimension_numbers = #tpu.dot_dimension_numbers<[1], [0], [0], [1], [0, 0, 1, 1], [], []>} : vector<200x512xbf16>, vector<512x64xbf16>, vector<200x64xf32> -> vector<200x64xf32>
    %c0_3 = arith.constant 0 : index
    %c0_4 = arith.constant 0 : index
    %3 = vector.load %arg3[%c0_3, %c0_4] : memref<1x64xf32, #tpu.memory_space<vmem>>, vector<1x64xf32>
    %4 = vector.broadcast %3 : vector<1x64xf32> to vector<200x64xf32>
    %5 = arith.addf %2, %4 : vector<200x64xf32>
    %cst_5 = arith.constant 0.000000e+00 : f32
    %6 = vector.broadcast %cst_5 : f32 to vector<200x64xf32>
    %7 = arith.maximumf %5, %6 : vector<200x64xf32>
    %8 = arith.truncf %7 : vector<200x64xf32> to vector<200x64xbf16>
    %c0_6 = arith.constant 0 : index
    %c0_7 = arith.constant 0 : index
    %9 = vector.load %arg4[%c0_6, %c0_7] : memref<200x64xbf16, #tpu.memory_space<vmem>>, vector<200x64xbf16>
    tpu.vector_store %arg4[%c0_6, %c0_7], %8 {strides = array<i32>} : memref<200x64xbf16, #tpu.memory_space<vmem>>, vector<200x64xbf16>,
    return
  }
  func.func @transform_0(%arg0: i32) -> (i32, i32) {
    %c0_i32 = arith.constant 0 : i32
    %c0_i32_0 = arith.constant 0 : i32
    return %arg0, %c0_i32 : i32, i32
  }
  func.func @transform_1(%arg0: i32) -> (i32, i32) {
    %c0_i32 = arith.constant 0 : i32
    %c0_i32_0 = arith.constant 0 : i32
    %c0_i32_1 = arith.constant 0 : i32
    return %c0_i32, %c0_i32_0 : i32, i32
  }
  func.func @transform_2(%arg0: i32) -> (i32, i32) {
    %c0_i32 = arith.constant 0 : i32
    %c0_i32_0 = arith.constant 0 : i32
    %c0_i32_1 = arith.constant 0 : i32
    return %c0_i32, %c0_i32_0 : i32, i32
  }
  func.func @transform_3(%arg0: i32) -> (i32, i32) {
    %c0_i32 = arith.constant 0 : i32
    %c0_i32_0 = arith.constant 0 : i32
    return %arg0, %c0_i32 : i32, i32
  }
}

module attributes {stable_mosaic.version = 11 : i64} {
  func.func @_conv_gemm_kernel(%arg0: i32, %arg1: memref<128x576xbf16, #tpu.memory_space<vmem>>, %arg2: memref<576x64xbf16, #tpu.memory_space<vmem>>, %arg3: memref<1x64xf32, #tpu.memory_space<vmem>>, %arg4: memref<128x64xbf16, #tpu.memory_space<vmem>>) attributes {dimension_semantics = [#tpu.dimension_semantics<parallel>], iteration_bounds = array<i64: 1>, scalar_prefetch = 0 : i64, scratch_operands = 0 : i64, tpu.core_type = #tpu.core_type<tc>, window_params = [{transform_indices = @transform_0, window_bounds = array<i64: 128, 576>}, {pipeline_mode = #tpu.pipeline_mode<synchronous>, transform_indices = @transform_1, window_bounds = array<i64: 576, 64>}, {pipeline_mode = #tpu.pipeline_mode<synchronous>, transform_indices = @transform_2, window_bounds = array<i64: 1, 64>}, {transform_indices = @transform_3, window_bounds = array<i64: 128, 64>}]} {
    %c0 = arith.constant 0 : index
    %c0_0 = arith.constant 0 : index
    %0 = vector.load %arg1[%c0, %c0_0] : memref<128x576xbf16, #tpu.memory_space<vmem>>, vector<128x576xbf16>
    %c0_1 = arith.constant 0 : index
    %c0_2 = arith.constant 0 : index
    %1 = vector.load %arg2[%c0_1, %c0_2] : memref<576x64xbf16, #tpu.memory_space<vmem>>, vector<576x64xbf16>
    %cst = arith.constant dense<0.000000e+00> : vector<128x64xf32>
    %2 = tpu.matmul %0, %1, %cst {dimension_numbers = #tpu.dot_dimension_numbers<[1], [0], [0], [1], [0, 0, 1, 1], [], []>} : vector<128x576xbf16>, vector<576x64xbf16>, vector<128x64xf32> -> vector<128x64xf32>
    %c0_3 = arith.constant 0 : index
    %c0_4 = arith.constant 0 : index
    %3 = vector.load %arg3[%c0_3, %c0_4] : memref<1x64xf32, #tpu.memory_space<vmem>>, vector<1x64xf32>
    %4 = vector.broadcast %3 : vector<1x64xf32> to vector<128x64xf32>
    %5 = arith.addf %2, %4 : vector<128x64xf32>
    %cst_5 = arith.constant 0.000000e+00 : f32
    %6 = vector.broadcast %cst_5 : f32 to vector<128x64xf32>
    %7 = arith.maximumf %5, %6 : vector<128x64xf32>
    %8 = arith.truncf %7 : vector<128x64xf32> to vector<128x64xbf16>
    %c0_6 = arith.constant 0 : index
    %c0_7 = arith.constant 0 : index
    %9 = vector.load %arg4[%c0_6, %c0_7] : memref<128x64xbf16, #tpu.memory_space<vmem>>, vector<128x64xbf16>
    tpu.vector_store %arg4[%c0_6, %c0_7], %8 {strides = array<i32>} : memref<128x64xbf16, #tpu.memory_space<vmem>>, vector<128x64xbf16>,
    return
  }
  func.func @transform_0(%arg0: i32) -> (i32, i32) {
    %c0_i32 = arith.constant 0 : i32
    %c0_i32_0 = arith.constant 0 : i32
    return %arg0, %c0_i32 : i32, i32
  }
  func.func @transform_1(%arg0: i32) -> (i32, i32) {
    %c0_i32 = arith.constant 0 : i32
    %c0_i32_0 = arith.constant 0 : i32
    %c0_i32_1 = arith.constant 0 : i32
    return %c0_i32, %c0_i32_0 : i32, i32
  }
  func.func @transform_2(%arg0: i32) -> (i32, i32) {
    %c0_i32 = arith.constant 0 : i32
    %c0_i32_0 = arith.constant 0 : i32
    %c0_i32_1 = arith.constant 0 : i32
    return %c0_i32, %c0_i32_0 : i32, i32
  }
  func.func @transform_3(%arg0: i32) -> (i32, i32) {
    %c0_i32 = arith.constant 0 : i32
    %c0_i32_0 = arith.constant 0 : i32
    return %arg0, %c0_i32 : i32, i32
  }
}

module attributes {stable_mosaic.version = 11 : i64} {
  func.func @_tail_kernel(%arg0: i32, %arg1: memref<2x512xbf16, #tpu.memory_space<vmem>>, %arg2: memref<512x512xbf16, #tpu.memory_space<vmem>>, %arg3: memref<1x512xf32, #tpu.memory_space<vmem>>, %arg4: memref<512x128xbf16, #tpu.memory_space<vmem>>, %arg5: memref<1x128xf32, #tpu.memory_space<vmem>>, %arg6: memref<128x32xbf16, #tpu.memory_space<vmem>>, %arg7: memref<1x32xf32, #tpu.memory_space<vmem>>, %arg8: memref<32x6xbf16, #tpu.memory_space<vmem>>, %arg9: memref<1x6xf32, #tpu.memory_space<vmem>>, %arg10: memref<2x6xf32, #tpu.memory_space<vmem>>, %arg11: memref<2x512xf32, #tpu.memory_space<vmem>>) attributes {dimension_semantics = [#tpu.dimension_semantics<arbitrary>], iteration_bounds = array<i64: 8>, scalar_prefetch = 0 : i64, scratch_operands = 1 : i64, tpu.core_type = #tpu.core_type<tc>, window_params = [{transform_indices = @transform_0, window_bounds = array<i64: 2, 512>}, {transform_indices = @transform_1, window_bounds = array<i64: 512, 512>}, {pipeline_mode = #tpu.pipeline_mode<synchronous>, transform_indices = @transform_2, window_bounds = array<i64: 1, 512>}, {pipeline_mode = #tpu.pipeline_mode<synchronous>, transform_indices = @transform_3, window_bounds = array<i64: 512, 128>}, {pipeline_mode = #tpu.pipeline_mode<synchronous>, transform_indices = @transform_4, window_bounds = array<i64: 1, 128>}, {pipeline_mode = #tpu.pipeline_mode<synchronous>, transform_indices = @transform_5, window_bounds = array<i64: 128, 32>}, {pipeline_mode = #tpu.pipeline_mode<synchronous>, transform_indices = @transform_6, window_bounds = array<i64: 1, 32>}, {pipeline_mode = #tpu.pipeline_mode<synchronous>, transform_indices = @transform_7, window_bounds = array<i64: 32, 6>}, {pipeline_mode = #tpu.pipeline_mode<synchronous>, transform_indices = @transform_8, window_bounds = array<i64: 1, 6>}, {pipeline_mode = #tpu.pipeline_mode<synchronous>, transform_indices = @transform_9, window_bounds = array<i64: 2, 6>}]} {
    %c0_i32 = arith.constant 0 : i32
    %0 = arith.cmpi eq, %arg0, %c0_i32 : i32
    %1 = arith.extui %0 : i1 to i32
    %c0_i32_0 = arith.constant 0 : i32
    %2 = arith.cmpi ne, %1, %c0_i32_0 : i32
    scf.if %2 {
      %cst_9 = arith.constant 0.000000e+00 : f32
      %12 = vector.broadcast %cst_9 : f32 to vector<2x512xf32>
      %c0_10 = arith.constant 0 : index
      %c0_11 = arith.constant 0 : index
      %13 = vector.load %arg11[%c0_10, %c0_11] : memref<2x512xf32, #tpu.memory_space<vmem>>, vector<2x512xf32>
      tpu.vector_store %arg11[%c0_10, %c0_11], %12 {strides = array<i32>} : memref<2x512xf32, #tpu.memory_space<vmem>>, vector<2x512xf32>,
    } else {
    }
    %c0 = arith.constant 0 : index
    %c0_1 = arith.constant 0 : index
    %3 = vector.load %arg11[%c0, %c0_1] : memref<2x512xf32, #tpu.memory_space<vmem>>, vector<2x512xf32>
    %c0_2 = arith.constant 0 : index
    %c0_3 = arith.constant 0 : index
    %4 = vector.load %arg1[%c0_2, %c0_3] : memref<2x512xbf16, #tpu.memory_space<vmem>>, vector<2x512xbf16>
    %c0_4 = arith.constant 0 : index
    %c0_5 = arith.constant 0 : index
    %5 = vector.load %arg2[%c0_4, %c0_5] : memref<512x512xbf16, #tpu.memory_space<vmem>>, vector<512x512xbf16>
    %cst = arith.constant dense<0.000000e+00> : vector<2x512xf32>
    %6 = tpu.matmul %4, %5, %cst {dimension_numbers = #tpu.dot_dimension_numbers<[1], [0], [0], [1], [0, 0, 1, 1], [], []>} : vector<2x512xbf16>, vector<512x512xbf16>, vector<2x512xf32> -> vector<2x512xf32>
    %7 = arith.addf %3, %6 : vector<2x512xf32>
    %c0_6 = arith.constant 0 : index
    %c0_7 = arith.constant 0 : index
    %8 = vector.load %arg11[%c0_6, %c0_7] : memref<2x512xf32, #tpu.memory_space<vmem>>, vector<2x512xf32>
    tpu.vector_store %arg11[%c0_6, %c0_7], %7 {strides = array<i32>} : memref<2x512xf32, #tpu.memory_space<vmem>>, vector<2x512xf32>,
    %c7_i32 = arith.constant 7 : i32
    %9 = arith.cmpi eq, %arg0, %c7_i32 : i32
    %10 = arith.extui %9 : i1 to i32
    %c0_i32_8 = arith.constant 0 : i32
    %11 = arith.cmpi ne, %10, %c0_i32_8 : i32
    scf.if %11 {
      %c0_9 = arith.constant 0 : index
      %c0_10 = arith.constant 0 : index
      %12 = vector.load %arg11[%c0_9, %c0_10] : memref<2x512xf32, #tpu.memory_space<vmem>>, vector<2x512xf32>
      %c0_11 = arith.constant 0 : index
      %c0_12 = arith.constant 0 : index
      %13 = vector.load %arg3[%c0_11, %c0_12] : memref<1x512xf32, #tpu.memory_space<vmem>>, vector<1x512xf32>
      %14 = vector.broadcast %13 : vector<1x512xf32> to vector<2x512xf32>
      %15 = arith.addf %12, %14 : vector<2x512xf32>
      %cst_13 = arith.constant 0.000000e+00 : f32
      %16 = vector.broadcast %cst_13 : f32 to vector<2x512xf32>
      %17 = arith.maximumf %15, %16 : vector<2x512xf32>
      %18 = arith.truncf %17 : vector<2x512xf32> to vector<2x512xbf16>
      %c0_14 = arith.constant 0 : index
      %c0_15 = arith.constant 0 : index
      %19 = vector.load %arg4[%c0_14, %c0_15] : memref<512x128xbf16, #tpu.memory_space<vmem>>, vector<512x128xbf16>
      %cst_16 = arith.constant dense<0.000000e+00> : vector<2x128xf32>
      %20 = tpu.matmul %18, %19, %cst_16 {dimension_numbers = #tpu.dot_dimension_numbers<[1], [0], [0], [1], [0, 0, 1, 1], [], []>} : vector<2x512xbf16>, vector<512x128xbf16>, vector<2x128xf32> -> vector<2x128xf32>
      %c0_17 = arith.constant 0 : index
      %c0_18 = arith.constant 0 : index
      %21 = vector.load %arg5[%c0_17, %c0_18] : memref<1x128xf32, #tpu.memory_space<vmem>>, vector<1x128xf32>
      %22 = vector.broadcast %21 : vector<1x128xf32> to vector<2x128xf32>
      %23 = arith.addf %20, %22 : vector<2x128xf32>
      %cst_19 = arith.constant 0.000000e+00 : f32
      %24 = vector.broadcast %cst_19 : f32 to vector<2x128xf32>
      %25 = arith.maximumf %23, %24 : vector<2x128xf32>
      %26 = arith.truncf %25 : vector<2x128xf32> to vector<2x128xbf16>
      %c0_20 = arith.constant 0 : index
      %c0_21 = arith.constant 0 : index
      %27 = vector.load %arg6[%c0_20, %c0_21] : memref<128x32xbf16, #tpu.memory_space<vmem>>, vector<128x32xbf16>
      %cst_22 = arith.constant dense<0.000000e+00> : vector<2x32xf32>
      %28 = tpu.matmul %26, %27, %cst_22 {dimension_numbers = #tpu.dot_dimension_numbers<[1], [0], [0], [1], [0, 0, 1, 1], [], []>} : vector<2x128xbf16>, vector<128x32xbf16>, vector<2x32xf32> -> vector<2x32xf32>
      %c0_23 = arith.constant 0 : index
      %c0_24 = arith.constant 0 : index
      %29 = vector.load %arg7[%c0_23, %c0_24] : memref<1x32xf32, #tpu.memory_space<vmem>>, vector<1x32xf32>
      %30 = vector.broadcast %29 : vector<1x32xf32> to vector<2x32xf32>
      %31 = arith.addf %28, %30 : vector<2x32xf32>
      %cst_25 = arith.constant 0.000000e+00 : f32
      %32 = vector.broadcast %cst_25 : f32 to vector<2x32xf32>
      %33 = arith.maximumf %31, %32 : vector<2x32xf32>
      %34 = arith.truncf %33 : vector<2x32xf32> to vector<2x32xbf16>
      %c0_26 = arith.constant 0 : index
      %c0_27 = arith.constant 0 : index
      %35 = vector.load %arg8[%c0_26, %c0_27] : memref<32x6xbf16, #tpu.memory_space<vmem>>, vector<32x6xbf16>
      %cst_28 = arith.constant dense<0.000000e+00> : vector<2x6xf32>
      %36 = tpu.matmul %34, %35, %cst_28 {dimension_numbers = #tpu.dot_dimension_numbers<[1], [0], [0], [1], [0, 0, 1, 1], [], []>} : vector<2x32xbf16>, vector<32x6xbf16>, vector<2x6xf32> -> vector<2x6xf32>
      %c0_29 = arith.constant 0 : index
      %c0_30 = arith.constant 0 : index
      %37 = vector.load %arg9[%c0_29, %c0_30] : memref<1x6xf32, #tpu.memory_space<vmem>>, vector<1x6xf32>
      %38 = vector.broadcast %37 : vector<1x6xf32> to vector<2x6xf32>
      %39 = arith.addf %36, %38 : vector<2x6xf32>
      %cst_31 = arith.constant dense<0xFF800000> : vector<2xf32>
      %40 = vector.multi_reduction <maximumf>, %39, %cst_31 [1] : vector<2x6xf32> to vector<2xf32>
      %41 = vector.shape_cast %40 : vector<2xf32> to vector<2x1xf32>
      %42 = vector.broadcast %41 : vector<2x1xf32> to vector<2x6xf32>
      %43 = arith.subf %39, %42 : vector<2x6xf32>
      %44 = math.exp %43 : vector<2x6xf32>
      %cst_32 = arith.constant dense<0.000000e+00> : vector<2xf32>
      %45 = vector.multi_reduction <add>, %44, %cst_32 [1] : vector<2x6xf32> to vector<2xf32>
      %46 = vector.shape_cast %45 : vector<2xf32> to vector<2x1xf32>
      %47 = vector.broadcast %46 : vector<2x1xf32> to vector<2x6xf32>
      %48 = arith.divf %44, %47 : vector<2x6xf32>
      %c0_33 = arith.constant 0 : index
      %c0_34 = arith.constant 0 : index
      %49 = vector.load %arg10[%c0_33, %c0_34] : memref<2x6xf32, #tpu.memory_space<vmem>>, vector<2x6xf32>
      tpu.vector_store %arg10[%c0_33, %c0_34], %48 {strides = array<i32>} : memref<2x6xf32, #tpu.memory_space<vmem>>, vector<2x6xf32>,
    } else {
    }
    return
  }
  func.func @transform_0(%arg0: i32) -> (i32, i32) {
    %c0_i32 = arith.constant 0 : i32
    %c0_i32_0 = arith.constant 0 : i32
    return %c0_i32, %arg0 : i32, i32
  }
  func.func @transform_1(%arg0: i32) -> (i32, i32) {
    %c0_i32 = arith.constant 0 : i32
    %c0_i32_0 = arith.constant 0 : i32
    return %arg0, %c0_i32 : i32, i32
  }
  func.func @transform_2(%arg0: i32) -> (i32, i32) {
    %c0_i32 = arith.constant 0 : i32
    %c0_i32_0 = arith.constant 0 : i32
    %c0_i32_1 = arith.constant 0 : i32
    return %c0_i32, %c0_i32_0 : i32, i32
  }
  func.func @transform_3(%arg0: i32) -> (i32, i32) {
    %c0_i32 = arith.constant 0 : i32
    %c0_i32_0 = arith.constant 0 : i32
    %c0_i32_1 = arith.constant 0 : i32
    return %c0_i32, %c0_i32_0 : i32, i32
  }
  func.func @transform_4(%arg0: i32) -> (i32, i32) {
    %c0_i32 = arith.constant 0 : i32
    %c0_i32_0 = arith.constant 0 : i32
    %c0_i32_1 = arith.constant 0 : i32
    return %c0_i32, %c0_i32_0 : i32, i32
  }
  func.func @transform_5(%arg0: i32) -> (i32, i32) {
    %c0_i32 = arith.constant 0 : i32
    %c0_i32_0 = arith.constant 0 : i32
    %c0_i32_1 = arith.constant 0 : i32
    return %c0_i32, %c0_i32_0 : i32, i32
  }
  func.func @transform_6(%arg0: i32) -> (i32, i32) {
    %c0_i32 = arith.constant 0 : i32
    %c0_i32_0 = arith.constant 0 : i32
    %c0_i32_1 = arith.constant 0 : i32
    return %c0_i32, %c0_i32_0 : i32, i32
  }
  func.func @transform_7(%arg0: i32) -> (i32, i32) {
    %c0_i32 = arith.constant 0 : i32
    %c0_i32_0 = arith.constant 0 : i32
    %c0_i32_1 = arith.constant 0 : i32
    return %c0_i32, %c0_i32_0 : i32, i32
  }
  func.func @transform_8(%arg0: i32) -> (i32, i32) {
    %c0_i32 = arith.constant 0 : i32
    %c0_i32_0 = arith.constant 0 : i32
    %c0_i32_1 = arith.constant 0 : i32
    return %c0_i32, %c0_i32_0 : i32, i32
  }
  func.func @transform_9(%arg0: i32) -> (i32, i32) {
    %c0_i32 = arith.constant 0 : i32
    %c0_i32_0 = arith.constant 0 : i32
    %c0_i32_1 = arith.constant 0 : i32
    return %c0_i32, %c0_i32_0 : i32, i32
  }
}

</mosaic_0001>

<llo_original>
// kernel: pick_forward.4
$region0: #{pick_forward.4}
  #allocation0 [shape = 'u32[]', space=smem, size = 0x4, offset = 0x4, fixed_abs, tag = 'smem constant byte address 0x4 - core index']
  #allocation1 [shape = 'u32[72,128]{1,0:T(1,128)}', space=vmem, size = 0x9000, scoped, tag = 'internal scratch']
  %s0 = inlined_call_operand.vmem [shape: bf16[1792,128], index: 0, kind: input, shape index: {}]
  %s1 = inlined_call_operand.vmem [shape: bf16[128,32], index: 1, kind: input, shape index: {}]
  %s2 = inlined_call_operand.vmem [shape: f32[1,32], index: 2, kind: input, shape index: {}]
  %s3 = inlined_call_operand.vmem [shape: bf16[1792,32], index: 3, kind: output, shape index: {}]
  %s4 = sld [smem:[#allocation0]]
  $region45: #{pick_forward.4} parent=0
    _
  %s6 = ssub.s32 1, %s4
  %s7 = scalar_select 0, %s6, %s4
  loop: start=0, step=1, limit=4
  $region2: #{pick_forward.4} parent=0 // loop_pre_header
    _
  $region3: #{pick_forward.4} parent=0 // loop_header
    %s9 = sphi 0, %s13
    %p10 = scmp.ge.s32.totalorder %s9, 4
    %s19 = sphi 0, %s21
    %s22 = sphi 0, %s19
    %s23 = sphi 0, %s22
    %s39 = sphi 0, %s23
    %s43 = sphi 0, %s43
    %s45 = sphi 0, %s43
    %s46 = sphi 0, %s45
    %s60 = sphi 0, %s46
    %s64 = sphi 0, %s64
    %s66 = sphi 0, %s64
    %s67 = sphi 0, %s66
    %s81 = sphi 0, %s67
    %s87 = sphi 0, %s89
    %s90 = sphi 0, %s87
    %s91 = sphi 0, %s90
    %s107 = sphi 0, %s91
  $region4: #{pick_forward.4} parent=0 // loop_header_branch
    %12 = sbr.rel (%p10) target = $region8
  $region5: #{pick_forward.4} parent=0 // loop_body
    %s14 = ssub.s32 %s9, 1
    %s15 = ssub.s32 %s9, 2
    %s16 = sadd.s32 %s9, 1
    %s17 = ssub.s32 %s9, %s16
    %p18 = scmp.eq.s32.totalorder %s17, 0
    %s20 = sadd.s32 %s19, 1
    %s21 = scalar_select %p18, %s19, %s20
    %p24 = pneg %p18
    %p25 = scmp.eq.s32.totalorder %s9, 1
    %p26 = por %p24, %p25
    %p27 = scmp.ne.s32.totalorder %s19, %s22
    %p28 = scmp.eq.s32.totalorder %s9, 0
    %p29 = por %p27, %p28
    %p30 = scmp.ne.s32.totalorder %s19, %s22
    %p31 = scmp.eq.s32.totalorder %s14, 1
    %p32 = por %p30, %p31
    %p33 = scmp.ne.s32.totalorder %s22, %s23
    %p34 = scmp.eq.s32.totalorder %s14, 0
    %p35 = por %p33, %p34
    %p36 = scmp.ne.s32.totalorder %s22, %s23
    %p37 = scmp.eq.s32.totalorder %s15, 1
    %p38 = por %p36, %p37
    %p40 = scmp.ne.s32.totalorder %s23, %s39
    %p41 = scmp.eq.s32.totalorder %s15, 0
    %p42 = por %p40, %p41
    %s44 = sadd.s32 %s43, 1
    %p47 = scmp.eq.s32.totalorder %s9, 1
    %p48 = scmp.ne.s32.totalorder %s43, %s45
    %p49 = scmp.eq.s32.totalorder %s9, 0
    %p50 = por %p48, %p49
    %p51 = scmp.ne.s32.totalorder %s43, %s45
    %p52 = scmp.eq.s32.totalorder %s14, 1
    %p53 = por %p51, %p52
    %p54 = scmp.ne.s32.totalorder %s45, %s46
    %p55 = scmp.eq.s32.totalorder %s14, 0
    %p56 = por %p54, %p55
    %p57 = scmp.ne.s32.totalorder %s45, %s46
    %p58 = scmp.eq.s32.totalorder %s15, 1
    %p59 = por %p57, %p58
    %p61 = scmp.ne.s32.totalorder %s46, %s60
    %p62 = scmp.eq.s32.totalorder %s15, 0
    %p63 = por %p61, %p62
    %s65 = sadd.s32 %s64, 1
    %p68 = scmp.eq.s32.totalorder %s9, 1
    %p69 = scmp.ne.s32.totalorder %s64, %s66
    %p70 = scmp.eq.s32.totalorder %s9, 0
    %p71 = por %p69, %p70
    %p72 = scmp.ne.s32.totalorder %s64, %s66
    %p73 = scmp.eq.s32.totalorder %s14, 1
    %p74 = por %p72, %p73
    %p75 = scmp.ne.s32.totalorder %s66, %s67
    %p76 = scmp.eq.s32.totalorder %s14, 0
    %p77 = por %p75, %p76
    %p78 = scmp.ne.s32.totalorder %s66, %s67
    %p79 = scmp.eq.s32.totalorder %s15, 1
    %p80 = por %p78, %p79
    %p82 = scmp.ne.s32.totalorder %s67, %s81
    %p83 = scmp.eq.s32.totalorder %s15, 0
    %p84 = por %p82, %p83
    %s85 = ssub.s32 %s9, %s16
    %p86 = scmp.eq.s32.totalorder %s85, 0
    %s88 = sadd.s32 %s87, 1
    %s89 = scalar_select %p86, %s87, %s88
    %p92 = pneg %p86
    %p93 = scmp.eq.s32.totalorder %s9, 1
    %p94 = por %p92, %p93
    %p95 = scmp.ne.s32.totalorder %s87, %s90
    %p96 = scmp.eq.s32.totalorder %s9, 0
    %p97 = por %p95, %p96
    %p98 = scmp.ne.s32.totalorder %s87, %s90
    %p99 = scmp.eq.s32.totalorder %s14, 1
    %p100 = por %p98, %p99
    %p101 = scmp.ne.s32.totalorder %s90, %s91
    %p102 = scmp.eq.s32.totalorder %s14, 0
    %p103 = por %p101, %p102
    %p104 = scmp.ne.s32.totalorder %s90, %s91
    %p105 = scmp.eq.s32.totalorder %s15, 1
    %p106 = por %p104, %p105
    %p108 = scmp.ne.s32.totalorder %s91, %s107
    %p109 = scmp.eq.s32.totalorder %s15, 0
    %p110 = por %p108, %p109
    %p111 = scmp.le.s32.totalorder 1, %s9
    %p112 = scmp.lt.s32.totalorder %s9, 3
    %p113 = pnand %p111, %p112
    %p114 = pneg %p113
    // Predicated region
    $region9: #{pick_forward.4} parent=5 // pred_check
      _
    $region10: #{pick_forward.4} parent=5 // pred_check_branch
      %116 = sbr.rel (%p113) target = $region12
    $region11: #{pick_forward.4} parent=5 // pred_region
      %s117 = ssub.s32 %s9, 1
      // Predicated region
      $region13: #{pick_forward.4} parent=11 // pred_check
        %p118 = pneg %p56
      $region14: #{pick_forward.4} parent=11 // pred_check_branch
        %120 = sbr.rel (%p118) target = $region16
      $region15: #{pick_forward.4} parent=11 // pred_region
        _
      $region16: #{pick_forward.4} parent=11 // pred_fallthru
        _
      // Predicated region
      $region17: #{pick_forward.4} parent=11 // pred_check
        %p121 = pneg %p77
      $region18: #{pick_forward.4} parent=11 // pred_check_branch
        %123 = sbr.rel (%p121) target = $region20
      $region19: #{pick_forward.4} parent=11 // pred_region
        _
      $region20: #{pick_forward.4} parent=11 // pred_fallthru
        _
    $region12: #{pick_forward.4} parent=5 // pred_fallthru
      _
    %p124 = scmp.lt.s32.totalorder %s9, 2
    // Predicated region
    $region21: #{pick_forward.4} parent=5 // pred_check
      %p125 = pneg %p124
    $region22: #{pick_forward.4} parent=5 // pred_check_branch
      %127 = sbr.rel (%p125) target = $region24
    $region23: #{pick_forward.4} parent=5 // pred_region
      // Predicated region
      $region25: #{pick_forward.4} parent=23 // pred_check
        %p128 = pneg %p29
      $region26: #{pick_forward.4} parent=23 // pred_check_branch
        %130 = sbr.rel (%p128) target = $region28
      $region27: #{pick_forward.4} parent=23 // pred_region
        %s131 = smul.u32 112, %s9
        %p132 = scmp.lt.s32.totalorder %s131, 223
        %s133 = scalar_select %p132, %s131, 223
        %s134 = smul.addr %s133, 4
        %s135 = scalar_lea.vmem %s0, %s134
        %s136 = smul.u32 112, %s9
      $region28: #{pick_forward.4} parent=23 // pred_fallthru
        _
    $region24: #{pick_forward.4} parent=5 // pred_fallthru
      _
    %p137 = scmp.le.s32.totalorder 1, %s9
    %p138 = scmp.lt.s32.totalorder %s9, 3
    %p139 = pnand %p137, %p138
    %p140 = pneg %p139
    // Predicated region
    $region29: #{pick_forward.4} parent=5 // pred_check
      _
    $region30: #{pick_forward.4} parent=5 // pred_check_branch
      %142 = sbr.rel (%p139) target = $region32
    $region31: #{pick_forward.4} parent=5 // pred_region
      %s143 = ssub.s32 %s9, 1
      %s144 = smul.u32 112, %s14
      %p145 = scmp.lt.s32.totalorder %s144, 223
      %s146 = scalar_select %p145, %s144, 223
      %s147 = smul.addr %s146, 4
      %s148 = scalar_lea.vmem %s0, %s147
      %p149 = pneg %p35
      %p150 = pneg %p32
      %p151 = pneg %p56
      %p152 = pneg %p53
      %p153 = pneg %p77
      %p154 = pneg %p74
      %p155 = pneg %p103
      %p156 = pneg %p100
      %s157 = smul.u32 112, %s14
      %p158 = scmp.lt.s32.totalorder %s157, 223
      %s159 = scalar_select %p158, %s157, 223
      %s160 = smul.addr %s159, 4
      %s161 = scalar_lea.vmem %s3, %s160
      %s162 = smul.u32 112, %s14
      %p163 = scmp.lt.s32.totalorder %s162, 223
      %s164 = scalar_select %p163, %s162, 223
      %s165 = smul.addr %s164, 4
      %s166 = scalar_lea.vmem %s0, %s165
      %s167 = smul.u32 112, %s14
      %s168 = smul.u32 112, %s14
      %p169 = scmp.lt.s32.totalorder %s168, 223
      %s170 = scalar_select %p169, %s168, 223
      %s171 = smul.addr %s170, 4
      %s172 = scalar_lea.vmem %s3, %s171
      %s173 = smul.u32 112, %s14
      %v174 = vld [vmem:[%s166] sm:$0xf]
      %v175 = vld [vmem:[%s166 + $0x4] sm:$0xf]
      %v176 = vld [vmem:[%s166 + $0x8] sm:$0xf]
      %v177 = vld [vmem:[%s166 + $0xc] sm:$0xf]
      %v178 = vld [vmem:[%s166 + $0x10] sm:$0xf]
      %v179 = vld [vmem:[%s166 + $0x14] sm:$0xf]
      %v180 = vld [vmem:[%s166 + $0x18] sm:$0xf]
      %v181 = vld [vmem:[%s166 + $0x1c] sm:$0xf]
      %v182 = vld [vmem:[%s166 + $0x20] sm:$0xf]
      %v183 = vld [vmem:[%s166 + $0x24] sm:$0xf]
      %v184 = vld [vmem:[%s166 + $0x28] sm:$0xf]
      %v185 = vld [vmem:[%s166 + $0x2c] sm:$0xf]
      %v186 = vld [vmem:[%s166 + $0x30] sm:$0xf]
      %v187 = vld [vmem:[%s166 + $0x34] sm:$0xf]
      %v188 = vld [vmem:[%s166 + $0x38] sm:$0xf]
      %v189 = vld [vmem:[%s166 + $0x3c] sm:$0xf]
      %v190 = vld [vmem:[%s166 + $0x40] sm:$0xf]
      %v191 = vld [vmem:[%s166 + $0x44] sm:$0xf]
      %v192 = vld [vmem:[%s166 + $0x48] sm:$0xf]
      %v193 = vld [vmem:[%s166 + $0x4c] sm:$0xf]
      %v194 = vld [vmem:[%s166 + $0x50] sm:$0xf]
      %v195 = vld [vmem:[%s166 + $0x54] sm:$0xf]
      %v196 = vld [vmem:[%s166 + $0x58] sm:$0xf]
      %v197 = vld [vmem:[%s166 + $0x5c] sm:$0xf]
      %v198 = vld [vmem:[%s166 + $0x60] sm:$0xf]
      %v199 = vld [vmem:[%s166 + $0x64] sm:$0xf]
      %v200 = vld [vmem:[%s166 + $0x68] sm:$0xf]
      %v201 = vld [vmem:[%s166 + $0x6c] sm:$0xf]
      %v202 = vld [vmem:[%s166 + $0x70] sm:$0xf]
      %v203 = vld [vmem:[%s166 + $0x74] sm:$0xf]
      %v204 = vld [vmem:[%s166 + $0x78] sm:$0xf]
      %v205 = vld [vmem:[%s166 + $0x7c] sm:$0xf]
      %v206 = vld [vmem:[%s166 + $0x80] sm:$0xf]
      %v207 = vld [vmem:[%s166 + $0x84] sm:$0xf]
      %v208 = vld [vmem:[%s166 + $0x88] sm:$0xf]
      %v209 = vld [vmem:[%s166 + $0x8c] sm:$0xf]
      %v210 = vld [vmem:[%s166 + $0x90] sm:$0xf]
      %v211 = vld [vmem:[%s166 + $0x94] sm:$0xf]
      %v212 = vld [vmem:[%s166 + $0x98] sm:$0xf]
      %v213 = vld [vmem:[%s166 + $0x9c] sm:$0xf]
      %v214 = vld [vmem:[%s166 + $0xa0] sm:$0xf]
      %v215 = vld [vmem:[%s166 + $0xa4] sm:$0xf]
      %v216 = vld [vmem:[%s166 + $0xa8] sm:$0xf]
      %v217 = vld [vmem:[%s166 + $0xac] sm:$0xf]
      %v218 = vld [vmem:[%s166 + $0xb0] sm:$0xf]
      %v219 = vld [vmem:[%s166 + $0xb4] sm:$0xf]
      %v220 = vld [vmem:[%s166 + $0xb8] sm:$0xf]
      %v221 = vld [vmem:[%s166 + $0xbc] sm:$0xf]
      %v222 = vld [vmem:[%s166 + $0xc0] sm:$0xf]
      %v223 = vld [vmem:[%s166 + $0xc4] sm:$0xf]
      %v224 = vld [vmem:[%s166 + $0xc8] sm:$0xf]
      %v225 = vld [vmem:[%s166 + $0xcc] sm:$0xf]
      %v226 = vld [vmem:[%s166 + $0xd0] sm:$0xf]
      %v227 = vld [vmem:[%s166 + $0xd4] sm:$0xf]
      %v228 = vld [vmem:[%s166 + $0xd8] sm:$0xf]
      %v229 = vld [vmem:[%s166 + $0xdc] sm:$0xf]
      %v230 = vld [vmem:[%s166 + $0xe0] sm:$0xf]
      %v231 = vld [vmem:[%s166 + $0xe4] sm:$0xf]
      %v232 = vld [vmem:[%s166 + $0xe8] sm:$0xf]
      %v233 = vld [vmem:[%s166 + $0xec] sm:$0xf]
      %v234 = vld [vmem:[%s166 + $0xf0] sm:$0xf]
      %v235 = vld [vmem:[%s166 + $0xf4] sm:$0xf]
      %v236 = vld [vmem:[%s166 + $0xf8] sm:$0xf]
      %v237 = vld [vmem:[%s166 + $0xfc] sm:$0xf]
      %v238 = vld [vmem:[%s166 + $0x100] sm:$0xf]
      %v239 = vld [vmem:[%s166 + $0x104] sm:$0xf]
      %v240 = vld [vmem:[%s166 + $0x108] sm:$0xf]
      %v241 = vld [vmem:[%s166 + $0x10c] sm:$0xf]
      %v242 = vld [vmem:[%s166 + $0x110] sm:$0xf]
      %v243 = vld [vmem:[%s166 + $0x114] sm:$0xf]
      %v244 = vld [vmem:[%s166 + $0x118] sm:$0xf]
      %v245 = vld [vmem:[%s166 + $0x11c] sm:$0xf]
      %v246 = vld [vmem:[%s166 + $0x120] sm:$0xf]
      %v247 = vld [vmem:[%s166 + $0x124] sm:$0xf]
      %v248 = vld [vmem:[%s166 + $0x128] sm:$0xf]
      %v249 = vld [vmem:[%s166 + $0x12c] sm:$0xf]
      %v250 = vld [vmem:[%s166 + $0x130] sm:$0xf]
      %v251 = vld [vmem:[%s166 + $0x134] sm:$0xf]
      %v252 = vld [vmem:[%s166 + $0x138] sm:$0xf]
      %v253 = vld [vmem:[%s166 + $0x13c] sm:$0xf]
      %v254 = vld [vmem:[%s166 + $0x140] sm:$0xf]
      %v255 = vld [vmem:[%s166 + $0x144] sm:$0xf]
      %v256 = vld [vmem:[%s166 + $0x148] sm:$0xf]
      %v257 = vld [vmem:[%s166 + $0x14c] sm:$0xf]
      %v258 = vld [vmem:[%s166 + $0x150] sm:$0xf]
      %v259 = vld [vmem:[%s166 + $0x154] sm:$0xf]
      %v260 = vld [vmem:[%s166 + $0x158] sm:$0xf]
      %v261 = vld [vmem:[%s166 + $0x15c] sm:$0xf]
      %v262 = vld [vmem:[%s166 + $0x160] sm:$0xf]
      %v263 = vld [vmem:[%s166 + $0x164] sm:$0xf]
      %v264 = vld [vmem:[%s166 + $0x168] sm:$0xf]
      %v265 = vld [vmem:[%s166 + $0x16c] sm:$0xf]
      %v266 = vld [vmem:[%s166 + $0x170] sm:$0xf]
      %v267 = vld [vmem:[%s166 + $0x174] sm:$0xf]
      %v268 = vld [vmem:[%s166 + $0x178] sm:$0xf]
      %v269 = vld [vmem:[%s166 + $0x17c] sm:$0xf]
      %v270 = vld [vmem:[%s166 + $0x180] sm:$0xf]
      %v271 = vld [vmem:[%s166 + $0x184] sm:$0xf]
      %v272 = vld [vmem:[%s166 + $0x188] sm:$0xf]
      %v273 = vld [vmem:[%s166 + $0x18c] sm:$0xf]
      %v274 = vld [vmem:[%s166 + $0x190] sm:$0xf]
      %v275 = vld [vmem:[%s166 + $0x194] sm:$0xf]
      %v276 = vld [vmem:[%s166 + $0x198] sm:$0xf]
      %v277 = vld [vmem:[%s166 + $0x19c] sm:$0xf]
      %v278 = vld [vmem:[%s166 + $0x1a0] sm:$0xf]
      %v279 = vld [vmem:[%s166 + $0x1a4] sm:$0xf]
      %v280 = vld [vmem:[%s166 + $0x1a8] sm:$0xf]
      %v281 = vld [vmem:[%s166 + $0x1ac] sm:$0xf]
      %v282 = vld [vmem:[%s166 + $0x1b0] sm:$0xf]
      %v283 = vld [vmem:[%s166 + $0x1b4] sm:$0xf]
      %v284 = vld [vmem:[%s166 + $0x1b8] sm:$0xf]
      %v285 = vld [vmem:[%s166 + $0x1bc] sm:$0xf]
      %v286 = vld [vmem:[%s1] sm:$0xf]
      %v287 = vld [vmem:[%s1 + $0x4] sm:$0xf]
      %v288 = vld [vmem:[%s1 + $0x8] sm:$0xf]
      %v289 = vld [vmem:[%s1 + $0xc] sm:$0xf]
      %v290 = vld [vmem:[%s1 + $0x10] sm:$0xf]
      %v291 = vld [vmem:[%s1 + $0x14] sm:$0xf]
      %v292 = vld [vmem:[%s1 + $0x18] sm:$0xf]
      %v293 = vld [vmem:[%s1 + $0x1c] sm:$0xf]
      %v294 = vld [vmem:[%s1 + $0x20] sm:$0xf]
      %v295 = vld [vmem:[%s1 + $0x24] sm:$0xf]
      %v296 = vld [vmem:[%s1 + $0x28] sm:$0xf]
      %v297 = vld [vmem:[%s1 + $0x2c] sm:$0xf]
      %v298 = vld [vmem:[%s1 + $0x30] sm:$0xf]
      %v299 = vld [vmem:[%s1 + $0x34] sm:$0xf]
      %v300 = vld [vmem:[%s1 + $0x38] sm:$0xf]
      %v301 = vld [vmem:[%s1 + $0x3c] sm:$0xf]
      %v302 = vld [vmem:[%s2] sm:$0x1]
      %v304 = vperm.slane %v302, 0
      %v418 = vunpack.c.l.b16 %v174
      %v419 = vunpack.c.l.b16 %v175
      %v420 = vunpack.c.l.b16 %v176
      %v421 = vunpack.c.l.b16 %v177
      %v422 = vunpack.c.l.b16 %v178
      %v423 = vunpack.c.l.b16 %v179
      %v424 = vunpack.c.l.b16 %v180
      %v425 = vunpack.c.l.b16 %v181
      %v426 = vunpack.c.l.b16 %v182
      %v427 = vunpack.c.l.b16 %v183
      %v428 = vunpack.c.l.b16 %v184
      %v429 = vunpack.c.l.b16 %v185
      %v430 = vunpack.c.l.b16 %v186
      %v431 = vunpack.c.l.b16 %v187
      %v432 = vunpack.c.l.b16 %v188
      %v433 = vunpack.c.l.b16 %v189
      %v434 = vunpack.c.l.b16 %v190
      %v435 = vunpack.c.l.b16 %v191
      %v436 = vunpack.c.l.b16 %v192
      %v437 = vunpack.c.l.b16 %v193
      %v438 = vunpack.c.l.b16 %v194
      %v439 = vunpack.c.l.b16 %v195
      %v440 = vunpack.c.l.b16 %v196
      %v441 = vunpack.c.l.b16 %v197
      %v442 = vunpack.c.l.b16 %v198
      %v443 = vunpack.c.l.b16 %v199
      %v444 = vunpack.c.l.b16 %v200
      %v445 = vunpack.c.l.b16 %v201
      %v446 = vunpack.c.l.b16 %v202
      %v447 = vunpack.c.l.b16 %v203
      %v448 = vunpack.c.l.b16 %v204
      %v449 = vunpack.c.l.b16 %v205
      %v450 = vunpack.c.l.b16 %v206
      %v451 = vunpack.c.l.b16 %v207
      %v452 = vunpack.c.l.b16 %v208
      %v453 = vunpack.c.l.b16 %v209
      %v454 = vunpack.c.l.b16 %v210
      %v455 = vunpack.c.l.b16 %v211
      %v456 = vunpack.c.l.b16 %v212
      %v457 = vunpack.c.l.b16 %v213
      %v458 = vunpack.c.l.b16 %v214
      %v459 = vunpack.c.l.b16 %v215
      %v460 = vunpack.c.l.b16 %v216
      %v461 = vunpack.c.l.b16 %v217
      %v462 = vunpack.c.l.b16 %v218
      %v463 = vunpack.c.l.b16 %v219
      %v464 = vunpack.c.l.b16 %v220
      %v465 = vunpack.c.l.b16 %v221
      %v466 = vunpack.c.l.b16 %v222
      %v467 = vunpack.c.l.b16 %v223
      %v468 = vunpack.c.l.b16 %v224
      %v469 = vunpack.c.l.b16 %v225
      %v470 = vunpack.c.l.b16 %v226
      %v471 = vunpack.c.l.b16 %v227
      %v472 = vunpack.c.l.b16 %v228
      %v473 = vunpack.c.l.b16 %v229
      %v474 = vunpack.c.l.b16 %v230
      %v475 = vunpack.c.l.b16 %v231
      %v476 = vunpack.c.l.b16 %v232
      %v477 = vunpack.c.l.b16 %v233
      %v478 = vunpack.c.l.b16 %v234
      %v479 = vunpack.c.l.b16 %v235
      %v480 = vunpack.c.l.b16 %v236
      %v481 = vunpack.c.l.b16 %v237
      %v482 = vunpack.c.l.b16 %v238
      %v483 = vunpack.c.l.b16 %v239
      %v484 = vunpack.c.l.b16 %v240
      %v485 = vunpack.c.l.b16 %v241
      %v486 = vunpack.c.l.b16 %v242
      %v487 = vunpack.c.l.b16 %v243
      %v488 = vunpack.c.l.b16 %v244
      %v489 = vunpack.c.l.b16 %v245
      %v490 = vunpack.c.l.b16 %v246
      %v491 = vunpack.c.l.b16 %v247
      %v492 = vunpack.c.l.b16 %v248
      %v493 = vunpack.c.l.b16 %v249
      %v494 = vunpack.c.l.b16 %v250
      %v495 = vunpack.c.l.b16 %v251
      %v496 = vunpack.c.l.b16 %v252
      %v497 = vunpack.c.l.b16 %v253
      %v498 = vunpack.c.l.b16 %v254
      %v499 = vunpack.c.l.b16 %v255
      %v500 = vunpack.c.l.b16 %v256
      %v501 = vunpack.c.l.b16 %v257
      %v502 = vunpack.c.l.b16 %v258
      %v503 = vunpack.c.l.b16 %v259
      %v504 = vunpack.c.l.b16 %v260
      %v505 = vunpack.c.l.b16 %v261
      %v506 = vunpack.c.l.b16 %v262
      %v507 = vunpack.c.l.b16 %v263
      %v508 = vunpack.c.l.b16 %v264
      %v509 = vunpack.c.l.b16 %v265
      %v510 = vunpack.c.l.b16 %v266
      %v511 = vunpack.c.l.b16 %v267
      %v512 = vunpack.c.l.b16 %v268
      %v513 = vunpack.c.l.b16 %v269
      %v514 = vunpack.c.l.b16 %v270
      %v515 = vunpack.c.l.b16 %v271
      %v516 = vunpack.c.l.b16 %v272
      %v517 = vunpack.c.l.b16 %v273
      %v518 = vunpack.c.l.b16 %v274
      %v519 = vunpack.c.l.b16 %v275
      %v520 = vunpack.c.l.b16 %v276
      %v521 = vunpack.c.l.b16 %v277
      %v522 = vunpack.c.l.b16 %v278
      %v523 = vunpack.c.l.b16 %v279
      %v524 = vunpack.c.l.b16 %v280
      %v525 = vunpack.c.l.b16 %v281
      %v526 = vunpack.c.l.b16 %v282
      %v527 = vunpack.c.l.b16 %v283
      %v528 = vunpack.c.l.b16 %v284
      %v529 = vunpack.c.l.b16 %v285
      %v530 = vpack.c.b16 %v419, %v418
      %v531 = vpack.c.b16 %v421, %v420
      %v532 = vpack.c.b16 %v423, %v422
      %v533 = vpack.c.b16 %v425, %v424
      %v534 = vpack.c.b16 %v427, %v426
      %v535 = vpack.c.b16 %v429, %v428
      %v536 = vpack.c.b16 %v431, %v430
      %v537 = vpack.c.b16 %v433, %v432
      %v538 = vpack.c.b16 %v435, %v434
      %v539 = vpack.c.b16 %v437, %v436
      %v540 = vpack.c.b16 %v439, %v438
      %v541 = vpack.c.b16 %v441, %v440
      %v542 = vpack.c.b16 %v443, %v442
      %v543 = vpack.c.b16 %v445, %v444
      %v544 = vpack.c.b16 %v447, %v446
      %v545 = vpack.c.b16 %v449, %v448
      %v546 = vpack.c.b16 %v451, %v450
      %v547 = vpack.c.b16 %v453, %v452
      %v548 = vpack.c.b16 %v455, %v454
      %v549 = vpack.c.b16 %v457, %v456
      %v550 = vpack.c.b16 %v459, %v458
      %v551 = vpack.c.b16 %v461, %v460
      %v552 = vpack.c.b16 %v463, %v462
      %v553 = vpack.c.b16 %v465, %v464
      %v554 = vpack.c.b16 %v467, %v466
      %v555 = vpack.c.b16 %v469, %v468
      %v556 = vpack.c.b16 %v471, %v470
      %v557 = vpack.c.b16 %v473, %v472
      %v558 = vpack.c.b16 %v475, %v474
      %v559 = vpack.c.b16 %v477, %v476
      %v560 = vpack.c.b16 %v479, %v478
      %v561 = vpack.c.b16 %v481, %v480
      %v562 = vpack.c.b16 %v483, %v482
      %v563 = vpack.c.b16 %v485, %v484
      %v564 = vpack.c.b16 %v487, %v486
      %v565 = vpack.c.b16 %v489, %v488
      %v566 = vpack.c.b16 %v491, %v490
      %v567 = vpack.c.b16 %v493, %v492
      %v568 = vpack.c.b16 %v495, %v494
      %v569 = vpack.c.b16 %v497, %v496
      %v570 = vpack.c.b16 %v499, %v498
      %v571 = vpack.c.b16 %v501, %v500
      %v572 = vpack.c.b16 %v503, %v502
      %v573 = vpack.c.b16 %v505, %v504
      %v574 = vpack.c.b16 %v507, %v506
      %v575 = vpack.c.b16 %v509, %v508
      %v576 = vpack.c.b16 %v511, %v510
      %v577 = vpack.c.b16 %v513, %v512
      %v578 = vpack.c.b16 %v515, %v514
      %v579 = vpack.c.b16 %v517, %v516
      %v580 = vpack.c.b16 %v519, %v518
      %v581 = vpack.c.b16 %v521, %v520
      %v582 = vpack.c.b16 %v523, %v522
      %v583 = vpack.c.b16 %v525, %v524
      %v584 = vpack.c.b16 %v527, %v526
      %v585 = vpack.c.b16 %v529, %v528
      %v658 = vunpack.c.l.b16 %v286
      %v659 = vunpack.c.l.b16 %v287
      %v660 = vunpack.c.l.b16 %v288
      %v661 = vunpack.c.l.b16 %v289
      %v662 = vunpack.c.l.b16 %v290
      %v663 = vunpack.c.l.b16 %v291
      %v664 = vunpack.c.l.b16 %v292
      %v665 = vunpack.c.l.b16 %v293
      %v666 = vunpack.c.l.b16 %v294
      %v667 = vunpack.c.l.b16 %v295
      %v668 = vunpack.c.l.b16 %v296
      %v669 = vunpack.c.l.b16 %v297
      %v670 = vunpack.c.l.b16 %v298
      %v671 = vunpack.c.l.b16 %v299
      %v672 = vunpack.c.l.b16 %v300
      %v673 = vunpack.c.l.b16 %v301
      %v674 = vpack.c.b16 %v659, %v658
      %v675 = vpack.c.b16 %v661, %v660
      %v676 = vpack.c.b16 %v663, %v662
      %v677 = vpack.c.b16 %v665, %v664
      %v678 = vpack.c.b16 %v667, %v666
      %v679 = vpack.c.b16 %v669, %v668
      %v680 = vpack.c.b16 %v671, %v670
      %v681 = vpack.c.b16 %v673, %v672
      %690 = vmatpush.bf16.msra.mxu0 %v681
      %691 = vmatpush.bf16.msra.mxu0 %v680
      %692 = vmatpush.bf16.msra.mxu0 %v679
      %693 = vmatpush.bf16.msra.mxu0 %v678
      %694 = vmatpush.bf16.msra.mxu0 %v677
      %695 = vmatpush.bf16.msra.mxu0 %v676
      %696 = vmatpush.bf16.msra.mxu0 %v675
      %697 = vmatpush.bf16.msra.mxu0 %v674
      %698 = vmatmul.bf16.gmra.mxu0 %v530
      %v699 = vpop.f32.mrf.mxu0
      %v700 = vadd.f32 %v304, %v699
      %v701 = vpop.f32.mrf.mxu0
      %v702 = vadd.f32 %v304, %v701
      %703 = vmatmul.bf16.gmra.mxu0 %v531
      %v704 = vpop.f32.mrf.mxu0
      %v705 = vadd.f32 %v304, %v704
      %v706 = vpop.f32.mrf.mxu0
      %v707 = vadd.f32 %v304, %v706
      %708 = vmatmul.bf16.gmra.mxu0 %v532
      %v709 = vpop.f32.mrf.mxu0
      %v710 = vadd.f32 %v304, %v709
      %v711 = vpop.f32.mrf.mxu0
      %v712 = vadd.f32 %v304, %v711
      %713 = vmatmul.bf16.gmra.mxu0 %v533
      %v714 = vpop.f32.mrf.mxu0
      %v715 = vadd.f32 %v304, %v714
      %v716 = vpop.f32.mrf.mxu0
      %v717 = vadd.f32 %v304, %v716
      %718 = vmatmul.bf16.gmra.mxu0 %v534
      %v719 = vpop.f32.mrf.mxu0
      %v720 = vadd.f32 %v304, %v719
      %v721 = vpop.f32.mrf.mxu0
      %v722 = vadd.f32 %v304, %v721
      %723 = vmatmul.bf16.gmra.mxu0 %v535
      %v724 = vpop.f32.mrf.mxu0
      %v725 = vadd.f32 %v304, %v724
      %v726 = vpop.f32.mrf.mxu0
      %v727 = vadd.f32 %v304, %v726
      %728 = vmatmul.bf16.gmra.mxu0 %v536
      %v729 = vpop.f32.mrf.mxu0
      %v730 = vadd.f32 %v304, %v729
      %v731 = vpop.f32.mrf.mxu0
      %v732 = vadd.f32 %v304, %v731
      %733 = vmatmul.bf16.gmra.mxu0 %v537
      %v734 = vpop.f32.mrf.mxu0
      %v735 = vadd.f32 %v304, %v734
      %v736 = vpop.f32.mrf.mxu0
      %v737 = vadd.f32 %v304, %v736
      %738 = vmatmul.bf16.gmra.mxu0 %v538
      %v739 = vpop.f32.mrf.mxu0
      %v740 = vadd.f32 %v304, %v739
      %v741 = vpop.f32.mrf.mxu0
      %v742 = vadd.f32 %v304, %v741
      %743 = vmatmul.bf16.gmra.mxu0 %v539
      %v744 = vpop.f32.mrf.mxu0
      %v745 = vadd.f32 %v304, %v744
      %v746 = vpop.f32.mrf.mxu0
      %v747 = vadd.f32 %v304, %v746
      %748 = vmatmul.bf16.gmra.mxu0 %v540
      %v749 = vpop.f32.mrf.mxu0
      %v750 = vadd.f32 %v304, %v749
      %v751 = vpop.f32.mrf.mxu0
      %v752 = vadd.f32 %v304, %v751
      %753 = vmatmul.bf16.gmra.mxu0 %v541
      %v754 = vpop.f32.mrf.mxu0
      %v755 = vadd.f32 %v304, %v754
      %v756 = vpop.f32.mrf.mxu0
      %v757 = vadd.f32 %v304, %v756
      %758 = vmatmul.bf16.gmra.mxu0 %v542
      %v759 = vpop.f32.mrf.mxu0
      %v760 = vadd.f32 %v304, %v759
      %v761 = vpop.f32.mrf.mxu0
      %v762 = vadd.f32 %v304, %v761
      %763 = vmatmul.bf16.gmra.mxu0 %v543
      %v764 = vpop.f32.mrf.mxu0
      %v765 = vadd.f32 %v304, %v764
      %v766 = vpop.f32.mrf.mxu0
      %v767 = vadd.f32 %v304, %v766
      %768 = vmatmul.bf16.gmra.mxu0 %v544
      %v769 = vpop.f32.mrf.mxu0
      %v770 = vadd.f32 %v304, %v769
      %v771 = vpop.f32.mrf.mxu0
      %v772 = vadd.f32 %v304, %v771
      %773 = vmatmul.bf16.gmra.mxu0 %v545
      %v774 = vpop.f32.mrf.mxu0
      %v775 = vadd.f32 %v304, %v774
      %v776 = vpop.f32.mrf.mxu0
      %v777 = vadd.f32 %v304, %v776
      %778 = vmatmul.bf16.gmra.mxu0 %v546
      %v779 = vpop.f32.mrf.mxu0
      %v780 = vadd.f32 %v304, %v779
      %v781 = vpop.f32.mrf.mxu0
      %v782 = vadd.f32 %v304, %v781
      %783 = vmatmul.bf16.gmra.mxu0 %v547
      %v784 = vpop.f32.mrf.mxu0
      %v785 = vadd.f32 %v304, %v784
      %v786 = vpop.f32.mrf.mxu0
      %v787 = vadd.f32 %v304, %v786
      %788 = vmatmul.bf16.gmra.mxu0 %v548
      %v789 = vpop.f32.mrf.mxu0
      %v790 = vadd.f32 %v304, %v789
      %v791 = vpop.f32.mrf.mxu0
      %v792 = vadd.f32 %v304, %v791
      %793 = vmatmul.bf16.gmra.mxu0 %v549
      %v794 = vpop.f32.mrf.mxu0
      %v795 = vadd.f32 %v304, %v794
      %v796 = vpop.f32.mrf.mxu0
      %v797 = vadd.f32 %v304, %v796
      %798 = vmatmul.bf16.gmra.mxu0 %v550
      %v799 = vpop.f32.mrf.mxu0
      %v800 = vadd.f32 %v304, %v799
      %v801 = vpop.f32.mrf.mxu0
      %v802 = vadd.f32 %v304, %v801
      %803 = vmatmul.bf16.gmra.mxu0 %v551
      %v804 = vpop.f32.mrf.mxu0
      %v805 = vadd.f32 %v304, %v804
      %v806 = vpop.f32.mrf.mxu0
      %v807 = vadd.f32 %v304, %v806
      %808 = vmatmul.bf16.gmra.mxu0 %v552
      %v809 = vpop.f32.mrf.mxu0
      %v810 = vadd.f32 %v304, %v809
      %v811 = vpop.f32.mrf.mxu0
      %v812 = vadd.f32 %v304, %v811
      %813 = vmatmul.bf16.gmra.mxu0 %v553
      %v814 = vpop.f32.mrf.mxu0
      %v815 = vadd.f32 %v304, %v814
      %v816 = vpop.f32.mrf.mxu0
      %v817 = vadd.f32 %v304, %v816
      %818 = vmatmul.bf16.gmra.mxu0 %v554
      %v819 = vpop.f32.mrf.mxu0
      %v820 = vadd.f32 %v304, %v819
      %v821 = vpop.f32.mrf.mxu0
      %v822 = vadd.f32 %v304, %v821
      %823 = vmatmul.bf16.gmra.mxu0 %v555
      %v824 = vpop.f32.mrf.mxu0
      %v825 = vadd.f32 %v304, %v824
      %v826 = vpop.f32.mrf.mxu0
      %v827 = vadd.f32 %v304, %v826
      %828 = vmatmul.bf16.gmra.mxu0 %v556
      %v829 = vpop.f32.mrf.mxu0
      %v830 = vadd.f32 %v304, %v829
      %v831 = vpop.f32.mrf.mxu0
      %v832 = vadd.f32 %v304, %v831
      %833 = vmatmul.bf16.gmra.mxu0 %v557
      %v834 = vpop.f32.mrf.mxu0
      %v835 = vadd.f32 %v304, %v834
      %v836 = vpop.f32.mrf.mxu0
      %v837 = vadd.f32 %v304, %v836
      %838 = vmatmul.bf16.gmra.mxu0 %v558
      %v839 = vpop.f32.mrf.mxu0
      %v840 = vadd.f32 %v304, %v839
      %v841 = vpop.f32.mrf.mxu0
      %v842 = vadd.f32 %v304, %v841
      %843 = vmatmul.bf16.gmra.mxu0 %v559
      %v844 = vpop.f32.mrf.mxu0
      %v845 = vadd.f32 %v304, %v844
      %v846 = vpop.f32.mrf.mxu0
      %v847 = vadd.f32 %v304, %v846
      %848 = vmatmul.bf16.gmra.mxu0 %v560
      %v849 = vpop.f32.mrf.mxu0
      %v850 = vadd.f32 %v304, %v849
      %v851 = vpop.f32.mrf.mxu0
      %v852 = vadd.f32 %v304, %v851
      %853 = vmatmul.bf16.gmra.mxu0 %v561
      %v854 = vpop.f32.mrf.mxu0
      %v855 = vadd.f32 %v304, %v854
      %v856 = vpop.f32.mrf.mxu0
      %v857 = vadd.f32 %v304, %v856
      %858 = vmatmul.bf16.gmra.mxu0 %v562
      %v859 = vpop.f32.mrf.mxu0
      %v860 = vadd.f32 %v304, %v859
      %v861 = vpop.f32.mrf.mxu0
      %v862 = vadd.f32 %v304, %v861
      %863 = vmatmul.bf16.gmra.mxu0 %v563
      %v864 = vpop.f32.mrf.mxu0
      %v865 = vadd.f32 %v304, %v864
      %v866 = vpop.f32.mrf.mxu0
      %v867 = vadd.f32 %v304, %v866
      %868 = vmatmul.bf16.gmra.mxu0 %v564
      %v869 = vpop.f32.mrf.mxu0
      %v870 = vadd.f32 %v304, %v869
      %v871 = vpop.f32.mrf.mxu0
      %v872 = vadd.f32 %v304, %v871
      %873 = vmatmul.bf16.gmra.mxu0 %v565
      %v874 = vpop.f32.mrf.mxu0
      %v875 = vadd.f32 %v304, %v874
      %v876 = vpop.f32.mrf.mxu0
      %v877 = vadd.f32 %v304, %v876
      %878 = vmatmul.bf16.gmra.mxu0 %v566
      %v879 = vpop.f32.mrf.mxu0
      %v880 = vadd.f32 %v304, %v879
      %v881 = vpop.f32.mrf.mxu0
      %v882 = vadd.f32 %v304, %v881
      %883 = vmatmul.bf16.gmra.mxu0 %v567
      %v884 = vpop.f32.mrf.mxu0
      %v885 = vadd.f32 %v304, %v884
      %v886 = vpop.f32.mrf.mxu0
      %v887 = vadd.f32 %v304, %v886
      %888 = vmatmul.bf16.gmra.mxu0 %v568
      %v889 = vpop.f32.mrf.mxu0
      %v890 = vadd.f32 %v304, %v889
      %v891 = vpop.f32.mrf.mxu0
      %v892 = vadd.f32 %v304, %v891
      %893 = vmatmul.bf16.gmra.mxu0 %v569
      %v894 = vpop.f32.mrf.mxu0
      %v895 = vadd.f32 %v304, %v894
      %v896 = vpop.f32.mrf.mxu0
      %v897 = vadd.f32 %v304, %v896
      %898 = vmatmul.bf16.gmra.mxu0 %v570
      %v899 = vpop.f32.mrf.mxu0
      %v900 = vadd.f32 %v304, %v899
      %v901 = vpop.f32.mrf.mxu0
      %v902 = vadd.f32 %v304, %v901
      %903 = vmatmul.bf16.gmra.mxu0 %v571
      %v904 = vpop.f32.mrf.mxu0
      %v905 = vadd.f32 %v304, %v904
      %v906 = vpop.f32.mrf.mxu0
      %v907 = vadd.f32 %v304, %v906
      %908 = vmatmul.bf16.gmra.mxu0 %v572
      %v909 = vpop.f32.mrf.mxu0
      %v910 = vadd.f32 %v304, %v909
      %v911 = vpop.f32.mrf.mxu0
      %v912 = vadd.f32 %v304, %v911
      %913 = vmatmul.bf16.gmra.mxu0 %v573
      %v914 = vpop.f32.mrf.mxu0
      %v915 = vadd.f32 %v304, %v914
      %v916 = vpop.f32.mrf.mxu0
      %v917 = vadd.f32 %v304, %v916
      %918 = vmatmul.bf16.gmra.mxu0 %v574
      %v919 = vpop.f32.mrf.mxu0
      %v920 = vadd.f32 %v304, %v919
      %v921 = vpop.f32.mrf.mxu0
      %v922 = vadd.f32 %v304, %v921
      %923 = vmatmul.bf16.gmra.mxu0 %v575
      %v924 = vpop.f32.mrf.mxu0
      %v925 = vadd.f32 %v304, %v924
      %v926 = vpop.f32.mrf.mxu0
      %v927 = vadd.f32 %v304, %v926
      %928 = vmatmul.bf16.gmra.mxu0 %v576
      %v929 = vpop.f32.mrf.mxu0
      %v930 = vadd.f32 %v304, %v929
      %v931 = vpop.f32.mrf.mxu0
      %v932 = vadd.f32 %v304, %v931
      %933 = vmatmul.bf16.gmra.mxu0 %v577
      %v934 = vpop.f32.mrf.mxu0
      %v935 = vadd.f32 %v304, %v934
      %v936 = vpop.f32.mrf.mxu0
      %v937 = vadd.f32 %v304, %v936
      %938 = vmatmul.bf16.gmra.mxu0 %v578
      %v939 = vpop.f32.mrf.mxu0
      %v940 = vadd.f32 %v304, %v939
      %v941 = vpop.f32.mrf.mxu0
      %v942 = vadd.f32 %v304, %v941
      %943 = vmatmul.bf16.gmra.mxu0 %v579
      %v944 = vpop.f32.mrf.mxu0
      %v945 = vadd.f32 %v304, %v944
      %v946 = vpop.f32.mrf.mxu0
      %v947 = vadd.f32 %v304, %v946
      %948 = vmatmul.bf16.gmra.mxu0 %v580
      %v949 = vpop.f32.mrf.mxu0
      %v950 = vadd.f32 %v304, %v949
      %v951 = vpop.f32.mrf.mxu0
      %v952 = vadd.f32 %v304, %v951
      %953 = vmatmul.bf16.gmra.mxu0 %v581
      %v954 = vpop.f32.mrf.mxu0
      %v955 = vadd.f32 %v304, %v954
      %v956 = vpop.f32.mrf.mxu0
      %v957 = vadd.f32 %v304, %v956
      %958 = vmatmul.bf16.gmra.mxu0 %v582
      %v959 = vpop.f32.mrf.mxu0
      %v960 = vadd.f32 %v304, %v959
      %v961 = vpop.f32.mrf.mxu0
      %v962 = vadd.f32 %v304, %v961
      %963 = vmatmul.bf16.gmra.mxu0 %v583
      %v964 = vpop.f32.mrf.mxu0
      %v965 = vadd.f32 %v304, %v964
      %v966 = vpop.f32.mrf.mxu0
      %v967 = vadd.f32 %v304, %v966
      %968 = vmatmul.bf16.gmra.mxu0 %v584
      %v969 = vpop.f32.mrf.mxu0
      %v970 = vadd.f32 %v304, %v969
      %v971 = vpop.f32.mrf.mxu0
      %v972 = vadd.f32 %v304, %v971
      %973 = vmatmul.bf16.gmra.mxu0 %v585
      %v974 = vpop.f32.mrf.mxu0
      %v975 = vadd.f32 %v304, %v974
      %v976 = vpop.f32.mrf.mxu0
      %v977 = vadd.f32 %v304, %v976
      %978 = vdwg.mxu0
      %v979 = vmax.f32 %v700, 0.0
      %v980 = vmax.f32 %v702, 0.0
      %v981 = vmax.f32 %v705, 0.0
      %v982 = vmax.f32 %v707, 0.0
      %v983 = vmax.f32 %v710, 0.0
      %v984 = vmax.f32 %v712, 0.0
      %v985 = vmax.f32 %v715, 0.0
      %v986 = vmax.f32 %v717, 0.0
      %v987 = vmax.f32 %v720, 0.0
      %v988 = vmax.f32 %v722, 0.0
      %v989 = vmax.f32 %v725, 0.0
      %v990 = vmax.f32 %v727, 0.0
      %v991 = vmax.f32 %v730, 0.0
      %v992 = vmax.f32 %v732, 0.0
      %v993 = vmax.f32 %v735, 0.0
      %v994 = vmax.f32 %v737, 0.0
      %v995 = vmax.f32 %v740, 0.0
      %v996 = vmax.f32 %v742, 0.0
      %v997 = vmax.f32 %v745, 0.0
      %v998 = vmax.f32 %v747, 0.0
      %v999 = vmax.f32 %v750, 0.0
      %v1000 = vmax.f32 %v752, 0.0
      %v1001 = vmax.f32 %v755, 0.0
      %v1002 = vmax.f32 %v757, 0.0
      %v1003 = vmax.f32 %v760, 0.0
      %v1004 = vmax.f32 %v762, 0.0
      %v1005 = vmax.f32 %v765, 0.0
      %v1006 = vmax.f32 %v767, 0.0
      %v1007 = vmax.f32 %v770, 0.0
      %v1008 = vmax.f32 %v772, 0.0
      %v1009 = vmax.f32 %v775, 0.0
      %v1010 = vmax.f32 %v777, 0.0
      %v1011 = vmax.f32 %v780, 0.0
      %v1012 = vmax.f32 %v782, 0.0
      %v1013 = vmax.f32 %v785, 0.0
      %v1014 = vmax.f32 %v787, 0.0
      %v1015 = vmax.f32 %v790, 0.0
      %v1016 = vmax.f32 %v792, 0.0
      %v1017 = vmax.f32 %v795, 0.0
      %v1018 = vmax.f32 %v797, 0.0
      %v1019 = vmax.f32 %v800, 0.0
      %v1020 = vmax.f32 %v802, 0.0
      %v1021 = vmax.f32 %v805, 0.0
      %v1022 = vmax.f32 %v807, 0.0
      %v1023 = vmax.f32 %v810, 0.0
      %v1024 = vmax.f32 %v812, 0.0
      %v1025 = vmax.f32 %v815, 0.0
      %v1026 = vmax.f32 %v817, 0.0
      %v1027 = vmax.f32 %v820, 0.0
      %v1028 = vmax.f32 %v822, 0.0
      %v1029 = vmax.f32 %v825, 0.0
      %v1030 = vmax.f32 %v827, 0.0
      %v1031 = vmax.f32 %v830, 0.0
      %v1032 = vmax.f32 %v832, 0.0
      %v1033 = vmax.f32 %v835, 0.0
      %v1034 = vmax.f32 %v837, 0.0
      %v1035 = vmax.f32 %v840, 0.0
      %v1036 = vmax.f32 %v842, 0.0
      %v1037 = vmax.f32 %v845, 0.0
      %v1038 = vmax.f32 %v847, 0.0
      %v1039 = vmax.f32 %v850, 0.0
      %v1040 = vmax.f32 %v852, 0.0
      %v1041 = vmax.f32 %v855, 0.0
      %v1042 = vmax.f32 %v857, 0.0
      %v1043 = vmax.f32 %v860, 0.0
      %v1044 = vmax.f32 %v862, 0.0
      %v1045 = vmax.f32 %v865, 0.0
      %v1046 = vmax.f32 %v867, 0.0
      %v1047 = vmax.f32 %v870, 0.0
      %v1048 = vmax.f32 %v872, 0.0
      %v1049 = vmax.f32 %v875, 0.0
      %v1050 = vmax.f32 %v877, 0.0
      %v1051 = vmax.f32 %v880, 0.0
      %v1052 = vmax.f32 %v882, 0.0
      %v1053 = vmax.f32 %v885, 0.0
      %v1054 = vmax.f32 %v887, 0.0
      %v1055 = vmax.f32 %v890, 0.0
      %v1056 = vmax.f32 %v892, 0.0
      %v1057 = vmax.f32 %v895, 0.0
      %v1058 = vmax.f32 %v897, 0.0
      %v1059 = vmax.f32 %v900, 0.0
      %v1060 = vmax.f32 %v902, 0.0
      %v1061 = vmax.f32 %v905, 0.0
      %v1062 = vmax.f32 %v907, 0.0
      %v1063 = vmax.f32 %v910, 0.0
      %v1064 = vmax.f32 %v912, 0.0
      %v1065 = vmax.f32 %v915, 0.0
      %v1066 = vmax.f32 %v917, 0.0
      %v1067 = vmax.f32 %v920, 0.0
      %v1068 = vmax.f32 %v922, 0.0
      %v1069 = vmax.f32 %v925, 0.0
      %v1070 = vmax.f32 %v927, 0.0
      %v1071 = vmax.f32 %v930, 0.0
      %v1072 = vmax.f32 %v932, 0.0
      %v1073 = vmax.f32 %v935, 0.0
      %v1074 = vmax.f32 %v937, 0.0
      %v1075 = vmax.f32 %v940, 0.0
      %v1076 = vmax.f32 %v942, 0.0
      %v1077 = vmax.f32 %v945, 0.0
      %v1078 = vmax.f32 %v947, 0.0
      %v1079 = vmax.f32 %v950, 0.0
      %v1080 = vmax.f32 %v952, 0.0
      %v1081 = vmax.f32 %v955, 0.0
      %v1082 = vmax.f32 %v957, 0.0
      %v1083 = vmax.f32 %v960, 0.0
      %v1084 = vmax.f32 %v962, 0.0
      %v1085 = vmax.f32 %v965, 0.0
      %v1086 = vmax.f32 %v967, 0.0
      %v1087 = vmax.f32 %v970, 0.0
      %v1088 = vmax.f32 %v972, 0.0
      %v1089 = vmax.f32 %v975, 0.0
      %v1090 = vmax.f32 %v977, 0.0
      %v1091 = vpack.c.bf16 %v979, %v979
      %v1092 = vpack.c.bf16 %v980, %v980
      %v1093 = vpack.c.bf16 %v981, %v981
      %v1094 = vpack.c.bf16 %v982, %v982
      %v1095 = vpack.c.bf16 %v983, %v983
      %v1096 = vpack.c.bf16 %v984, %v984
      %v1097 = vpack.c.bf16 %v985, %v985
      %v1098 = vpack.c.bf16 %v986, %v986
      %v1099 = vpack.c.bf16 %v987, %v987
      %v1100 = vpack.c.bf16 %v988, %v988
      %v1101 = vpack.c.bf16 %v989, %v989
      %v1102 = vpack.c.bf16 %v990, %v990
      %v1103 = vpack.c.bf16 %v991, %v991
      %v1104 = vpack.c.bf16 %v992, %v992
      %v1105 = vpack.c.bf16 %v993, %v993
      %v1106 = vpack.c.bf16 %v994, %v994
      %v1107 = vpack.c.bf16 %v995, %v995
      %v1108 = vpack.c.bf16 %v996, %v996
      %v1109 = vpack.c.bf16 %v997, %v997
      %v1110 = vpack.c.bf16 %v998, %v998
      %v1111 = vpack.c.bf16 %v999, %v999
      %v1112 = vpack.c.bf16 %v1000, %v1000
      %v1113 = vpack.c.bf16 %v1001, %v1001
      %v1114 = vpack.c.bf16 %v1002, %v1002
      %v1115 = vpack.c.bf16 %v1003, %v1003
      %v1116 = vpack.c.bf16 %v1004, %v1004
      %v1117 = vpack.c.bf16 %v1005, %v1005
      %v1118 = vpack.c.bf16 %v1006, %v1006
      %v1119 = vpack.c.bf16 %v1007, %v1007
      %v1120 = vpack.c.bf16 %v1008, %v1008
      %v1121 = vpack.c.bf16 %v1009, %v1009
      %v1122 = vpack.c.bf16 %v1010, %v1010
      %v1123 = vpack.c.bf16 %v1011, %v1011
      %v1124 = vpack.c.bf16 %v1012, %v1012
      %v1125 = vpack.c.bf16 %v1013, %v1013
      %v1126 = vpack.c.bf16 %v1014, %v1014
      %v1127 = vpack.c.bf16 %v1015, %v1015
      %v1128 = vpack.c.bf16 %v1016, %v1016
      %v1129 = vpack.c.bf16 %v1017, %v1017
      %v1130 = vpack.c.bf16 %v1018, %v1018
      %v1131 = vpack.c.bf16 %v1019, %v1019
      %v1132 = vpack.c.bf16 %v1020, %v1020
      %v1133 = vpack.c.bf16 %v1021, %v1021
      %v1134 = vpack.c.bf16 %v1022, %v1022
      %v1135 = vpack.c.bf16 %v1023, %v1023
      %v1136 = vpack.c.bf16 %v1024, %v1024
      %v1137 = vpack.c.bf16 %v1025, %v1025
      %v1138 = vpack.c.bf16 %v1026, %v1026
      %v1139 = vpack.c.bf16 %v1027, %v1027
      %v1140 = vpack.c.bf16 %v1028, %v1028
      %v1141 = vpack.c.bf16 %v1029, %v1029
      %v1142 = vpack.c.bf16 %v1030, %v1030
      %v1143 = vpack.c.bf16 %v1031, %v1031
      %v1144 = vpack.c.bf16 %v1032, %v1032
      %v1145 = vpack.c.bf16 %v1033, %v1033
      %v1146 = vpack.c.bf16 %v1034, %v1034
      %v1147 = vpack.c.bf16 %v1035, %v1035
      %v1148 = vpack.c.bf16 %v1036, %v1036
      %v1149 = vpack.c.bf16 %v1037, %v1037
      %v1150 = vpack.c.bf16 %v1038, %v1038
      %v1151 = vpack.c.bf16 %v1039, %v1039
      %v1152 = vpack.c.bf16 %v1040, %v1040
      %v1153 = vpack.c.bf16 %v1041, %v1041
      %v1154 = vpack.c.bf16 %v1042, %v1042
      %v1155 = vpack.c.bf16 %v1043, %v1043
      %v1156 = vpack.c.bf16 %v1044, %v1044
      %v1157 = vpack.c.bf16 %v1045, %v1045
      %v1158 = vpack.c.bf16 %v1046, %v1046
      %v1159 = vpack.c.bf16 %v1047, %v1047
      %v1160 = vpack.c.bf16 %v1048, %v1048
      %v1161 = vpack.c.bf16 %v1049, %v1049
      %v1162 = vpack.c.bf16 %v1050, %v1050
      %v1163 = vpack.c.bf16 %v1051, %v1051
      %v1164 = vpack.c.bf16 %v1052, %v1052
      %v1165 = vpack.c.bf16 %v1053, %v1053
      %v1166 = vpack.c.bf16 %v1054, %v1054
      %v1167 = vpack.c.bf16 %v1055, %v1055
      %v1168 = vpack.c.bf16 %v1056, %v1056
      %v1169 = vpack.c.bf16 %v1057, %v1057
      %v1170 = vpack.c.bf16 %v1058, %v1058
      %v1171 = vpack.c.bf16 %v1059, %v1059
      %v1172 = vpack.c.bf16 %v1060, %v1060
      %v1173 = vpack.c.bf16 %v1061, %v1061
      %v1174 = vpack.c.bf16 %v1062, %v1062
      %v1175 = vpack.c.bf16 %v1063, %v1063
      %v1176 = vpack.c.bf16 %v1064, %v1064
      %v1177 = vpack.c.bf16 %v1065, %v1065
      %v1178 = vpack.c.bf16 %v1066, %v1066
      %v1179 = vpack.c.bf16 %v1067, %v1067
      %v1180 = vpack.c.bf16 %v1068, %v1068
      %v1181 = vpack.c.bf16 %v1069, %v1069
      %v1182 = vpack.c.bf16 %v1070, %v1070
      %v1183 = vpack.c.bf16 %v1071, %v1071
      %v1184 = vpack.c.bf16 %v1072, %v1072
      %v1185 = vpack.c.bf16 %v1073, %v1073
      %v1186 = vpack.c.bf16 %v1074, %v1074
      %v1187 = vpack.c.bf16 %v1075, %v1075
      %v1188 = vpack.c.bf16 %v1076, %v1076
      %v1189 = vpack.c.bf16 %v1077, %v1077
      %v1190 = vpack.c.bf16 %v1078, %v1078
      %v1191 = vpack.c.bf16 %v1079, %v1079
      %v1192 = vpack.c.bf16 %v1080, %v1080
      %v1193 = vpack.c.bf16 %v1081, %v1081
      %v1194 = vpack.c.bf16 %v1082, %v1082
      %v1195 = vpack.c.bf16 %v1083, %v1083
      %v1196 = vpack.c.bf16 %v1084, %v1084
      %v1197 = vpack.c.bf16 %v1085, %v1085
      %v1198 = vpack.c.bf16 %v1086, %v1086
      %v1199 = vpack.c.bf16 %v1087, %v1087
      %v1200 = vpack.c.bf16 %v1088, %v1088
      %v1201 = vpack.c.bf16 %v1089, %v1089
      %v1202 = vpack.c.bf16 %v1090, %v1090
      %vm1203 = vcmask 257024
      %1204 = vst.msk [vmem:[%s172] sm:$0xf] %vm1203, %v1091
      %1205 = vst.msk [vmem:[%s172 + $0x4] sm:$0xf] %vm1203, %v1092
      %1206 = vst.msk [vmem:[%s172 + $0x8] sm:$0xf] %vm1203, %v1093
      %1207 = vst.msk [vmem:[%s172 + $0xc] sm:$0xf] %vm1203, %v1094
      %1208 = vst.msk [vmem:[%s172 + $0x10] sm:$0xf] %vm1203, %v1095
      %1209 = vst.msk [vmem:[%s172 + $0x14] sm:$0xf] %vm1203, %v1096
      %1210 = vst.msk [vmem:[%s172 + $0x18] sm:$0xf] %vm1203, %v1097
      %1211 = vst.msk [vmem:[%s172 + $0x1c] sm:$0xf] %vm1203, %v1098
      %1212 = vst.msk [vmem:[%s172 + $0x20] sm:$0xf] %vm1203, %v1099
      %1213 = vst.msk [vmem:[%s172 + $0x24] sm:$0xf] %vm1203, %v1100
      %1214 = vst.msk [vmem:[%s172 + $0x28] sm:$0xf] %vm1203, %v1101
      %1215 = vst.msk [vmem:[%s172 + $0x2c] sm:$0xf] %vm1203, %v1102
      %1216 = vst.msk [vmem:[%s172 + $0x30] sm:$0xf] %vm1203, %v1103
      %1217 = vst.msk [vmem:[%s172 + $0x34] sm:$0xf] %vm1203, %v1104
      %1218 = vst.msk [vmem:[%s172 + $0x38] sm:$0xf] %vm1203, %v1105
      %1219 = vst.msk [vmem:[%s172 + $0x3c] sm:$0xf] %vm1203, %v1106
      %1220 = vst.msk [vmem:[%s172 + $0x40] sm:$0xf] %vm1203, %v1107
      %1221 = vst.msk [vmem:[%s172 + $0x44] sm:$0xf] %vm1203, %v1108
      %1222 = vst.msk [vmem:[%s172 + $0x48] sm:$0xf] %vm1203, %v1109
      %1223 = vst.msk [vmem:[%s172 + $0x4c] sm:$0xf] %vm1203, %v1110
      %1224 = vst.msk [vmem:[%s172 + $0x50] sm:$0xf] %vm1203, %v1111
      %1225 = vst.msk [vmem:[%s172 + $0x54] sm:$0xf] %vm1203, %v1112
      %1226 = vst.msk [vmem:[%s172 + $0x58] sm:$0xf] %vm1203, %v1113
      %1227 = vst.msk [vmem:[%s172 + $0x5c] sm:$0xf] %vm1203, %v1114
      %1228 = vst.msk [vmem:[%s172 + $0x60] sm:$0xf] %vm1203, %v1115
      %1229 = vst.msk [vmem:[%s172 + $0x64] sm:$0xf] %vm1203, %v1116
      %1230 = vst.msk [vmem:[%s172 + $0x68] sm:$0xf] %vm1203, %v1117
      %1231 = vst.msk [vmem:[%s172 + $0x6c] sm:$0xf] %vm1203, %v1118
      %1232 = vst.msk [vmem:[%s172 + $0x70] sm:$0xf] %vm1203, %v1119
      %1233 = vst.msk [vmem:[%s172 + $0x74] sm:$0xf] %vm1203, %v1120
      %1234 = vst.msk [vmem:[%s172 + $0x78] sm:$0xf] %vm1203, %v1121
      %1235 = vst.msk [vmem:[%s172 + $0x7c] sm:$0xf] %vm1203, %v1122
      %1236 = vst.msk [vmem:[%s172 + $0x80] sm:$0xf] %vm1203, %v1123
      %1237 = vst.msk [vmem:[%s172 + $0x84] sm:$0xf] %vm1203, %v1124
      %1238 = vst.msk [vmem:[%s172 + $0x88] sm:$0xf] %vm1203, %v1125
      %1239 = vst.msk [vmem:[%s172 + $0x8c] sm:$0xf] %vm1203, %v1126
      %1240 = vst.msk [vmem:[%s172 + $0x90] sm:$0xf] %vm1203, %v1127
      %1241 = vst.msk [vmem:[%s172 + $0x94] sm:$0xf] %vm1203, %v1128
      %1242 = vst.msk [vmem:[%s172 + $0x98] sm:$0xf] %vm1203, %v1129
      %1243 = vst.msk [vmem:[%s172 + $0x9c] sm:$0xf] %vm1203, %v1130
      %1244 = vst.msk [vmem:[%s172 + $0xa0] sm:$0xf] %vm1203, %v1131
      %1245 = vst.msk [vmem:[%s172 + $0xa4] sm:$0xf] %vm1203, %v1132
      %1246 = vst.msk [vmem:[%s172 + $0xa8] sm:$0xf] %vm1203, %v1133
      %1247 = vst.msk [vmem:[%s172 + $0xac] sm:$0xf] %vm1203, %v1134
      %1248 = vst.msk [vmem:[%s172 + $0xb0] sm:$0xf] %vm1203, %v1135
      %1249 = vst.msk [vmem:[%s172 + $0xb4] sm:$0xf] %vm1203, %v1136
      %1250 = vst.msk [vmem:[%s172 + $0xb8] sm:$0xf] %vm1203, %v1137
      %1251 = vst.msk [vmem:[%s172 + $0xbc] sm:$0xf] %vm1203, %v1138
      %1252 = vst.msk [vmem:[%s172 + $0xc0] sm:$0xf] %vm1203, %v1139
      %1253 = vst.msk [vmem:[%s172 + $0xc4] sm:$0xf] %vm1203, %v1140
      %1254 = vst.msk [vmem:[%s172 + $0xc8] sm:$0xf] %vm1203, %v1141
      %1255 = vst.msk [vmem:[%s172 + $0xcc] sm:$0xf] %vm1203, %v1142
      %1256 = vst.msk [vmem:[%s172 + $0xd0] sm:$0xf] %vm1203, %v1143
      %1257 = vst.msk [vmem:[%s172 + $0xd4] sm:$0xf] %vm1203, %v1144
      %1258 = vst.msk [vmem:[%s172 + $0xd8] sm:$0xf] %vm1203, %v1145
      %1259 = vst.msk [vmem:[%s172 + $0xdc] sm:$0xf] %vm1203, %v1146
      %1260 = vst.msk [vmem:[%s172 + $0xe0] sm:$0xf] %vm1203, %v1147
      %1261 = vst.msk [vmem:[%s172 + $0xe4] sm:$0xf] %vm1203, %v1148
      %1262 = vst.msk [vmem:[%s172 + $0xe8] sm:$0xf] %vm1203, %v1149
      %1263 = vst.msk [vmem:[%s172 + $0xec] sm:$0xf] %vm1203, %v1150
      %1264 = vst.msk [vmem:[%s172 + $0xf0] sm:$0xf] %vm1203, %v1151
      %1265 = vst.msk [vmem:[%s172 + $0xf4] sm:$0xf] %vm1203, %v1152
      %1266 = vst.msk [vmem:[%s172 + $0xf8] sm:$0xf] %vm1203, %v1153
      %1267 = vst.msk [vmem:[%s172 + $0xfc] sm:$0xf] %vm1203, %v1154
      %1268 = vst.msk [vmem:[%s172 + $0x100] sm:$0xf] %vm1203, %v1155
      %1269 = vst.msk [vmem:[%s172 + $0x104] sm:$0xf] %vm1203, %v1156
      %1270 = vst.msk [vmem:[%s172 + $0x108] sm:$0xf] %vm1203, %v1157
      %1271 = vst.msk [vmem:[%s172 + $0x10c] sm:$0xf] %vm1203, %v1158
      %1272 = vst.msk [vmem:[%s172 + $0x110] sm:$0xf] %vm1203, %v1159
      %1273 = vst.msk [vmem:[%s172 + $0x114] sm:$0xf] %vm1203, %v1160
      %1274 = vst.msk [vmem:[%s172 + $0x118] sm:$0xf] %vm1203, %v1161
      %1275 = vst.msk [vmem:[%s172 + $0x11c] sm:$0xf] %vm1203, %v1162
      %1276 = vst.msk [vmem:[%s172 + $0x120] sm:$0xf] %vm1203, %v1163
      %1277 = vst.msk [vmem:[%s172 + $0x124] sm:$0xf] %vm1203, %v1164
      %1278 = vst.msk [vmem:[%s172 + $0x128] sm:$0xf] %vm1203, %v1165
      %1279 = vst.msk [vmem:[%s172 + $0x12c] sm:$0xf] %vm1203, %v1166
      %1280 = vst.msk [vmem:[%s172 + $0x130] sm:$0xf] %vm1203, %v1167
      %1281 = vst.msk [vmem:[%s172 + $0x134] sm:$0xf] %vm1203, %v1168
      %1282 = vst.msk [vmem:[%s172 + $0x138] sm:$0xf] %vm1203, %v1169
      %1283 = vst.msk [vmem:[%s172 + $0x13c] sm:$0xf] %vm1203, %v1170
      %1284 = vst.msk [vmem:[%s172 + $0x140] sm:$0xf] %vm1203, %v1171
      %1285 = vst.msk [vmem:[%s172 + $0x144] sm:$0xf] %vm1203, %v1172
      %1286 = vst.msk [vmem:[%s172 + $0x148] sm:$0xf] %vm1203, %v1173
      %1287 = vst.msk [vmem:[%s172 + $0x14c] sm:$0xf] %vm1203, %v1174
      %1288 = vst.msk [vmem:[%s172 + $0x150] sm:$0xf] %vm1203, %v1175
      %1289 = vst.msk [vmem:[%s172 + $0x154] sm:$0xf] %vm1203, %v1176
      %1290 = vst.msk [vmem:[%s172 + $0x158] sm:$0xf] %vm1203, %v1177
      %1291 = vst.msk [vmem:[%s172 + $0x15c] sm:$0xf] %vm1203, %v1178
      %1292 = vst.msk [vmem:[%s172 + $0x160] sm:$0xf] %vm1203, %v1179
      %1293 = vst.msk [vmem:[%s172 + $0x164] sm:$0xf] %vm1203, %v1180
      %1294 = vst.msk [vmem:[%s172 + $0x168] sm:$0xf] %vm1203, %v1181
      %1295 = vst.msk [vmem:[%s172 + $0x16c] sm:$0xf] %vm1203, %v1182
      %1296 = vst.msk [vmem:[%s172 + $0x170] sm:$0xf] %vm1203, %v1183
      %1297 = vst.msk [vmem:[%s172 + $0x174] sm:$0xf] %vm1203, %v1184
      %1298 = vst.msk [vmem:[%s172 + $0x178] sm:$0xf] %vm1203, %v1185
      %1299 = vst.msk [vmem:[%s172 + $0x17c] sm:$0xf] %vm1203, %v1186
      %1300 = vst.msk [vmem:[%s172 + $0x180] sm:$0xf] %vm1203, %v1187
      %1301 = vst.msk [vmem:[%s172 + $0x184] sm:$0xf] %vm1203, %v1188
      %1302 = vst.msk [vmem:[%s172 + $0x188] sm:$0xf] %vm1203, %v1189
      %1303 = vst.msk [vmem:[%s172 + $0x18c] sm:$0xf] %vm1203, %v1190
      %1304 = vst.msk [vmem:[%s172 + $0x190] sm:$0xf] %vm1203, %v1191
      %1305 = vst.msk [vmem:[%s172 + $0x194] sm:$0xf] %vm1203, %v1192
      %1306 = vst.msk [vmem:[%s172 + $0x198] sm:$0xf] %vm1203, %v1193
      %1307 = vst.msk [vmem:[%s172 + $0x19c] sm:$0xf] %vm1203, %v1194
      %1308 = vst.msk [vmem:[%s172 + $0x1a0] sm:$0xf] %vm1203, %v1195
      %1309 = vst.msk [vmem:[%s172 + $0x1a4] sm:$0xf] %vm1203, %v1196
      %1310 = vst.msk [vmem:[%s172 + $0x1a8] sm:$0xf] %vm1203, %v1197
      %1311 = vst.msk [vmem:[%s172 + $0x1ac] sm:$0xf] %vm1203, %v1198
      %1312 = vst.msk [vmem:[%s172 + $0x1b0] sm:$0xf] %vm1203, %v1199
      %1313 = vst.msk [vmem:[%s172 + $0x1b4] sm:$0xf] %vm1203, %v1200
      %1314 = vst.msk [vmem:[%s172 + $0x1b8] sm:$0xf] %vm1203, %v1201
      %1315 = vst.msk [vmem:[%s172 + $0x1bc] sm:$0xf] %vm1203, %v1202
      %s1316 = smul.u32 112, %s14
      %p1317 = scmp.lt.s32.totalorder %s1316, 223
      %s1318 = scalar_select %p1317, %s1316, 223
      %s1319 = smul.addr %s1318, 4
      %s1320 = scalar_lea.vmem %s3, %s1319
      // Predicated region
      $region33: #{pick_forward.4} parent=31 // pred_check
        %p1321 = pneg %p100
      $region34: #{pick_forward.4} parent=31 // pred_check_branch
        %1323 = sbr.rel (%p1321) target = $region36
      $region35: #{pick_forward.4} parent=31 // pred_region
        %s1324 = smul.u32 112, %s14
      $region36: #{pick_forward.4} parent=31 // pred_fallthru
        _
    $region32: #{pick_forward.4} parent=5 // pred_fallthru
      _
    %p1325 = scmp.le.s32.totalorder 2, %s9
    // Predicated region
    $region37: #{pick_forward.4} parent=5 // pred_check
      %p1326 = pneg %p1325
    $region38: #{pick_forward.4} parent=5 // pred_check_branch
      %1328 = sbr.rel (%p1326) target = $region40
    $region39: #{pick_forward.4} parent=5 // pred_region
      %s1329 = ssub.s32 %s9, 2
      // Predicated region
      $region41: #{pick_forward.4} parent=39 // pred_check
        %p1330 = pneg %p106
      $region42: #{pick_forward.4} parent=39 // pred_check_branch
        %1332 = sbr.rel (%p1330) target = $region44
      $region43: #{pick_forward.4} parent=39 // pred_region
        %s1333 = smul.u32 112, %s15
        %p1334 = scmp.lt.s32.totalorder %s1333, 223
        %s1335 = scalar_select %p1334, %s1333, 223
        %s1336 = smul.addr %s1335, 4
        %s1337 = scalar_lea.vmem %s3, %s1336
      $region44: #{pick_forward.4} parent=39 // pred_fallthru
        _
    $region40: #{pick_forward.4} parent=5 // pred_fallthru
      _
  $region6: #{pick_forward.4} parent=0 // loop_footer
    %s13 = sadd.s32 1, %s9
  $region7: #{pick_forward.4} parent=0 // loop_footer_branch
    %8 = sbr.rel target = $region3
  $region8: #{pick_forward.4} parent=0 // loop_exit
    _

// kernel: pick_forward.5
$region0: #{pick_forward.5}
  #allocation0 [shape = 'u32[]', space=smem, size = 0x4, offset = 0x4, fixed_abs, tag = 'smem constant byte address 0x4 - core index']
  #allocation1 [shape = 'u32[72,128]{1,0:T(1,128)}', space=vmem, size = 0x9000, scoped, tag = 'internal scratch']
  %s0 = inlined_call_operand.vmem [shape: bf16[200,512], index: 0, kind: input, shape index: {}]
  %s1 = inlined_call_operand.vmem [shape: bf16[512,64], index: 1, kind: input, shape index: {}]
  %s2 = inlined_call_operand.vmem [shape: f32[1,64], index: 2, kind: input, shape index: {}]
  %s3 = inlined_call_operand.vmem [shape: bf16[200,64], index: 3, kind: output, shape index: {}]
  %s4 = sld [smem:[#allocation0]]
  $region22: #{pick_forward.5} parent=0
    _
  %s6 = ssub.s32 1, %s4
  %s7 = scalar_select 0, %s6, %s4
  // Predicated region
  $region2: #{pick_forward.5} parent=0 // pred_check
    _
  $region3: #{pick_forward.5} parent=0 // pred_check_branch
    %9 = sbr.rel (0) target = $region5
  $region4: #{pick_forward.5} parent=0 // pred_region
    _
  $region5: #{pick_forward.5} parent=0 // pred_fallthru
    _
  // Predicated region
  $region6: #{pick_forward.5} parent=0 // pred_check
    _
  $region7: #{pick_forward.5} parent=0 // pred_check_branch
    %11 = sbr.rel (0) target = $region9
  $region8: #{pick_forward.5} parent=0 // pred_region
    _
  $region9: #{pick_forward.5} parent=0 // pred_fallthru
    _
  // Predicated region
  $region10: #{pick_forward.5} parent=0 // pred_check
    _
  $region11: #{pick_forward.5} parent=0 // pred_check_branch
    %13 = sbr.rel (0) target = $region13
  $region12: #{pick_forward.5} parent=0 // pred_region
    _
  $region13: #{pick_forward.5} parent=0 // pred_fallthru
    _
  %v14 = vld [vmem:[%s0] sm:$0xff]
  %v15 = vld [vmem:[%s0 + $0x8] sm:$0xff]
  %v16 = vld [vmem:[%s0 + $0x10] sm:$0xff]
  %v17 = vld [vmem:[%s0 + $0x18] sm:$0xff]
  %v18 = vld [vmem:[%s0 + $0x20] sm:$0xff]
  %v19 = vld [vmem:[%s0 + $0x28] sm:$0xff]
  %v20 = vld [vmem:[%s0 + $0x30] sm:$0xff]
  %v21 = vld [vmem:[%s0 + $0x38] sm:$0xff]
  %v22 = vld [vmem:[%s0 + $0x40] sm:$0xff]
  %v23 = vld [vmem:[%s0 + $0x48] sm:$0xff]
  %v24 = vld [vmem:[%s0 + $0x50] sm:$0xff]
  %v25 = vld [vmem:[%s0 + $0x58] sm:$0xff]
  %v26 = vld [vmem:[%s0 + $0x60] sm:$0xff]
  %v27 = vld [vmem:[%s0 + $0x68] sm:$0xff]
  %v28 = vld [vmem:[%s0 + $0x70] sm:$0xff]
  %v29 = vld [vmem:[%s0 + $0x78] sm:$0xff]
  %v30 = vld [vmem:[%s0 + $0x80] sm:$0xff]
  %v31 = vld [vmem:[%s0 + $0x88] sm:$0xff]
  %v32 = vld [vmem:[%s0 + $0x90] sm:$0xff]
  %v33 = vld [vmem:[%s0 + $0x98] sm:$0xff]
  %v34 = vld [vmem:[%s0 + $0xa0] sm:$0xff]
  %v35 = vld [vmem:[%s0 + $0xa8] sm:$0xff]
  %v36 = vld [vmem:[%s0 + $0xb0] sm:$0xff]
  %v37 = vld [vmem:[%s0 + $0xb8] sm:$0xff]
  %v38 = vld [vmem:[%s0 + $0xc0] sm:$0xff]
  %v39 = vld [vmem:[%s0 + $0xc8] sm:$0xff]
  %v40 = vld [vmem:[%s0 + $0xd0] sm:$0xff]
  %v41 = vld [vmem:[%s0 + $0xd8] sm:$0xff]
  %v42 = vld [vmem:[%s0 + $0xe0] sm:$0xff]
  %v43 = vld [vmem:[%s0 + $0xe8] sm:$0xff]
  %v44 = vld [vmem:[%s0 + $0xf0] sm:$0xff]
  %v45 = vld [vmem:[%s0 + $0xf8] sm:$0xff]
  %v46 = vld [vmem:[%s0 + $0x100] sm:$0xff]
  %v47 = vld [vmem:[%s0 + $0x108] sm:$0xff]
  %v48 = vld [vmem:[%s0 + $0x110] sm:$0xff]
  %v49 = vld [vmem:[%s0 + $0x118] sm:$0xff]
  %v50 = vld [vmem:[%s0 + $0x120] sm:$0xff]
  %v51 = vld [vmem:[%s0 + $0x128] sm:$0xff]
  %v52 = vld [vmem:[%s0 + $0x130] sm:$0xff]
  %v53 = vld [vmem:[%s0 + $0x138] sm:$0xff]
  %v54 = vld [vmem:[%s0 + $0x140] sm:$0xff]
  %v55 = vld [vmem:[%s0 + $0x148] sm:$0xff]
  %v56 = vld [vmem:[%s0 + $0x150] sm:$0xff]
  %v57 = vld [vmem:[%s0 + $0x158] sm:$0xff]
  %v58 = vld [vmem:[%s0 + $0x160] sm:$0xff]
  %v59 = vld [vmem:[%s0 + $0x168] sm:$0xff]
  %v60 = vld [vmem:[%s0 + $0x170] sm:$0xff]
  %v61 = vld [vmem:[%s0 + $0x178] sm:$0xff]
  %v62 = vld [vmem:[%s0 + $0x180] sm:$0xff]
  %v63 = vld [vmem:[%s0 + $0x188] sm:$0xff]
  %v64 = vld [vmem:[%s1] sm:$0xf]
  %v65 = vld [vmem:[%s1 + $0x4] sm:$0xf]
  %v66 = vld [vmem:[%s1 + $0x8] sm:$0xf]
  %v67 = vld [vmem:[%s1 + $0xc] sm:$0xf]
  %v68 = vld [vmem:[%s1 + $0x10] sm:$0xf]
  %v69 = vld [vmem:[%s1 + $0x14] sm:$0xf]
  %v70 = vld [vmem:[%s1 + $0x18] sm:$0xf]
  %v71 = vld [vmem:[%s1 + $0x1c] sm:$0xf]
  %v72 = vld [vmem:[%s1 + $0x20] sm:$0xf]
  %v73 = vld [vmem:[%s1 + $0x24] sm:$0xf]
  %v74 = vld [vmem:[%s1 + $0x28] sm:$0xf]
  %v75 = vld [vmem:[%s1 + $0x2c] sm:$0xf]
  %v76 = vld [vmem:[%s1 + $0x30] sm:$0xf]
  %v77 = vld [vmem:[%s1 + $0x34] sm:$0xf]
  %v78 = vld [vmem:[%s1 + $0x38] sm:$0xf]
  %v79 = vld [vmem:[%s1 + $0x3c] sm:$0xf]
  %v80 = vld [vmem:[%s1 + $0x40] sm:$0xf]
  %v81 = vld [vmem:[%s1 + $0x44] sm:$0xf]
  %v82 = vld [vmem:[%s1 + $0x48] sm:$0xf]
  %v83 = vld [vmem:[%s1 + $0x4c] sm:$0xf]
  %v84 = vld [vmem:[%s1 + $0x50] sm:$0xf]
  %v85 = vld [vmem:[%s1 + $0x54] sm:$0xf]
  %v86 = vld [vmem:[%s1 + $0x58] sm:$0xf]
  %v87 = vld [vmem:[%s1 + $0x5c] sm:$0xf]
  %v88 = vld [vmem:[%s1 + $0x60] sm:$0xf]
  %v89 = vld [vmem:[%s1 + $0x64] sm:$0xf]
  %v90 = vld [vmem:[%s1 + $0x68] sm:$0xf]
  %v91 = vld [vmem:[%s1 + $0x6c] sm:$0xf]
  %v92 = vld [vmem:[%s1 + $0x70] sm:$0xf]
  %v93 = vld [vmem:[%s1 + $0x74] sm:$0xf]
  %v94 = vld [vmem:[%s1 + $0x78] sm:$0xf]
  %v95 = vld [vmem:[%s1 + $0x7c] sm:$0xf]
  %v96 = vld [vmem:[%s1 + $0x80] sm:$0xf]
  %v97 = vld [vmem:[%s1 + $0x84] sm:$0xf]
  %v98 = vld [vmem:[%s1 + $0x88] sm:$0xf]
  %v99 = vld [vmem:[%s1 + $0x8c] sm:$0xf]
  %v100 = vld [vmem:[%s1 + $0x90] sm:$0xf]
  %v101 = vld [vmem:[%s1 + $0x94] sm:$0xf]
  %v102 = vld [vmem:[%s1 + $0x98] sm:$0xf]
  %v103 = vld [vmem:[%s1 + $0x9c] sm:$0xf]
  %v104 = vld [vmem:[%s1 + $0xa0] sm:$0xf]
  %v105 = vld [vmem:[%s1 + $0xa4] sm:$0xf]
  %v106 = vld [vmem:[%s1 + $0xa8] sm:$0xf]
  %v107 = vld [vmem:[%s1 + $0xac] sm:$0xf]
  %v108 = vld [vmem:[%s1 + $0xb0] sm:$0xf]
  %v109 = vld [vmem:[%s1 + $0xb4] sm:$0xf]
  %v110 = vld [vmem:[%s1 + $0xb8] sm:$0xf]
  %v111 = vld [vmem:[%s1 + $0xbc] sm:$0xf]
  %v112 = vld [vmem:[%s1 + $0xc0] sm:$0xf]
  %v113 = vld [vmem:[%s1 + $0xc4] sm:$0xf]
  %v114 = vld [vmem:[%s1 + $0xc8] sm:$0xf]
  %v115 = vld [vmem:[%s1 + $0xcc] sm:$0xf]
  %v116 = vld [vmem:[%s1 + $0xd0] sm:$0xf]
  %v117 = vld [vmem:[%s1 + $0xd4] sm:$0xf]
  %v118 = vld [vmem:[%s1 + $0xd8] sm:$0xf]
  %v119 = vld [vmem:[%s1 + $0xdc] sm:$0xf]
  %v120 = vld [vmem:[%s1 + $0xe0] sm:$0xf]
  %v121 = vld [vmem:[%s1 + $0xe4] sm:$0xf]
  %v122 = vld [vmem:[%s1 + $0xe8] sm:$0xf]
  %v123 = vld [vmem:[%s1 + $0xec] sm:$0xf]
  %v124 = vld [vmem:[%s1 + $0xf0] sm:$0xf]
  %v125 = vld [vmem:[%s1 + $0xf4] sm:$0xf]
  %v126 = vld [vmem:[%s1 + $0xf8] sm:$0xf]
  %v127 = vld [vmem:[%s1 + $0xfc] sm:$0xf]
  %v128 = vld [vmem:[%s2] sm:$0x1]
  %v130 = vperm.slane %v128, 0
  %v182 = vunpack.c.l.b16 %v14
  %v183 = vunpack.c.h.b16 %v14
  %v184 = vunpack.c.l.b16 %v15
  %v185 = vunpack.c.h.b16 %v15
  %v186 = vunpack.c.l.b16 %v16
  %v187 = vunpack.c.h.b16 %v16
  %v188 = vunpack.c.l.b16 %v17
  %v189 = vunpack.c.h.b16 %v17
  %v190 = vunpack.c.l.b16 %v18
  %v191 = vunpack.c.h.b16 %v18
  %v192 = vunpack.c.l.b16 %v19
  %v193 = vunpack.c.h.b16 %v19
  %v194 = vunpack.c.l.b16 %v20
  %v195 = vunpack.c.h.b16 %v20
  %v196 = vunpack.c.l.b16 %v21
  %v197 = vunpack.c.h.b16 %v21
  %v198 = vunpack.c.l.b16 %v22
  %v199 = vunpack.c.h.b16 %v22
  %v200 = vunpack.c.l.b16 %v23
  %v201 = vunpack.c.h.b16 %v23
  %v202 = vunpack.c.l.b16 %v24
  %v203 = vunpack.c.h.b16 %v24
  %v204 = vunpack.c.l.b16 %v25
  %v205 = vunpack.c.h.b16 %v25
  %v206 = vunpack.c.l.b16 %v26
  %v207 = vunpack.c.h.b16 %v26
  %v208 = vunpack.c.l.b16 %v27
  %v209 = vunpack.c.h.b16 %v27
  %v210 = vunpack.c.l.b16 %v28
  %v211 = vunpack.c.h.b16 %v28
  %v212 = vunpack.c.l.b16 %v29
  %v213 = vunpack.c.h.b16 %v29
  %v214 = vunpack.c.l.b16 %v30
  %v215 = vunpack.c.h.b16 %v30
  %v216 = vunpack.c.l.b16 %v31
  %v217 = vunpack.c.h.b16 %v31
  %v218 = vunpack.c.l.b16 %v32
  %v219 = vunpack.c.h.b16 %v32
  %v220 = vunpack.c.l.b16 %v33
  %v221 = vunpack.c.h.b16 %v33
  %v222 = vunpack.c.l.b16 %v34
  %v223 = vunpack.c.h.b16 %v34
  %v224 = vunpack.c.l.b16 %v35
  %v225 = vunpack.c.h.b16 %v35
  %v226 = vunpack.c.l.b16 %v36
  %v227 = vunpack.c.h.b16 %v36
  %v228 = vunpack.c.l.b16 %v37
  %v229 = vunpack.c.h.b16 %v37
  %v230 = vunpack.c.l.b16 %v38
  %v231 = vunpack.c.h.b16 %v38
  %v232 = vunpack.c.l.b16 %v39
  %v233 = vunpack.c.h.b16 %v39
  %v234 = vunpack.c.l.b16 %v40
  %v235 = vunpack.c.h.b16 %v40
  %v236 = vunpack.c.l.b16 %v41
  %v237 = vunpack.c.h.b16 %v41
  %v238 = vunpack.c.l.b16 %v42
  %v239 = vunpack.c.h.b16 %v42
  %v240 = vunpack.c.l.b16 %v43
  %v241 = vunpack.c.h.b16 %v43
  %v242 = vunpack.c.l.b16 %v44
  %v243 = vunpack.c.h.b16 %v44
  %v244 = vunpack.c.l.b16 %v45
  %v245 = vunpack.c.h.b16 %v45
  %v246 = vunpack.c.l.b16 %v46
  %v247 = vunpack.c.h.b16 %v46
  %v248 = vunpack.c.l.b16 %v47
  %v249 = vunpack.c.h.b16 %v47
  %v250 = vunpack.c.l.b16 %v48
  %v251 = vunpack.c.h.b16 %v48
  %v252 = vunpack.c.l.b16 %v49
  %v253 = vunpack.c.h.b16 %v49
  %v254 = vunpack.c.l.b16 %v50
  %v255 = vunpack.c.h.b16 %v50
  %v256 = vunpack.c.l.b16 %v51
  %v257 = vunpack.c.h.b16 %v51
  %v258 = vunpack.c.l.b16 %v52
  %v259 = vunpack.c.h.b16 %v52
  %v260 = vunpack.c.l.b16 %v53
  %v261 = vunpack.c.h.b16 %v53
  %v262 = vunpack.c.l.b16 %v54
  %v263 = vunpack.c.h.b16 %v54
  %v264 = vunpack.c.l.b16 %v55
  %v265 = vunpack.c.h.b16 %v55
  %v266 = vunpack.c.l.b16 %v56
  %v267 = vunpack.c.h.b16 %v56
  %v268 = vunpack.c.l.b16 %v57
  %v269 = vunpack.c.h.b16 %v57
  %v270 = vunpack.c.l.b16 %v58
  %v271 = vunpack.c.h.b16 %v58
  %v272 = vunpack.c.l.b16 %v59
  %v273 = vunpack.c.h.b16 %v59
  %v274 = vunpack.c.l.b16 %v60
  %v275 = vunpack.c.h.b16 %v60
  %v276 = vunpack.c.l.b16 %v61
  %v277 = vunpack.c.h.b16 %v61
  %v278 = vunpack.c.l.b16 %v62
  %v279 = vunpack.c.h.b16 %v62
  %v280 = vunpack.c.l.b16 %v63
  %v281 = vunpack.c.h.b16 %v63
  %v282 = vpack.c.b16 %v186, %v182
  %v283 = vpack.c.b16 %v187, %v183
  %v284 = vpack.c.b16 %v188, %v184
  %v285 = vpack.c.b16 %v189, %v185
  %v286 = vpack.c.b16 %v194, %v190
  %v287 = vpack.c.b16 %v195, %v191
  %v288 = vpack.c.b16 %v196, %v192
  %v289 = vpack.c.b16 %v197, %v193
  %v290 = vpack.c.b16 %v202, %v198
  %v291 = vpack.c.b16 %v203, %v199
  %v292 = vpack.c.b16 %v204, %v200
  %v293 = vpack.c.b16 %v205, %v201
  %v294 = vpack.c.b16 %v210, %v206
  %v295 = vpack.c.b16 %v211, %v207
  %v296 = vpack.c.b16 %v212, %v208
  %v297 = vpack.c.b16 %v213, %v209
  %v298 = vpack.c.b16 %v218, %v214
  %v299 = vpack.c.b16 %v219, %v215
  %v300 = vpack.c.b16 %v220, %v216
  %v301 = vpack.c.b16 %v221, %v217
  %v302 = vpack.c.b16 %v226, %v222
  %v303 = vpack.c.b16 %v227, %v223
  %v304 = vpack.c.b16 %v228, %v224
  %v305 = vpack.c.b16 %v229, %v225
  %v306 = vpack.c.b16 %v234, %v230
  %v307 = vpack.c.b16 %v235, %v231
  %v308 = vpack.c.b16 %v236, %v232
  %v309 = vpack.c.b16 %v237, %v233
  %v310 = vpack.c.b16 %v242, %v238
  %v311 = vpack.c.b16 %v243, %v239
  %v312 = vpack.c.b16 %v244, %v240
  %v313 = vpack.c.b16 %v245, %v241
  %v314 = vpack.c.b16 %v250, %v246
  %v315 = vpack.c.b16 %v251, %v247
  %v316 = vpack.c.b16 %v252, %v248
  %v317 = vpack.c.b16 %v253, %v249
  %v318 = vpack.c.b16 %v258, %v254
  %v319 = vpack.c.b16 %v259, %v255
  %v320 = vpack.c.b16 %v260, %v256
  %v321 = vpack.c.b16 %v261, %v257
  %v322 = vpack.c.b16 %v266, %v262
  %v323 = vpack.c.b16 %v267, %v263
  %v324 = vpack.c.b16 %v268, %v264
  %v325 = vpack.c.b16 %v269, %v265
  %v326 = vpack.c.b16 %v274, %v270
  %v327 = vpack.c.b16 %v275, %v271
  %v328 = vpack.c.b16 %v276, %v272
  %v329 = vpack.c.b16 %v277, %v273
  %v330 = vpack.c.b16 %v278, %v278
  %v331 = vpack.c.b16 %v279, %v279
  %v332 = vpack.c.b16 %v280, %v280
  %v333 = vpack.c.b16 %v281, %v281
  %v450 = vunpack.c.l.b16 %v64
  %v451 = vunpack.c.l.b16 %v65
  %v452 = vunpack.c.l.b16 %v66
  %v453 = vunpack.c.l.b16 %v67
  %v454 = vunpack.c.l.b16 %v68
  %v455 = vunpack.c.l.b16 %v69
  %v456 = vunpack.c.l.b16 %v70
  %v457 = vunpack.c.l.b16 %v71
  %v458 = vunpack.c.l.b16 %v72
  %v459 = vunpack.c.l.b16 %v73
  %v460 = vunpack.c.l.b16 %v74
  %v461 = vunpack.c.l.b16 %v75
  %v462 = vunpack.c.l.b16 %v76
  %v463 = vunpack.c.l.b16 %v77
  %v464 = vunpack.c.l.b16 %v78
  %v465 = vunpack.c.l.b16 %v79
  %v466 = vunpack.c.l.b16 %v80
  %v467 = vunpack.c.l.b16 %v81
  %v468 = vunpack.c.l.b16 %v82
  %v469 = vunpack.c.l.b16 %v83
  %v470 = vunpack.c.l.b16 %v84
  %v471 = vunpack.c.l.b16 %v85
  %v472 = vunpack.c.l.b16 %v86
  %v473 = vunpack.c.l.b16 %v87
  %v474 = vunpack.c.l.b16 %v88
  %v475 = vunpack.c.l.b16 %v89
  %v476 = vunpack.c.l.b16 %v90
  %v477 = vunpack.c.l.b16 %v91
  %v478 = vunpack.c.l.b16 %v92
  %v479 = vunpack.c.l.b16 %v93
  %v480 = vunpack.c.l.b16 %v94
  %v481 = vunpack.c.l.b16 %v95
  %v482 = vunpack.c.l.b16 %v96
  %v483 = vunpack.c.l.b16 %v97
  %v484 = vunpack.c.l.b16 %v98
  %v485 = vunpack.c.l.b16 %v99
  %v486 = vunpack.c.l.b16 %v100
  %v487 = vunpack.c.l.b16 %v101
  %v488 = vunpack.c.l.b16 %v102
  %v489 = vunpack.c.l.b16 %v103
  %v490 = vunpack.c.l.b16 %v104
  %v491 = vunpack.c.l.b16 %v105
  %v492 = vunpack.c.l.b16 %v106
  %v493 = vunpack.c.l.b16 %v107
  %v494 = vunpack.c.l.b16 %v108
  %v495 = vunpack.c.l.b16 %v109
  %v496 = vunpack.c.l.b16 %v110
  %v497 = vunpack.c.l.b16 %v111
  %v498 = vunpack.c.l.b16 %v112
  %v499 = vunpack.c.l.b16 %v113
  %v500 = vunpack.c.l.b16 %v114
  %v501 = vunpack.c.l.b16 %v115
  %v502 = vunpack.c.l.b16 %v116
  %v503 = vunpack.c.l.b16 %v117
  %v504 = vunpack.c.l.b16 %v118
  %v505 = vunpack.c.l.b16 %v119
  %v506 = vunpack.c.l.b16 %v120
  %v507 = vunpack.c.l.b16 %v121
  %v508 = vunpack.c.l.b16 %v122
  %v509 = vunpack.c.l.b16 %v123
  %v510 = vunpack.c.l.b16 %v124
  %v511 = vunpack.c.l.b16 %v125
  %v512 = vunpack.c.l.b16 %v126
  %v513 = vunpack.c.l.b16 %v127
  %v514 = vpack.c.b16 %v451, %v450
  %v515 = vpack.c.b16 %v453, %v452
  %v516 = vpack.c.b16 %v455, %v454
  %v517 = vpack.c.b16 %v457, %v456
  %v518 = vpack.c.b16 %v459, %v458
  %v519 = vpack.c.b16 %v461, %v460
  %v520 = vpack.c.b16 %v463, %v462
  %v521 = vpack.c.b16 %v465, %v464
  %v522 = vpack.c.b16 %v467, %v466
  %v523 = vpack.c.b16 %v469, %v468
  %v524 = vpack.c.b16 %v471, %v470
  %v525 = vpack.c.b16 %v473, %v472
  %v526 = vpack.c.b16 %v475, %v474
  %v527 = vpack.c.b16 %v477, %v476
  %v528 = vpack.c.b16 %v479, %v478
  %v529 = vpack.c.b16 %v481, %v480
  %v530 = vpack.c.b16 %v483, %v482
  %v531 = vpack.c.b16 %v485, %v484
  %v532 = vpack.c.b16 %v487, %v486
  %v533 = vpack.c.b16 %v489, %v488
  %v534 = vpack.c.b16 %v491, %v490
  %v535 = vpack.c.b16 %v493, %v492
  %v536 = vpack.c.b16 %v495, %v494
  %v537 = vpack.c.b16 %v497, %v496
  %v538 = vpack.c.b16 %v499, %v498
  %v539 = vpack.c.b16 %v501, %v500
  %v540 = vpack.c.b16 %v503, %v502
  %v541 = vpack.c.b16 %v505, %v504
  %v542 = vpack.c.b16 %v507, %v506
  %v543 = vpack.c.b16 %v509, %v508
  %v544 = vpack.c.b16 %v511, %v510
  %v545 = vpack.c.b16 %v513, %v512
  %578 = vmatpush.bf16.msra.mxu0 %v521
  %579 = vmatpush.bf16.msra.mxu0 %v520
  %580 = vmatpush.bf16.msra.mxu0 %v519
  %581 = vmatpush.bf16.msra.mxu0 %v518
  %582 = vmatpush.bf16.msra.mxu0 %v517
  %583 = vmatpush.bf16.msra.mxu0 %v516
  %584 = vmatpush.bf16.msra.mxu0 %v515
  %585 = vmatpush.bf16.msra.mxu0 %v514
  %586 = vmatmul.bf16.gmra.mxu0 %v282
  %v587 = vpop.f32.mrf.mxu0
  %v588 = vadd.f32 %v130, %v587
  %v589 = vpop.f32.mrf.mxu0
  %v590 = vadd.f32 %v130, %v589
  %591 = vmatmul.bf16.gmra.mxu0 %v286
  %v592 = vpop.f32.mrf.mxu0
  %v593 = vadd.f32 %v130, %v592
  %v594 = vpop.f32.mrf.mxu0
  %v595 = vadd.f32 %v130, %v594
  %596 = vmatmul.bf16.gmra.mxu0 %v290
  %v597 = vpop.f32.mrf.mxu0
  %v598 = vadd.f32 %v130, %v597
  %v599 = vpop.f32.mrf.mxu0
  %v600 = vadd.f32 %v130, %v599
  %601 = vmatmul.bf16.gmra.mxu0 %v294
  %v602 = vpop.f32.mrf.mxu0
  %v603 = vadd.f32 %v130, %v602
  %v604 = vpop.f32.mrf.mxu0
  %v605 = vadd.f32 %v130, %v604
  %606 = vmatmul.bf16.gmra.mxu0 %v298
  %v607 = vpop.f32.mrf.mxu0
  %v608 = vadd.f32 %v130, %v607
  %v609 = vpop.f32.mrf.mxu0
  %v610 = vadd.f32 %v130, %v609
  %611 = vmatmul.bf16.gmra.mxu0 %v302
  %v612 = vpop.f32.mrf.mxu0
  %v613 = vadd.f32 %v130, %v612
  %v614 = vpop.f32.mrf.mxu0
  %v615 = vadd.f32 %v130, %v614
  %616 = vmatmul.bf16.gmra.mxu0 %v306
  %v617 = vpop.f32.mrf.mxu0
  %v618 = vadd.f32 %v130, %v617
  %v619 = vpop.f32.mrf.mxu0
  %v620 = vadd.f32 %v130, %v619
  %621 = vmatmul.bf16.gmra.mxu0 %v310
  %v622 = vpop.f32.mrf.mxu0
  %v623 = vadd.f32 %v130, %v622
  %v624 = vpop.f32.mrf.mxu0
  %v625 = vadd.f32 %v130, %v624
  %626 = vmatmul.bf16.gmra.mxu0 %v314
  %v627 = vpop.f32.mrf.mxu0
  %v628 = vadd.f32 %v130, %v627
  %v629 = vpop.f32.mrf.mxu0
  %v630 = vadd.f32 %v130, %v629
  %631 = vmatmul.bf16.gmra.mxu0 %v318
  %v632 = vpop.f32.mrf.mxu0
  %v633 = vadd.f32 %v130, %v632
  %v634 = vpop.f32.mrf.mxu0
  %v635 = vadd.f32 %v130, %v634
  %636 = vmatmul.bf16.gmra.mxu0 %v322
  %v637 = vpop.f32.mrf.mxu0
  %v638 = vadd.f32 %v130, %v637
  %v639 = vpop.f32.mrf.mxu0
  %v640 = vadd.f32 %v130, %v639
  %641 = vmatmul.bf16.gmra.mxu0 %v326
  %v642 = vpop.f32.mrf.mxu0
  %v643 = vadd.f32 %v130, %v642
  %v644 = vpop.f32.mrf.mxu0
  %v645 = vadd.f32 %v130, %v644
  %646 = vmatmul.bf16.gmra.mxu0 %v330
  %v647 = vpop.f32.mrf.mxu0
  %v648 = vadd.f32 %v130, %v647
  %v649 = vpop.f32.mrf.mxu0
  %650 = vdwg.mxu0
  %651 = vmatpush.bf16.msra.mxu0 %v529
  %652 = vmatpush.bf16.msra.mxu0 %v528
  %653 = vmatpush.bf16.msra.mxu0 %v527
  %654 = vmatpush.bf16.msra.mxu0 %v526
  %655 = vmatpush.bf16.msra.mxu0 %v525
  %656 = vmatpush.bf16.msra.mxu0 %v524
  %657 = vmatpush.bf16.msra.mxu0 %v523
  %658 = vmatpush.bf16.msra.mxu0 %v522
  %659 = vmatmul.bf16.gmra.mxu0 %v283
  %v660 = vpop.f32.mrf.mxu0
  %v661 = vadd.f32 %v588, %v660
  %v662 = vpop.f32.mrf.mxu0
  %v663 = vadd.f32 %v590, %v662
  %664 = vmatmul.bf16.gmra.mxu0 %v287
  %v665 = vpop.f32.mrf.mxu0
  %v666 = vadd.f32 %v593, %v665
  %v667 = vpop.f32.mrf.mxu0
  %v668 = vadd.f32 %v595, %v667
  %669 = vmatmul.bf16.gmra.mxu0 %v291
  %v670 = vpop.f32.mrf.mxu0
  %v671 = vadd.f32 %v598, %v670
  %v672 = vpop.f32.mrf.mxu0
  %v673 = vadd.f32 %v600, %v672
  %674 = vmatmul.bf16.gmra.mxu0 %v295
  %v675 = vpop.f32.mrf.mxu0
  %v676 = vadd.f32 %v603, %v675
  %v677 = vpop.f32.mrf.mxu0
  %v678 = vadd.f32 %v605, %v677
  %679 = vmatmul.bf16.gmra.mxu0 %v299
  %v680 = vpop.f32.mrf.mxu0
  %v681 = vadd.f32 %v608, %v680
  %v682 = vpop.f32.mrf.mxu0
  %v683 = vadd.f32 %v610, %v682
  %684 = vmatmul.bf16.gmra.mxu0 %v303
  %v685 = vpop.f32.mrf.mxu0
  %v686 = vadd.f32 %v613, %v685
  %v687 = vpop.f32.mrf.mxu0
  %v688 = vadd.f32 %v615, %v687
  %689 = vmatmul.bf16.gmra.mxu0 %v307
  %v690 = vpop.f32.mrf.mxu0
  %v691 = vadd.f32 %v618, %v690
  %v692 = vpop.f32.mrf.mxu0
  %v693 = vadd.f32 %v620, %v692
  %694 = vmatmul.bf16.gmra.mxu0 %v311
  %v695 = vpop.f32.mrf.mxu0
  %v696 = vadd.f32 %v623, %v695
  %v697 = vpop.f32.mrf.mxu0
  %v698 = vadd.f32 %v625, %v697
  %699 = vmatmul.bf16.gmra.mxu0 %v315
  %v700 = vpop.f32.mrf.mxu0
  %v701 = vadd.f32 %v628, %v700
  %v702 = vpop.f32.mrf.mxu0
  %v703 = vadd.f32 %v630, %v702
  %704 = vmatmul.bf16.gmra.mxu0 %v319
  %v705 = vpop.f32.mrf.mxu0
  %v706 = vadd.f32 %v633, %v705
  %v707 = vpop.f32.mrf.mxu0
  %v708 = vadd.f32 %v635, %v707
  %709 = vmatmul.bf16.gmra.mxu0 %v323
  %v710 = vpop.f32.mrf.mxu0
  %v711 = vadd.f32 %v638, %v710
  %v712 = vpop.f32.mrf.mxu0
  %v713 = vadd.f32 %v640, %v712
  %714 = vmatmul.bf16.gmra.mxu0 %v327
  %v715 = vpop.f32.mrf.mxu0
  %v716 = vadd.f32 %v643, %v715
  %v717 = vpop.f32.mrf.mxu0
  %v718 = vadd.f32 %v645, %v717
  %719 = vmatmul.bf16.gmra.mxu0 %v331
  %v720 = vpop.f32.mrf.mxu0
  %v721 = vadd.f32 %v648, %v720
  %v722 = vpop.f32.mrf.mxu0
  %723 = vdwg.mxu0
  %724 = vmatpush.bf16.msra.mxu0 %v537
  %725 = vmatpush.bf16.msra.mxu0 %v536
  %726 = vmatpush.bf16.msra.mxu0 %v535
  %727 = vmatpush.bf16.msra.mxu0 %v534
  %728 = vmatpush.bf16.msra.mxu0 %v533
  %729 = vmatpush.bf16.msra.mxu0 %v532
  %730 = vmatpush.bf16.msra.mxu0 %v531
  %731 = vmatpush.bf16.msra.mxu0 %v530
  %732 = vmatmul.bf16.gmra.mxu0 %v284
  %v733 = vpop.f32.mrf.mxu0
  %v734 = vadd.f32 %v661, %v733
  %v735 = vpop.f32.mrf.mxu0
  %v736 = vadd.f32 %v663, %v735
  %737 = vmatmul.bf16.gmra.mxu0 %v288
  %v738 = vpop.f32.mrf.mxu0
  %v739 = vadd.f32 %v666, %v738
  %v740 = vpop.f32.mrf.mxu0
  %v741 = vadd.f32 %v668, %v740
  %742 = vmatmul.bf16.gmra.mxu0 %v292
  %v743 = vpop.f32.mrf.mxu0
  %v744 = vadd.f32 %v671, %v743
  %v745 = vpop.f32.mrf.mxu0
  %v746 = vadd.f32 %v673, %v745
  %747 = vmatmul.bf16.gmra.mxu0 %v296
  %v748 = vpop.f32.mrf.mxu0
  %v749 = vadd.f32 %v676, %v748
  %v750 = vpop.f32.mrf.mxu0
  %v751 = vadd.f32 %v678, %v750
  %752 = vmatmul.bf16.gmra.mxu0 %v300
  %v753 = vpop.f32.mrf.mxu0
  %v754 = vadd.f32 %v681, %v753
  %v755 = vpop.f32.mrf.mxu0
  %v756 = vadd.f32 %v683, %v755
  %757 = vmatmul.bf16.gmra.mxu0 %v304
  %v758 = vpop.f32.mrf.mxu0
  %v759 = vadd.f32 %v686, %v758
  %v760 = vpop.f32.mrf.mxu0
  %v761 = vadd.f32 %v688, %v760
  %762 = vmatmul.bf16.gmra.mxu0 %v308
  %v763 = vpop.f32.mrf.mxu0
  %v764 = vadd.f32 %v691, %v763
  %v765 = vpop.f32.mrf.mxu0
  %v766 = vadd.f32 %v693, %v765
  %767 = vmatmul.bf16.gmra.mxu0 %v312
  %v768 = vpop.f32.mrf.mxu0
  %v769 = vadd.f32 %v696, %v768
  %v770 = vpop.f32.mrf.mxu0
  %v771 = vadd.f32 %v698, %v770
  %772 = vmatmul.bf16.gmra.mxu0 %v316
  %v773 = vpop.f32.mrf.mxu0
  %v774 = vadd.f32 %v701, %v773
  %v775 = vpop.f32.mrf.mxu0
  %v776 = vadd.f32 %v703, %v775
  %777 = vmatmul.bf16.gmra.mxu0 %v320
  %v778 = vpop.f32.mrf.mxu0
  %v779 = vadd.f32 %v706, %v778
  %v780 = vpop.f32.mrf.mxu0
  %v781 = vadd.f32 %v708, %v780
  %782 = vmatmul.bf16.gmra.mxu0 %v324
  %v783 = vpop.f32.mrf.mxu0
  %v784 = vadd.f32 %v711, %v783
  %v785 = vpop.f32.mrf.mxu0
  %v786 = vadd.f32 %v713, %v785
  %787 = vmatmul.bf16.gmra.mxu0 %v328
  %v788 = vpop.f32.mrf.mxu0
  %v789 = vadd.f32 %v716, %v788
  %v790 = vpop.f32.mrf.mxu0
  %v791 = vadd.f32 %v718, %v790
  %792 = vmatmul.bf16.gmra.mxu0 %v332
  %v793 = vpop.f32.mrf.mxu0
  %v794 = vadd.f32 %v721, %v793
  %v795 = vpop.f32.mrf.mxu0
  %796 = vdwg.mxu0
  %797 = vmatpush.bf16.msra.mxu0 %v545
  %798 = vmatpush.bf16.msra.mxu0 %v544
  %799 = vmatpush.bf16.msra.mxu0 %v543
  %800 = vmatpush.bf16.msra.mxu0 %v542
  %801 = vmatpush.bf16.msra.mxu0 %v541
  %802 = vmatpush.bf16.msra.mxu0 %v540
  %803 = vmatpush.bf16.msra.mxu0 %v539
  %804 = vmatpush.bf16.msra.mxu0 %v538
  %805 = vmatmul.bf16.gmra.mxu0 %v285
  %v806 = vpop.f32.mrf.mxu0
  %v807 = vadd.f32 %v734, %v806
  %v808 = vpop.f32.mrf.mxu0
  %v809 = vadd.f32 %v736, %v808
  %810 = vmatmul.bf16.gmra.mxu0 %v289
  %v811 = vpop.f32.mrf.mxu0
  %v812 = vadd.f32 %v739, %v811
  %v813 = vpop.f32.mrf.mxu0
  %v814 = vadd.f32 %v741, %v813
  %815 = vmatmul.bf16.gmra.mxu0 %v293
  %v816 = vpop.f32.mrf.mxu0
  %v817 = vadd.f32 %v744, %v816
  %v818 = vpop.f32.mrf.mxu0
  %v819 = vadd.f32 %v746, %v818
  %820 = vmatmul.bf16.gmra.mxu0 %v297
  %v821 = vpop.f32.mrf.mxu0
  %v822 = vadd.f32 %v749, %v821
  %v823 = vpop.f32.mrf.mxu0
  %v824 = vadd.f32 %v751, %v823
  %825 = vmatmul.bf16.gmra.mxu0 %v301
  %v826 = vpop.f32.mrf.mxu0
  %v827 = vadd.f32 %v754, %v826
  %v828 = vpop.f32.mrf.mxu0
  %v829 = vadd.f32 %v756, %v828
  %830 = vmatmul.bf16.gmra.mxu0 %v305
  %v831 = vpop.f32.mrf.mxu0
  %v832 = vadd.f32 %v759, %v831
  %v833 = vpop.f32.mrf.mxu0
  %v834 = vadd.f32 %v761, %v833
  %835 = vmatmul.bf16.gmra.mxu0 %v309
  %v836 = vpop.f32.mrf.mxu0
  %v837 = vadd.f32 %v764, %v836
  %v838 = vpop.f32.mrf.mxu0
  %v839 = vadd.f32 %v766, %v838
  %840 = vmatmul.bf16.gmra.mxu0 %v313
  %v841 = vpop.f32.mrf.mxu0
  %v842 = vadd.f32 %v769, %v841
  %v843 = vpop.f32.mrf.mxu0
  %v844 = vadd.f32 %v771, %v843
  %845 = vmatmul.bf16.gmra.mxu0 %v317
  %v846 = vpop.f32.mrf.mxu0
  %v847 = vadd.f32 %v774, %v846
  %v848 = vpop.f32.mrf.mxu0
  %v849 = vadd.f32 %v776, %v848
  %850 = vmatmul.bf16.gmra.mxu0 %v321
  %v851 = vpop.f32.mrf.mxu0
  %v852 = vadd.f32 %v779, %v851
  %v853 = vpop.f32.mrf.mxu0
  %v854 = vadd.f32 %v781, %v853
  %855 = vmatmul.bf16.gmra.mxu0 %v325
  %v856 = vpop.f32.mrf.mxu0
  %v857 = vadd.f32 %v784, %v856
  %v858 = vpop.f32.mrf.mxu0
  %v859 = vadd.f32 %v786, %v858
  %860 = vmatmul.bf16.gmra.mxu0 %v329
  %v861 = vpop.f32.mrf.mxu0
  %v862 = vadd.f32 %v789, %v861
  %v863 = vpop.f32.mrf.mxu0
  %v864 = vadd.f32 %v791, %v863
  %865 = vmatmul.bf16.gmra.mxu0 %v333
  %v866 = vpop.f32.mrf.mxu0
  %v867 = vadd.f32 %v794, %v866
  %v868 = vpop.f32.mrf.mxu0
  %869 = vdwg.mxu0
  %v870 = vmax.f32 %v807, 0.0
  %v871 = vmax.f32 %v809, 0.0
  %v872 = vmax.f32 %v812, 0.0
  %v873 = vmax.f32 %v814, 0.0
  %v874 = vmax.f32 %v817, 0.0
  %v875 = vmax.f32 %v819, 0.0
  %v876 = vmax.f32 %v822, 0.0
  %v877 = vmax.f32 %v824, 0.0
  %v878 = vmax.f32 %v827, 0.0
  %v879 = vmax.f32 %v829, 0.0
  %v880 = vmax.f32 %v832, 0.0
  %v881 = vmax.f32 %v834, 0.0
  %v882 = vmax.f32 %v837, 0.0
  %v883 = vmax.f32 %v839, 0.0
  %v884 = vmax.f32 %v842, 0.0
  %v885 = vmax.f32 %v844, 0.0
  %v886 = vmax.f32 %v847, 0.0
  %v887 = vmax.f32 %v849, 0.0
  %v888 = vmax.f32 %v852, 0.0
  %v889 = vmax.f32 %v854, 0.0
  %v890 = vmax.f32 %v857, 0.0
  %v891 = vmax.f32 %v859, 0.0
  %v892 = vmax.f32 %v862, 0.0
  %v893 = vmax.f32 %v864, 0.0
  %v894 = vmax.f32 %v867, 0.0
  %v895 = vpack.c.bf16 %v870, %v870
  %v896 = vpack.c.bf16 %v871, %v871
  %v897 = vpack.c.bf16 %v872, %v872
  %v898 = vpack.c.bf16 %v873, %v873
  %v899 = vpack.c.bf16 %v874, %v874
  %v900 = vpack.c.bf16 %v875, %v875
  %v901 = vpack.c.bf16 %v876, %v876
  %v902 = vpack.c.bf16 %v877, %v877
  %v903 = vpack.c.bf16 %v878, %v878
  %v904 = vpack.c.bf16 %v879, %v879
  %v905 = vpack.c.bf16 %v880, %v880
  %v906 = vpack.c.bf16 %v881, %v881
  %v907 = vpack.c.bf16 %v882, %v882
  %v908 = vpack.c.bf16 %v883, %v883
  %v909 = vpack.c.bf16 %v884, %v884
  %v910 = vpack.c.bf16 %v885, %v885
  %v911 = vpack.c.bf16 %v886, %v886
  %v912 = vpack.c.bf16 %v887, %v887
  %v913 = vpack.c.bf16 %v888, %v888
  %v914 = vpack.c.bf16 %v889, %v889
  %v915 = vpack.c.bf16 %v890, %v890
  %v916 = vpack.c.bf16 %v891, %v891
  %v917 = vpack.c.bf16 %v892, %v892
  %v918 = vpack.c.bf16 %v893, %v893
  %v919 = vpack.c.bf16 %v894, %v894
  %vm920 = vcmask 519168
  %921 = vst.msk [vmem:[%s3] sm:$0xf] %vm920, %v895
  %922 = vst.msk [vmem:[%s3 + $0x4] sm:$0xf] %vm920, %v896
  %923 = vst.msk [vmem:[%s3 + $0x8] sm:$0xf] %vm920, %v897
  %924 = vst.msk [vmem:[%s3 + $0xc] sm:$0xf] %vm920, %v898
  %925 = vst.msk [vmem:[%s3 + $0x10] sm:$0xf] %vm920, %v899
  %926 = vst.msk [vmem:[%s3 + $0x14] sm:$0xf] %vm920, %v900
  %927 = vst.msk [vmem:[%s3 + $0x18] sm:$0xf] %vm920, %v901
  %928 = vst.msk [vmem:[%s3 + $0x1c] sm:$0xf] %vm920, %v902
  %929 = vst.msk [vmem:[%s3 + $0x20] sm:$0xf] %vm920, %v903
  %930 = vst.msk [vmem:[%s3 + $0x24] sm:$0xf] %vm920, %v904
  %931 = vst.msk [vmem:[%s3 + $0x28] sm:$0xf] %vm920, %v905
  %932 = vst.msk [vmem:[%s3 + $0x2c] sm:$0xf] %vm920, %v906
  %933 = vst.msk [vmem:[%s3 + $0x30] sm:$0xf] %vm920, %v907
  %934 = vst.msk [vmem:[%s3 + $0x34] sm:$0xf] %vm920, %v908
  %935 = vst.msk [vmem:[%s3 + $0x38] sm:$0xf] %vm920, %v909
  %936 = vst.msk [vmem:[%s3 + $0x3c] sm:$0xf] %vm920, %v910
  %937 = vst.msk [vmem:[%s3 + $0x40] sm:$0xf] %vm920, %v911
  %938 = vst.msk [vmem:[%s3 + $0x44] sm:$0xf] %vm920, %v912
  %939 = vst.msk [vmem:[%s3 + $0x48] sm:$0xf] %vm920, %v913
  %940 = vst.msk [vmem:[%s3 + $0x4c] sm:$0xf] %vm920, %v914
  %941 = vst.msk [vmem:[%s3 + $0x50] sm:$0xf] %vm920, %v915
  %942 = vst.msk [vmem:[%s3 + $0x54] sm:$0xf] %vm920, %v916
  %943 = vst.msk [vmem:[%s3 + $0x58] sm:$0xf] %vm920, %v917
  %944 = vst.msk [vmem:[%s3 + $0x5c] sm:$0xf] %vm920, %v918
  %945 = vst.msk [vmem:[%s3 + $0x60] sm:$0xf] %vm920, %v919
  // Predicated region
  $region14: #{pick_forward.5} parent=0 // pred_check
    _
  $region15: #{pick_forward.5} parent=0 // pred_check_branch
    %947 = sbr.rel (0) target = $region17
  $region16: #{pick_forward.5} parent=0 // pred_region
    _
  $region17: #{pick_forward.5} parent=0 // pred_fallthru
    _
  // Predicated region
  $region18: #{pick_forward.5} parent=0 // pred_check
    _
  $region19: #{pick_forward.5} parent=0 // pred_check_branch
    %949 = sbr.rel (0) target = $region21
  $region20: #{pick_forward.5} parent=0 // pred_region
    _
  $region21: #{pick_forward.5} parent=0 // pred_fallthru
    _

// kernel: pick_forward.6
$region0: #{pick_forward.6}
  #allocation0 [shape = 'u32[]', space=smem, size = 0x4, offset = 0x4, fixed_abs, tag = 'smem constant byte address 0x4 - core index']
  #allocation1 [shape = 'u32[72,128]{1,0:T(1,128)}', space=vmem, size = 0x9000, scoped, tag = 'internal scratch']
  %s0 = inlined_call_operand.vmem [shape: bf16[128,576], index: 0, kind: input, shape index: {}]
  %s1 = inlined_call_operand.vmem [shape: bf16[576,64], index: 1, kind: input, shape index: {}]
  %s2 = inlined_call_operand.vmem [shape: f32[1,64], index: 2, kind: input, shape index: {}]
  %s3 = inlined_call_operand.vmem [shape: bf16[128,64], index: 3, kind: output, shape index: {}]
  %s4 = sld [smem:[#allocation0]]
  $region22: #{pick_forward.6} parent=0
    _
  %s6 = ssub.s32 1, %s4
  %s7 = scalar_select 0, %s6, %s4
  // Predicated region
  $region2: #{pick_forward.6} parent=0 // pred_check
    _
  $region3: #{pick_forward.6} parent=0 // pred_check_branch
    %9 = sbr.rel (0) target = $region5
  $region4: #{pick_forward.6} parent=0 // pred_region
    _
  $region5: #{pick_forward.6} parent=0 // pred_fallthru
    _
  // Predicated region
  $region6: #{pick_forward.6} parent=0 // pred_check
    _
  $region7: #{pick_forward.6} parent=0 // pred_check_branch
    %11 = sbr.rel (0) target = $region9
  $region8: #{pick_forward.6} parent=0 // pred_region
    _
  $region9: #{pick_forward.6} parent=0 // pred_fallthru
    _
  // Predicated region
  $region10: #{pick_forward.6} parent=0 // pred_check
    _
  $region11: #{pick_forward.6} parent=0 // pred_check_branch
    %13 = sbr.rel (0) target = $region13
  $region12: #{pick_forward.6} parent=0 // pred_region
    _
  $region13: #{pick_forward.6} parent=0 // pred_fallthru
    _
  %v15 = vld [vmem:[%s0] sm:$0xff]
  %v16 = vld [vmem:[%s0 + $0x8] sm:$0xff]
  %v17 = vld [vmem:[%s0 + $0x10] sm:$0xf]
  %v18 = vld [vmem:[%s0 + $0x14] sm:$0xff]
  %v19 = vld [vmem:[%s0 + $0x1c] sm:$0xff]
  %v20 = vld [vmem:[%s0 + $0x24] sm:$0xf]
  %v21 = vld [vmem:[%s0 + $0x28] sm:$0xff]
  %v22 = vld [vmem:[%s0 + $0x30] sm:$0xff]
  %v23 = vld [vmem:[%s0 + $0x38] sm:$0xf]
  %v24 = vld [vmem:[%s0 + $0x3c] sm:$0xff]
  %v25 = vld [vmem:[%s0 + $0x44] sm:$0xff]
  %v26 = vld [vmem:[%s0 + $0x4c] sm:$0xf]
  %v27 = vld [vmem:[%s0 + $0x50] sm:$0xff]
  %v28 = vld [vmem:[%s0 + $0x58] sm:$0xff]
  %v29 = vld [vmem:[%s0 + $0x60] sm:$0xf]
  %v30 = vld [vmem:[%s0 + $0x64] sm:$0xff]
  %v31 = vld [vmem:[%s0 + $0x6c] sm:$0xff]
  %v32 = vld [vmem:[%s0 + $0x74] sm:$0xf]
  %v33 = vld [vmem:[%s0 + $0x78] sm:$0xff]
  %v34 = vld [vmem:[%s0 + $0x80] sm:$0xff]
  %v35 = vld [vmem:[%s0 + $0x88] sm:$0xf]
  %v36 = vld [vmem:[%s0 + $0x8c] sm:$0xff]
  %v37 = vld [vmem:[%s0 + $0x94] sm:$0xff]
  %v38 = vld [vmem:[%s0 + $0x9c] sm:$0xf]
  %v39 = vld [vmem:[%s0 + $0xa0] sm:$0xff]
  %v40 = vld [vmem:[%s0 + $0xa8] sm:$0xff]
  %v41 = vld [vmem:[%s0 + $0xb0] sm:$0xf]
  %v42 = vld [vmem:[%s0 + $0xb4] sm:$0xff]
  %v43 = vld [vmem:[%s0 + $0xbc] sm:$0xff]
  %v44 = vld [vmem:[%s0 + $0xc4] sm:$0xf]
  %v45 = vld [vmem:[%s0 + $0xc8] sm:$0xff]
  %v46 = vld [vmem:[%s0 + $0xd0] sm:$0xff]
  %v47 = vld [vmem:[%s0 + $0xd8] sm:$0xf]
  %v48 = vld [vmem:[%s0 + $0xdc] sm:$0xff]
  %v49 = vld [vmem:[%s0 + $0xe4] sm:$0xff]
  %v50 = vld [vmem:[%s0 + $0xec] sm:$0xf]
  %v51 = vld [vmem:[%s0 + $0xf0] sm:$0xff]
  %v52 = vld [vmem:[%s0 + $0xf8] sm:$0xff]
  %v53 = vld [vmem:[%s0 + $0x100] sm:$0xf]
  %v54 = vld [vmem:[%s0 + $0x104] sm:$0xff]
  %v55 = vld [vmem:[%s0 + $0x10c] sm:$0xff]
  %v56 = vld [vmem:[%s0 + $0x114] sm:$0xf]
  %v57 = vld [vmem:[%s0 + $0x118] sm:$0xff]
  %v58 = vld [vmem:[%s0 + $0x120] sm:$0xff]
  %v59 = vld [vmem:[%s0 + $0x128] sm:$0xf]
  %v60 = vld [vmem:[%s0 + $0x12c] sm:$0xff]
  %v61 = vld [vmem:[%s0 + $0x134] sm:$0xff]
  %v62 = vld [vmem:[%s0 + $0x13c] sm:$0xf]
  %v63 = vld [vmem:[%s1] sm:$0xf]
  %v64 = vld [vmem:[%s1 + $0x4] sm:$0xf]
  %v65 = vld [vmem:[%s1 + $0x8] sm:$0xf]
  %v66 = vld [vmem:[%s1 + $0xc] sm:$0xf]
  %v67 = vld [vmem:[%s1 + $0x10] sm:$0xf]
  %v68 = vld [vmem:[%s1 + $0x14] sm:$0xf]
  %v69 = vld [vmem:[%s1 + $0x18] sm:$0xf]
  %v70 = vld [vmem:[%s1 + $0x1c] sm:$0xf]
  %v71 = vld [vmem:[%s1 + $0x20] sm:$0xf]
  %v72 = vld [vmem:[%s1 + $0x24] sm:$0xf]
  %v73 = vld [vmem:[%s1 + $0x28] sm:$0xf]
  %v74 = vld [vmem:[%s1 + $0x2c] sm:$0xf]
  %v75 = vld [vmem:[%s1 + $0x30] sm:$0xf]
  %v76 = vld [vmem:[%s1 + $0x34] sm:$0xf]
  %v77 = vld [vmem:[%s1 + $0x38] sm:$0xf]
  %v78 = vld [vmem:[%s1 + $0x3c] sm:$0xf]
  %v79 = vld [vmem:[%s1 + $0x40] sm:$0xf]
  %v80 = vld [vmem:[%s1 + $0x44] sm:$0xf]
  %v81 = vld [vmem:[%s1 + $0x48] sm:$0xf]
  %v82 = vld [vmem:[%s1 + $0x4c] sm:$0xf]
  %v83 = vld [vmem:[%s1 + $0x50] sm:$0xf]
  %v84 = vld [vmem:[%s1 + $0x54] sm:$0xf]
  %v85 = vld [vmem:[%s1 + $0x58] sm:$0xf]
  %v86 = vld [vmem:[%s1 + $0x5c] sm:$0xf]
  %v87 = vld [vmem:[%s1 + $0x60] sm:$0xf]
  %v88 = vld [vmem:[%s1 + $0x64] sm:$0xf]
  %v89 = vld [vmem:[%s1 + $0x68] sm:$0xf]
  %v90 = vld [vmem:[%s1 + $0x6c] sm:$0xf]
  %v91 = vld [vmem:[%s1 + $0x70] sm:$0xf]
  %v92 = vld [vmem:[%s1 + $0x74] sm:$0xf]
  %v93 = vld [vmem:[%s1 + $0x78] sm:$0xf]
  %v94 = vld [vmem:[%s1 + $0x7c] sm:$0xf]
  %v95 = vld [vmem:[%s1 + $0x80] sm:$0xf]
  %v96 = vld [vmem:[%s1 + $0x84] sm:$0xf]
  %v97 = vld [vmem:[%s1 + $0x88] sm:$0xf]
  %v98 = vld [vmem:[%s1 + $0x8c] sm:$0xf]
  %v99 = vld [vmem:[%s1 + $0x90] sm:$0xf]
  %v100 = vld [vmem:[%s1 + $0x94] sm:$0xf]
  %v101 = vld [vmem:[%s1 + $0x98] sm:$0xf]
  %v102 = vld [vmem:[%s1 + $0x9c] sm:$0xf]
  %v103 = vld [vmem:[%s1 + $0xa0] sm:$0xf]
  %v104 = vld [vmem:[%s1 + $0xa4] sm:$0xf]
  %v105 = vld [vmem:[%s1 + $0xa8] sm:$0xf]
  %v106 = vld [vmem:[%s1 + $0xac] sm:$0xf]
  %v107 = vld [vmem:[%s1 + $0xb0] sm:$0xf]
  %v108 = vld [vmem:[%s1 + $0xb4] sm:$0xf]
  %v109 = vld [vmem:[%s1 + $0xb8] sm:$0xf]
  %v110 = vld [vmem:[%s1 + $0xbc] sm:$0xf]
  %v111 = vld [vmem:[%s1 + $0xc0] sm:$0xf]
  %v112 = vld [vmem:[%s1 + $0xc4] sm:$0xf]
  %v113 = vld [vmem:[%s1 + $0xc8] sm:$0xf]
  %v114 = vld [vmem:[%s1 + $0xcc] sm:$0xf]
  %v115 = vld [vmem:[%s1 + $0xd0] sm:$0xf]
  %v116 = vld [vmem:[%s1 + $0xd4] sm:$0xf]
  %v117 = vld [vmem:[%s1 + $0xd8] sm:$0xf]
  %v118 = vld [vmem:[%s1 + $0xdc] sm:$0xf]
  %v119 = vld [vmem:[%s1 + $0xe0] sm:$0xf]
  %v120 = vld [vmem:[%s1 + $0xe4] sm:$0xf]
  %v121 = vld [vmem:[%s1 + $0xe8] sm:$0xf]
  %v122 = vld [vmem:[%s1 + $0xec] sm:$0xf]
  %v123 = vld [vmem:[%s1 + $0xf0] sm:$0xf]
  %v124 = vld [vmem:[%s1 + $0xf4] sm:$0xf]
  %v125 = vld [vmem:[%s1 + $0xf8] sm:$0xf]
  %v126 = vld [vmem:[%s1 + $0xfc] sm:$0xf]
  %v127 = vld [vmem:[%s1 + $0x100] sm:$0xf]
  %v128 = vld [vmem:[%s1 + $0x104] sm:$0xf]
  %v129 = vld [vmem:[%s1 + $0x108] sm:$0xf]
  %v130 = vld [vmem:[%s1 + $0x10c] sm:$0xf]
  %v131 = vld [vmem:[%s1 + $0x110] sm:$0xf]
  %v132 = vld [vmem:[%s1 + $0x114] sm:$0xf]
  %v133 = vld [vmem:[%s1 + $0x118] sm:$0xf]
  %v134 = vld [vmem:[%s1 + $0x11c] sm:$0xf]
  %v135 = vld [vmem:[%s2] sm:$0x1]
  %v137 = vperm.slane %v135, 0
  %v187 = vunpack.c.l.b16 %v15
  %v188 = vunpack.c.h.b16 %v15
  %v189 = vunpack.c.l.b16 %v16
  %v190 = vunpack.c.h.b16 %v16
  %v191 = vunpack.c.l.b16 %v17
  %v192 = vunpack.c.l.b16 %v18
  %v193 = vunpack.c.h.b16 %v18
  %v194 = vunpack.c.l.b16 %v19
  %v195 = vunpack.c.h.b16 %v19
  %v196 = vunpack.c.l.b16 %v20
  %v197 = vunpack.c.l.b16 %v21
  %v198 = vunpack.c.h.b16 %v21
  %v199 = vunpack.c.l.b16 %v22
  %v200 = vunpack.c.h.b16 %v22
  %v201 = vunpack.c.l.b16 %v23
  %v202 = vunpack.c.l.b16 %v24
  %v203 = vunpack.c.h.b16 %v24
  %v204 = vunpack.c.l.b16 %v25
  %v205 = vunpack.c.h.b16 %v25
  %v206 = vunpack.c.l.b16 %v26
  %v207 = vunpack.c.l.b16 %v27
  %v208 = vunpack.c.h.b16 %v27
  %v209 = vunpack.c.l.b16 %v28
  %v210 = vunpack.c.h.b16 %v28
  %v211 = vunpack.c.l.b16 %v29
  %v212 = vunpack.c.l.b16 %v30
  %v213 = vunpack.c.h.b16 %v30
  %v214 = vunpack.c.l.b16 %v31
  %v215 = vunpack.c.h.b16 %v31
  %v216 = vunpack.c.l.b16 %v32
  %v217 = vunpack.c.l.b16 %v33
  %v218 = vunpack.c.h.b16 %v33
  %v219 = vunpack.c.l.b16 %v34
  %v220 = vunpack.c.h.b16 %v34
  %v221 = vunpack.c.l.b16 %v35
  %v222 = vunpack.c.l.b16 %v36
  %v223 = vunpack.c.h.b16 %v36
  %v224 = vunpack.c.l.b16 %v37
  %v225 = vunpack.c.h.b16 %v37
  %v226 = vunpack.c.l.b16 %v38
  %v227 = vunpack.c.l.b16 %v39
  %v228 = vunpack.c.h.b16 %v39
  %v229 = vunpack.c.l.b16 %v40
  %v230 = vunpack.c.h.b16 %v40
  %v231 = vunpack.c.l.b16 %v41
  %v232 = vunpack.c.l.b16 %v42
  %v233 = vunpack.c.h.b16 %v42
  %v234 = vunpack.c.l.b16 %v43
  %v235 = vunpack.c.h.b16 %v43
  %v236 = vunpack.c.l.b16 %v44
  %v237 = vunpack.c.l.b16 %v45
  %v238 = vunpack.c.h.b16 %v45
  %v239 = vunpack.c.l.b16 %v46
  %v240 = vunpack.c.h.b16 %v46
  %v241 = vunpack.c.l.b16 %v47
  %v242 = vunpack.c.l.b16 %v48
  %v243 = vunpack.c.h.b16 %v48
  %v244 = vunpack.c.l.b16 %v49
  %v245 = vunpack.c.h.b16 %v49
  %v246 = vunpack.c.l.b16 %v50
  %v247 = vunpack.c.l.b16 %v51
  %v248 = vunpack.c.h.b16 %v51
  %v249 = vunpack.c.l.b16 %v52
  %v250 = vunpack.c.h.b16 %v52
  %v251 = vunpack.c.l.b16 %v53
  %v252 = vunpack.c.l.b16 %v54
  %v253 = vunpack.c.h.b16 %v54
  %v254 = vunpack.c.l.b16 %v55
  %v255 = vunpack.c.h.b16 %v55
  %v256 = vunpack.c.l.b16 %v56
  %v257 = vunpack.c.l.b16 %v57
  %v258 = vunpack.c.h.b16 %v57
  %v259 = vunpack.c.l.b16 %v58
  %v260 = vunpack.c.h.b16 %v58
  %v261 = vunpack.c.l.b16 %v59
  %v262 = vunpack.c.l.b16 %v60
  %v263 = vunpack.c.h.b16 %v60
  %v264 = vunpack.c.l.b16 %v61
  %v265 = vunpack.c.h.b16 %v61
  %v266 = vunpack.c.l.b16 %v62
  %v267 = vpack.c.b16 %v192, %v187
  %v268 = vpack.c.b16 %v193, %v188
  %v269 = vpack.c.b16 %v194, %v189
  %v270 = vpack.c.b16 %v195, %v190
  %v271 = vpack.c.b16 %v196, %v191
  %v272 = vpack.c.b16 %v202, %v197
  %v273 = vpack.c.b16 %v203, %v198
  %v274 = vpack.c.b16 %v204, %v199
  %v275 = vpack.c.b16 %v205, %v200
  %v276 = vpack.c.b16 %v206, %v201
  %v277 = vpack.c.b16 %v212, %v207
  %v278 = vpack.c.b16 %v213, %v208
  %v279 = vpack.c.b16 %v214, %v209
  %v280 = vpack.c.b16 %v215, %v210
  %v281 = vpack.c.b16 %v216, %v211
  %v282 = vpack.c.b16 %v222, %v217
  %v283 = vpack.c.b16 %v223, %v218
  %v284 = vpack.c.b16 %v224, %v219
  %v285 = vpack.c.b16 %v225, %v220
  %v286 = vpack.c.b16 %v226, %v221
  %v287 = vpack.c.b16 %v232, %v227
  %v288 = vpack.c.b16 %v233, %v228
  %v289 = vpack.c.b16 %v234, %v229
  %v290 = vpack.c.b16 %v235, %v230
  %v291 = vpack.c.b16 %v236, %v231
  %v292 = vpack.c.b16 %v242, %v237
  %v293 = vpack.c.b16 %v243, %v238
  %v294 = vpack.c.b16 %v244, %v239
  %v295 = vpack.c.b16 %v245, %v240
  %v296 = vpack.c.b16 %v246, %v241
  %v297 = vpack.c.b16 %v252, %v247
  %v298 = vpack.c.b16 %v253, %v248
  %v299 = vpack.c.b16 %v254, %v249
  %v300 = vpack.c.b16 %v255, %v250
  %v301 = vpack.c.b16 %v256, %v251
  %v302 = vpack.c.b16 %v262, %v257
  %v303 = vpack.c.b16 %v263, %v258
  %v304 = vpack.c.b16 %v264, %v259
  %v305 = vpack.c.b16 %v265, %v260
  %v306 = vpack.c.b16 %v266, %v261
  %v411 = vunpack.c.l.b16 %v63
  %v412 = vunpack.c.l.b16 %v64
  %v413 = vunpack.c.l.b16 %v65
  %v414 = vunpack.c.l.b16 %v66
  %v415 = vunpack.c.l.b16 %v67
  %v416 = vunpack.c.l.b16 %v68
  %v417 = vunpack.c.l.b16 %v69
  %v418 = vunpack.c.l.b16 %v70
  %v419 = vunpack.c.l.b16 %v71
  %v420 = vunpack.c.l.b16 %v72
  %v421 = vunpack.c.l.b16 %v73
  %v422 = vunpack.c.l.b16 %v74
  %v423 = vunpack.c.l.b16 %v75
  %v424 = vunpack.c.l.b16 %v76
  %v425 = vunpack.c.l.b16 %v77
  %v426 = vunpack.c.l.b16 %v78
  %v427 = vunpack.c.l.b16 %v79
  %v428 = vunpack.c.l.b16 %v80
  %v429 = vunpack.c.l.b16 %v81
  %v430 = vunpack.c.l.b16 %v82
  %v431 = vunpack.c.l.b16 %v83
  %v432 = vunpack.c.l.b16 %v84
  %v433 = vunpack.c.l.b16 %v85
  %v434 = vunpack.c.l.b16 %v86
  %v435 = vunpack.c.l.b16 %v87
  %v436 = vunpack.c.l.b16 %v88
  %v437 = vunpack.c.l.b16 %v89
  %v438 = vunpack.c.l.b16 %v90
  %v439 = vunpack.c.l.b16 %v91
  %v440 = vunpack.c.l.b16 %v92
  %v441 = vunpack.c.l.b16 %v93
  %v442 = vunpack.c.l.b16 %v94
  %v443 = vunpack.c.l.b16 %v95
  %v444 = vunpack.c.l.b16 %v96
  %v445 = vunpack.c.l.b16 %v97
  %v446 = vunpack.c.l.b16 %v98
  %v447 = vunpack.c.l.b16 %v99
  %v448 = vunpack.c.l.b16 %v100
  %v449 = vunpack.c.l.b16 %v101
  %v450 = vunpack.c.l.b16 %v102
  %v451 = vunpack.c.l.b16 %v103
  %v452 = vunpack.c.l.b16 %v104
  %v453 = vunpack.c.l.b16 %v105
  %v454 = vunpack.c.l.b16 %v106
  %v455 = vunpack.c.l.b16 %v107
  %v456 = vunpack.c.l.b16 %v108
  %v457 = vunpack.c.l.b16 %v109
  %v458 = vunpack.c.l.b16 %v110
  %v459 = vunpack.c.l.b16 %v111
  %v460 = vunpack.c.l.b16 %v112
  %v461 = vunpack.c.l.b16 %v113
  %v462 = vunpack.c.l.b16 %v114
  %v463 = vunpack.c.l.b16 %v115
  %v464 = vunpack.c.l.b16 %v116
  %v465 = vunpack.c.l.b16 %v117
  %v466 = vunpack.c.l.b16 %v118
  %v467 = vunpack.c.l.b16 %v119
  %v468 = vunpack.c.l.b16 %v120
  %v469 = vunpack.c.l.b16 %v121
  %v470 = vunpack.c.l.b16 %v122
  %v471 = vunpack.c.l.b16 %v123
  %v472 = vunpack.c.l.b16 %v124
  %v473 = vunpack.c.l.b16 %v125
  %v474 = vunpack.c.l.b16 %v126
  %v475 = vunpack.c.l.b16 %v127
  %v476 = vunpack.c.l.b16 %v128
  %v477 = vunpack.c.l.b16 %v129
  %v478 = vunpack.c.l.b16 %v130
  %v479 = vunpack.c.l.b16 %v131
  %v480 = vunpack.c.l.b16 %v132
  %v481 = vunpack.c.l.b16 %v133
  %v482 = vunpack.c.l.b16 %v134
  %v483 = vpack.c.b16 %v412, %v411
  %v484 = vpack.c.b16 %v414, %v413
  %v485 = vpack.c.b16 %v416, %v415
  %v486 = vpack.c.b16 %v418, %v417
  %v487 = vpack.c.b16 %v420, %v419
  %v488 = vpack.c.b16 %v422, %v421
  %v489 = vpack.c.b16 %v424, %v423
  %v490 = vpack.c.b16 %v426, %v425
  %v491 = vpack.c.b16 %v428, %v427
  %v492 = vpack.c.b16 %v430, %v429
  %v493 = vpack.c.b16 %v432, %v431
  %v494 = vpack.c.b16 %v434, %v433
  %v495 = vpack.c.b16 %v436, %v435
  %v496 = vpack.c.b16 %v438, %v437
  %v497 = vpack.c.b16 %v440, %v439
  %v498 = vpack.c.b16 %v442, %v441
  %v499 = vpack.c.b16 %v444, %v443
  %v500 = vpack.c.b16 %v446, %v445
  %v501 = vpack.c.b16 %v448, %v447
  %v502 = vpack.c.b16 %v450, %v449
  %v503 = vpack.c.b16 %v452, %v451
  %v504 = vpack.c.b16 %v454, %v453
  %v505 = vpack.c.b16 %v456, %v455
  %v506 = vpack.c.b16 %v458, %v457
  %v507 = vpack.c.b16 %v460, %v459
  %v508 = vpack.c.b16 %v462, %v461
  %v509 = vpack.c.b16 %v464, %v463
  %v510 = vpack.c.b16 %v466, %v465
  %v511 = vpack.c.b16 %v468, %v467
  %v512 = vpack.c.b16 %v470, %v469
  %v513 = vpack.c.b16 %v472, %v471
  %v514 = vpack.c.b16 %v474, %v473
  %v515 = vpack.c.b16 %v476, %v475
  %v516 = vpack.c.b16 %v478, %v477
  %v517 = vpack.c.b16 %v480, %v479
  %v518 = vpack.c.b16 %v482, %v481
  %vm555 = vcmask 523264
  %v557 = vsel %vm555, %v271, 0
  %v560 = vsel %vm555, %v276, 0
  %v563 = vsel %vm555, %v281, 0
  %v566 = vsel %vm555, %v286, 0
  %v569 = vsel %vm555, %v291, 0
  %v572 = vsel %vm555, %v296, 0
  %v575 = vsel %vm555, %v301, 0
  %v578 = vsel %vm555, %v306, 0
  %580 = vmatpush.bf16.msra.mxu0 %v490
  %581 = vmatpush.bf16.msra.mxu0 %v489
  %582 = vmatpush.bf16.msra.mxu0 %v488
  %583 = vmatpush.bf16.msra.mxu0 %v487
  %584 = vmatpush.bf16.msra.mxu0 %v486
  %585 = vmatpush.bf16.msra.mxu0 %v485
  %586 = vmatpush.bf16.msra.mxu0 %v484
  %587 = vmatpush.bf16.msra.mxu0 %v483
  %588 = vmatmul.bf16.gmra.mxu0 %v267
  %v589 = vpop.f32.mrf.mxu0
  %v590 = vadd.f32 %v137, %v589
  %v591 = vpop.f32.mrf.mxu0
  %v592 = vadd.f32 %v137, %v591
  %593 = vmatmul.bf16.gmra.mxu0 %v272
  %v594 = vpop.f32.mrf.mxu0
  %v595 = vadd.f32 %v137, %v594
  %v596 = vpop.f32.mrf.mxu0
  %v597 = vadd.f32 %v137, %v596
  %598 = vmatmul.bf16.gmra.mxu0 %v277
  %v599 = vpop.f32.mrf.mxu0
  %v600 = vadd.f32 %v137, %v599
  %v601 = vpop.f32.mrf.mxu0
  %v602 = vadd.f32 %v137, %v601
  %603 = vmatmul.bf16.gmra.mxu0 %v282
  %v604 = vpop.f32.mrf.mxu0
  %v605 = vadd.f32 %v137, %v604
  %v606 = vpop.f32.mrf.mxu0
  %v607 = vadd.f32 %v137, %v606
  %608 = vmatmul.bf16.gmra.mxu0 %v287
  %v609 = vpop.f32.mrf.mxu0
  %v610 = vadd.f32 %v137, %v609
  %v611 = vpop.f32.mrf.mxu0
  %v612 = vadd.f32 %v137, %v611
  %613 = vmatmul.bf16.gmra.mxu0 %v292
  %v614 = vpop.f32.mrf.mxu0
  %v615 = vadd.f32 %v137, %v614
  %v616 = vpop.f32.mrf.mxu0
  %v617 = vadd.f32 %v137, %v616
  %618 = vmatmul.bf16.gmra.mxu0 %v297
  %v619 = vpop.f32.mrf.mxu0
  %v620 = vadd.f32 %v137, %v619
  %v621 = vpop.f32.mrf.mxu0
  %v622 = vadd.f32 %v137, %v621
  %623 = vmatmul.bf16.gmra.mxu0 %v302
  %v624 = vpop.f32.mrf.mxu0
  %v625 = vadd.f32 %v137, %v624
  %v626 = vpop.f32.mrf.mxu0
  %v627 = vadd.f32 %v137, %v626
  %628 = vdwg.mxu0
  %629 = vmatpush.bf16.msra.mxu0 %v498
  %630 = vmatpush.bf16.msra.mxu0 %v497
  %631 = vmatpush.bf16.msra.mxu0 %v496
  %632 = vmatpush.bf16.msra.mxu0 %v495
  %633 = vmatpush.bf16.msra.mxu0 %v494
  %634 = vmatpush.bf16.msra.mxu0 %v493
  %635 = vmatpush.bf16.msra.mxu0 %v492
  %636 = vmatpush.bf16.msra.mxu0 %v491
  %637 = vmatmul.bf16.gmra.mxu0 %v268
  %v638 = vpop.f32.mrf.mxu0
  %v639 = vadd.f32 %v590, %v638
  %v640 = vpop.f32.mrf.mxu0
  %v641 = vadd.f32 %v592, %v640
  %642 = vmatmul.bf16.gmra.mxu0 %v273
  %v643 = vpop.f32.mrf.mxu0
  %v644 = vadd.f32 %v595, %v643
  %v645 = vpop.f32.mrf.mxu0
  %v646 = vadd.f32 %v597, %v645
  %647 = vmatmul.bf16.gmra.mxu0 %v278
  %v648 = vpop.f32.mrf.mxu0
  %v649 = vadd.f32 %v600, %v648
  %v650 = vpop.f32.mrf.mxu0
  %v651 = vadd.f32 %v602, %v650
  %652 = vmatmul.bf16.gmra.mxu0 %v283
  %v653 = vpop.f32.mrf.mxu0
  %v654 = vadd.f32 %v605, %v653
  %v655 = vpop.f32.mrf.mxu0
  %v656 = vadd.f32 %v607, %v655
  %657 = vmatmul.bf16.gmra.mxu0 %v288
  %v658 = vpop.f32.mrf.mxu0
  %v659 = vadd.f32 %v610, %v658
  %v660 = vpop.f32.mrf.mxu0
  %v661 = vadd.f32 %v612, %v660
  %662 = vmatmul.bf16.gmra.mxu0 %v293
  %v663 = vpop.f32.mrf.mxu0
  %v664 = vadd.f32 %v615, %v663
  %v665 = vpop.f32.mrf.mxu0
  %v666 = vadd.f32 %v617, %v665
  %667 = vmatmul.bf16.gmra.mxu0 %v298
  %v668 = vpop.f32.mrf.mxu0
  %v669 = vadd.f32 %v620, %v668
  %v670 = vpop.f32.mrf.mxu0
  %v671 = vadd.f32 %v622, %v670
  %672 = vmatmul.bf16.gmra.mxu0 %v303
  %v673 = vpop.f32.mrf.mxu0
  %v674 = vadd.f32 %v625, %v673
  %v675 = vpop.f32.mrf.mxu0
  %v676 = vadd.f32 %v627, %v675
  %677 = vdwg.mxu0
  %678 = vmatpush.bf16.msra.mxu0 %v506
  %679 = vmatpush.bf16.msra.mxu0 %v505
  %680 = vmatpush.bf16.msra.mxu0 %v504
  %681 = vmatpush.bf16.msra.mxu0 %v503
  %682 = vmatpush.bf16.msra.mxu0 %v502
  %683 = vmatpush.bf16.msra.mxu0 %v501
  %684 = vmatpush.bf16.msra.mxu0 %v500
  %685 = vmatpush.bf16.msra.mxu0 %v499
  %686 = vmatmul.bf16.gmra.mxu0 %v269
  %v687 = vpop.f32.mrf.mxu0
  %v688 = vadd.f32 %v639, %v687
  %v689 = vpop.f32.mrf.mxu0
  %v690 = vadd.f32 %v641, %v689
  %691 = vmatmul.bf16.gmra.mxu0 %v274
  %v692 = vpop.f32.mrf.mxu0
  %v693 = vadd.f32 %v644, %v692
  %v694 = vpop.f32.mrf.mxu0
  %v695 = vadd.f32 %v646, %v694
  %696 = vmatmul.bf16.gmra.mxu0 %v279
  %v697 = vpop.f32.mrf.mxu0
  %v698 = vadd.f32 %v649, %v697
  %v699 = vpop.f32.mrf.mxu0
  %v700 = vadd.f32 %v651, %v699
  %701 = vmatmul.bf16.gmra.mxu0 %v284
  %v702 = vpop.f32.mrf.mxu0
  %v703 = vadd.f32 %v654, %v702
  %v704 = vpop.f32.mrf.mxu0
  %v705 = vadd.f32 %v656, %v704
  %706 = vmatmul.bf16.gmra.mxu0 %v289
  %v707 = vpop.f32.mrf.mxu0
  %v708 = vadd.f32 %v659, %v707
  %v709 = vpop.f32.mrf.mxu0
  %v710 = vadd.f32 %v661, %v709
  %711 = vmatmul.bf16.gmra.mxu0 %v294
  %v712 = vpop.f32.mrf.mxu0
  %v713 = vadd.f32 %v664, %v712
  %v714 = vpop.f32.mrf.mxu0
  %v715 = vadd.f32 %v666, %v714
  %716 = vmatmul.bf16.gmra.mxu0 %v299
  %v717 = vpop.f32.mrf.mxu0
  %v718 = vadd.f32 %v669, %v717
  %v719 = vpop.f32.mrf.mxu0
  %v720 = vadd.f32 %v671, %v719
  %721 = vmatmul.bf16.gmra.mxu0 %v304
  %v722 = vpop.f32.mrf.mxu0
  %v723 = vadd.f32 %v674, %v722
  %v724 = vpop.f32.mrf.mxu0
  %v725 = vadd.f32 %v676, %v724
  %726 = vdwg.mxu0
  %727 = vmatpush.bf16.msra.mxu0 %v514
  %728 = vmatpush.bf16.msra.mxu0 %v513
  %729 = vmatpush.bf16.msra.mxu0 %v512
  %730 = vmatpush.bf16.msra.mxu0 %v511
  %731 = vmatpush.bf16.msra.mxu0 %v510
  %732 = vmatpush.bf16.msra.mxu0 %v509
  %733 = vmatpush.bf16.msra.mxu0 %v508
  %734 = vmatpush.bf16.msra.mxu0 %v507
  %735 = vmatmul.bf16.gmra.mxu0 %v270
  %v736 = vpop.f32.mrf.mxu0
  %v737 = vadd.f32 %v688, %v736
  %v738 = vpop.f32.mrf.mxu0
  %v739 = vadd.f32 %v690, %v738
  %740 = vmatmul.bf16.gmra.mxu0 %v275
  %v741 = vpop.f32.mrf.mxu0
  %v742 = vadd.f32 %v693, %v741
  %v743 = vpop.f32.mrf.mxu0
  %v744 = vadd.f32 %v695, %v743
  %745 = vmatmul.bf16.gmra.mxu0 %v280
  %v746 = vpop.f32.mrf.mxu0
  %v747 = vadd.f32 %v698, %v746
  %v748 = vpop.f32.mrf.mxu0
  %v749 = vadd.f32 %v700, %v748
  %750 = vmatmul.bf16.gmra.mxu0 %v285
  %v751 = vpop.f32.mrf.mxu0
  %v752 = vadd.f32 %v703, %v751
  %v753 = vpop.f32.mrf.mxu0
  %v754 = vadd.f32 %v705, %v753
  %755 = vmatmul.bf16.gmra.mxu0 %v290
  %v756 = vpop.f32.mrf.mxu0
  %v757 = vadd.f32 %v708, %v756
  %v758 = vpop.f32.mrf.mxu0
  %v759 = vadd.f32 %v710, %v758
  %760 = vmatmul.bf16.gmra.mxu0 %v295
  %v761 = vpop.f32.mrf.mxu0
  %v762 = vadd.f32 %v713, %v761
  %v763 = vpop.f32.mrf.mxu0
  %v764 = vadd.f32 %v715, %v763
  %765 = vmatmul.bf16.gmra.mxu0 %v300
  %v766 = vpop.f32.mrf.mxu0
  %v767 = vadd.f32 %v718, %v766
  %v768 = vpop.f32.mrf.mxu0
  %v769 = vadd.f32 %v720, %v768
  %770 = vmatmul.bf16.gmra.mxu0 %v305
  %v771 = vpop.f32.mrf.mxu0
  %v772 = vadd.f32 %v723, %v771
  %v773 = vpop.f32.mrf.mxu0
  %v774 = vadd.f32 %v725, %v773
  %775 = vdwg.mxu0
  %776 = vmatpush.bf16.msra.mxu0 0
  %777 = vmatpush.bf16.msra.mxu0 0
  %778 = vmatpush.bf16.msra.mxu0 0
  %779 = vmatpush.bf16.msra.mxu0 0
  %780 = vmatpush.bf16.msra.mxu0 %v518
  %781 = vmatpush.bf16.msra.mxu0 %v517
  %782 = vmatpush.bf16.msra.mxu0 %v516
  %783 = vmatpush.bf16.msra.mxu0 %v515
  %784 = vmatmul.bf16.gmra.mxu0 %v557
  %v785 = vpop.f32.mrf.mxu0
  %v786 = vadd.f32 %v737, %v785
  %v787 = vpop.f32.mrf.mxu0
  %v788 = vadd.f32 %v739, %v787
  %789 = vmatmul.bf16.gmra.mxu0 %v560
  %v790 = vpop.f32.mrf.mxu0
  %v791 = vadd.f32 %v742, %v790
  %v792 = vpop.f32.mrf.mxu0
  %v793 = vadd.f32 %v744, %v792
  %794 = vmatmul.bf16.gmra.mxu0 %v563
  %v795 = vpop.f32.mrf.mxu0
  %v796 = vadd.f32 %v747, %v795
  %v797 = vpop.f32.mrf.mxu0
  %v798 = vadd.f32 %v749, %v797
  %799 = vmatmul.bf16.gmra.mxu0 %v566
  %v800 = vpop.f32.mrf.mxu0
  %v801 = vadd.f32 %v752, %v800
  %v802 = vpop.f32.mrf.mxu0
  %v803 = vadd.f32 %v754, %v802
  %804 = vmatmul.bf16.gmra.mxu0 %v569
  %v805 = vpop.f32.mrf.mxu0
  %v806 = vadd.f32 %v757, %v805
  %v807 = vpop.f32.mrf.mxu0
  %v808 = vadd.f32 %v759, %v807
  %809 = vmatmul.bf16.gmra.mxu0 %v572
  %v810 = vpop.f32.mrf.mxu0
  %v811 = vadd.f32 %v762, %v810
  %v812 = vpop.f32.mrf.mxu0
  %v813 = vadd.f32 %v764, %v812
  %814 = vmatmul.bf16.gmra.mxu0 %v575
  %v815 = vpop.f32.mrf.mxu0
  %v816 = vadd.f32 %v767, %v815
  %v817 = vpop.f32.mrf.mxu0
  %v818 = vadd.f32 %v769, %v817
  %819 = vmatmul.bf16.gmra.mxu0 %v578
  %v820 = vpop.f32.mrf.mxu0
  %v821 = vadd.f32 %v772, %v820
  %v822 = vpop.f32.mrf.mxu0
  %v823 = vadd.f32 %v774, %v822
  %824 = vdwg.mxu0
  %v825 = vmax.f32 %v786, 0.0
  %v826 = vmax.f32 %v788, 0.0
  %v827 = vmax.f32 %v791, 0.0
  %v828 = vmax.f32 %v793, 0.0
  %v829 = vmax.f32 %v796, 0.0
  %v830 = vmax.f32 %v798, 0.0
  %v831 = vmax.f32 %v801, 0.0
  %v832 = vmax.f32 %v803, 0.0
  %v833 = vmax.f32 %v806, 0.0
  %v834 = vmax.f32 %v808, 0.0
  %v835 = vmax.f32 %v811, 0.0
  %v836 = vmax.f32 %v813, 0.0
  %v837 = vmax.f32 %v816, 0.0
  %v838 = vmax.f32 %v818, 0.0
  %v839 = vmax.f32 %v821, 0.0
  %v840 = vmax.f32 %v823, 0.0
  %v841 = vpack.c.bf16 %v825, %v825
  %v842 = vpack.c.bf16 %v826, %v826
  %v843 = vpack.c.bf16 %v827, %v827
  %v844 = vpack.c.bf16 %v828, %v828
  %v845 = vpack.c.bf16 %v829, %v829
  %v846 = vpack.c.bf16 %v830, %v830
  %v847 = vpack.c.bf16 %v831, %v831
  %v848 = vpack.c.bf16 %v832, %v832
  %v849 = vpack.c.bf16 %v833, %v833
  %v850 = vpack.c.bf16 %v834, %v834
  %v851 = vpack.c.bf16 %v835, %v835
  %v852 = vpack.c.bf16 %v836, %v836
  %v853 = vpack.c.bf16 %v837, %v837
  %v854 = vpack.c.bf16 %v838, %v838
  %v855 = vpack.c.bf16 %v839, %v839
  %v856 = vpack.c.bf16 %v840, %v840
  %vm857 = vcmask 519168
  %858 = vst.msk [vmem:[%s3] sm:$0xf] %vm857, %v841
  %859 = vst.msk [vmem:[%s3 + $0x4] sm:$0xf] %vm857, %v842
  %860 = vst.msk [vmem:[%s3 + $0x8] sm:$0xf] %vm857, %v843
  %861 = vst.msk [vmem:[%s3 + $0xc] sm:$0xf] %vm857, %v844
  %862 = vst.msk [vmem:[%s3 + $0x10] sm:$0xf] %vm857, %v845
  %863 = vst.msk [vmem:[%s3 + $0x14] sm:$0xf] %vm857, %v846
  %864 = vst.msk [vmem:[%s3 + $0x18] sm:$0xf] %vm857, %v847
  %865 = vst.msk [vmem:[%s3 + $0x1c] sm:$0xf] %vm857, %v848
  %866 = vst.msk [vmem:[%s3 + $0x20] sm:$0xf] %vm857, %v849
  %867 = vst.msk [vmem:[%s3 + $0x24] sm:$0xf] %vm857, %v850
  %868 = vst.msk [vmem:[%s3 + $0x28] sm:$0xf] %vm857, %v851
  %869 = vst.msk [vmem:[%s3 + $0x2c] sm:$0xf] %vm857, %v852
  %870 = vst.msk [vmem:[%s3 + $0x30] sm:$0xf] %vm857, %v853
  %871 = vst.msk [vmem:[%s3 + $0x34] sm:$0xf] %vm857, %v854
  %872 = vst.msk [vmem:[%s3 + $0x38] sm:$0xf] %vm857, %v855
  %873 = vst.msk [vmem:[%s3 + $0x3c] sm:$0xf] %vm857, %v856
  // Predicated region
  $region14: #{pick_forward.6} parent=0 // pred_check
    _
  $region15: #{pick_forward.6} parent=0 // pred_check_branch
    %875 = sbr.rel (0) target = $region17
  $region16: #{pick_forward.6} parent=0 // pred_region
    _
  $region17: #{pick_forward.6} parent=0 // pred_fallthru
    _
  // Predicated region
  $region18: #{pick_forward.6} parent=0 // pred_check
    _
  $region19: #{pick_forward.6} parent=0 // pred_check_branch
    %877 = sbr.rel (0) target = $region21
  $region20: #{pick_forward.6} parent=0 // pred_region
    _
  $region21: #{pick_forward.6} parent=0 // pred_fallthru
    _

// kernel: pick_forward.7
$region0: #{pick_forward.7}
  #allocation0 [shape = 'u32[]', space=smem, size = 0x4, offset = 0x4, fixed_abs, tag = 'smem constant byte address 0x4 - core index']
  #allocation1 [shape = 'u32[72,128]{1,0:T(1,128)}', space=vmem, size = 0x9000, scoped, tag = 'internal scratch']
  #allocation2 [shape = 'f32[2,512]{1,0:T(2,128)}', space=vmem, size = 0x1000, scoped, tag = 'scratch operand']
  %s0 = inlined_call_operand.vmem [shape: bf16[2,4096], index: 0, kind: input, shape index: {}]
  %s1 = inlined_call_operand.vmem [shape: bf16[4096,512], index: 1, kind: input, shape index: {}]
  %s2 = inlined_call_operand.vmem [shape: f32[1,512], index: 2, kind: input, shape index: {}]
  %s3 = inlined_call_operand.vmem [shape: bf16[512,128], index: 3, kind: input, shape index: {}]
  %s4 = inlined_call_operand.vmem [shape: f32[1,128], index: 4, kind: input, shape index: {}]
  %s5 = inlined_call_operand.vmem [shape: bf16[128,32], index: 5, kind: input, shape index: {}]
  %s6 = inlined_call_operand.vmem [shape: f32[1,32], index: 6, kind: input, shape index: {}]
  %s7 = inlined_call_operand.vmem [shape: bf16[32,6], index: 7, kind: input, shape index: {}]
  %s8 = inlined_call_operand.vmem [shape: f32[1,6], index: 8, kind: input, shape index: {}]
  %s9 = inlined_call_operand.hbm [shape: f32[2,6], index: 9, kind: output, shape index: {}]
  %s10 = sld [smem:[#allocation0]]
  $region77: #{pick_forward.7} parent=0
    _
  %s12 = ssub.s32 1, %s10
  %s13 = scalar_select 0, %s12, %s10
  $region1: #{pick_forward.7} parent=0
    #allocation3 [shape = 'u8[1024]{0}', space=vmem, size = 0x400, scoped, tag = 'output window, operand 0, single buffered']
    #allocation4 [shape = 's32[2]{0}', space=sflag, size = 0x8, scoped, tag = 'scoped memory for pick_forward.7']
    %14 = vsyncpa [#allocation4], 0
    loop: start=0, step=1, limit=10
    $region2: #{pick_forward.7} parent=1 // loop_pre_header
      _
    $region3: #{pick_forward.7} parent=1 // loop_header
      %s16 = sphi 0, %s20
      %p17 = scmp.ge.s32.totalorder %s16, 10
      %s26 = sphi 0, %s28
      %s29 = sphi 0, %s26
      %s30 = sphi 0, %s29
      %s46 = sphi 0, %s30
      %s52 = sphi 0, %s54
      %s55 = sphi 0, %s52
      %s56 = sphi 0, %s55
      %s72 = sphi 0, %s56
      %s76 = sphi 0, %s76
      %s78 = sphi 0, %s76
      %s79 = sphi 0, %s78
      %s93 = sphi 0, %s79
      %s97 = sphi 0, %s97
      %s99 = sphi 0, %s97
      %s100 = sphi 0, %s99
      %s114 = sphi 0, %s100
      %s118 = sphi 0, %s118
      %s120 = sphi 0, %s118
      %s121 = sphi 0, %s120
      %s135 = sphi 0, %s121
      %s139 = sphi 0, %s139
      %s141 = sphi 0, %s139
      %s142 = sphi 0, %s141
      %s156 = sphi 0, %s142
      %s160 = sphi 0, %s160
      %s162 = sphi 0, %s160
      %s163 = sphi 0, %s162
      %s177 = sphi 0, %s163
      %s181 = sphi 0, %s181
      %s183 = sphi 0, %s181
      %s184 = sphi 0, %s183
      %s198 = sphi 0, %s184
      %s202 = sphi 0, %s202
      %s204 = sphi 0, %s202
      %s205 = sphi 0, %s204
      %s219 = sphi 0, %s205
      %s223 = sphi 0, %s223
      %s225 = sphi 0, %s223
      %s226 = sphi 0, %s225
      %s240 = sphi 0, %s226
    $region4: #{pick_forward.7} parent=1 // loop_header_branch
      %19 = sbr.rel (%p17) target = $region8
    $region5: #{pick_forward.7} parent=1 // loop_body
      %s21 = ssub.s32 %s16, 1
      %s22 = ssub.s32 %s16, 2
      %s23 = sadd.s32 %s16, 1
      %s24 = ssub.s32 %s16, %s23
      %p25 = scmp.eq.s32.totalorder %s24, 0
      %s27 = sadd.s32 %s26, 1
      %s28 = scalar_select %p25, %s26, %s27
      %p31 = pneg %p25
      %p32 = scmp.eq.s32.totalorder %s16, 7
      %p33 = por %p31, %p32
      %p34 = scmp.ne.s32.totalorder %s26, %s29
      %p35 = scmp.eq.s32.totalorder %s16, 0
      %p36 = por %p34, %p35
      %p37 = scmp.ne.s32.totalorder %s26, %s29
      %p38 = scmp.eq.s32.totalorder %s21, 7
      %p39 = por %p37, %p38
      %p40 = scmp.ne.s32.totalorder %s29, %s30
      %p41 = scmp.eq.s32.totalorder %s21, 0
      %p42 = por %p40, %p41
      %p43 = scmp.ne.s32.totalorder %s29, %s30
      %p44 = scmp.eq.s32.totalorder %s22, 7
      %p45 = por %p43, %p44
      %p47 = scmp.ne.s32.totalorder %s30, %s46
      %p48 = scmp.eq.s32.totalorder %s22, 0
      %p49 = por %p47, %p48
      %s50 = ssub.s32 %s16, %s23
      %p51 = scmp.eq.s32.totalorder %s50, 0
      %s53 = sadd.s32 %s52, 1
      %s54 = scalar_select %p51, %s52, %s53
      %p57 = pneg %p51
      %p58 = scmp.eq.s32.totalorder %s16, 7
      %p59 = por %p57, %p58
      %p60 = scmp.ne.s32.totalorder %s52, %s55
      %p61 = scmp.eq.s32.totalorder %s16, 0
      %p62 = por %p60, %p61
      %p63 = scmp.ne.s32.totalorder %s52, %s55
      %p64 = scmp.eq.s32.totalorder %s21, 7
      %p65 = por %p63, %p64
      %p66 = scmp.ne.s32.totalorder %s55, %s56
      %p67 = scmp.eq.s32.totalorder %s21, 0
      %p68 = por %p66, %p67
      %p69 = scmp.ne.s32.totalorder %s55, %s56
      %p70 = scmp.eq.s32.totalorder %s22, 7
      %p71 = por %p69, %p70
      %p73 = scmp.ne.s32.totalorder %s56, %s72
      %p74 = scmp.eq.s32.totalorder %s22, 0
      %p75 = por %p73, %p74
      %s77 = sadd.s32 %s76, 1
      %p80 = scmp.eq.s32.totalorder %s16, 7
      %p81 = scmp.ne.s32.totalorder %s76, %s78
      %p82 = scmp.eq.s32.totalorder %s16, 0
      %p83 = por %p81, %p82
      %p84 = scmp.ne.s32.totalorder %s76, %s78
      %p85 = scmp.eq.s32.totalorder %s21, 7
      %p86 = por %p84, %p85
      %p87 = scmp.ne.s32.totalorder %s78, %s79
      %p88 = scmp.eq.s32.totalorder %s21, 0
      %p89 = por %p87, %p88
      %p90 = scmp.ne.s32.totalorder %s78, %s79
      %p91 = scmp.eq.s32.totalorder %s22, 7
      %p92 = por %p90, %p91
      %p94 = scmp.ne.s32.totalorder %s79, %s93
      %p95 = scmp.eq.s32.totalorder %s22, 0
      %p96 = por %p94, %p95
      %s98 = sadd.s32 %s97, 1
      %p101 = scmp.eq.s32.totalorder %s16, 7
      %p102 = scmp.ne.s32.totalorder %s97, %s99
      %p103 = scmp.eq.s32.totalorder %s16, 0
      %p104 = por %p102, %p103
      %p105 = scmp.ne.s32.totalorder %s97, %s99
      %p106 = scmp.eq.s32.totalorder %s21, 7
      %p107 = por %p105, %p106
      %p108 = scmp.ne.s32.totalorder %s99, %s100
      %p109 = scmp.eq.s32.totalorder %s21, 0
      %p110 = por %p108, %p109
      %p111 = scmp.ne.s32.totalorder %s99, %s100
      %p112 = scmp.eq.s32.totalorder %s22, 7
      %p113 = por %p111, %p112
      %p115 = scmp.ne.s32.totalorder %s100, %s114
      %p116 = scmp.eq.s32.totalorder %s22, 0
      %p117 = por %p115, %p116
      %s119 = sadd.s32 %s118, 1
      %p122 = scmp.eq.s32.totalorder %s16, 7
      %p123 = scmp.ne.s32.totalorder %s118, %s120
      %p124 = scmp.eq.s32.totalorder %s16, 0
      %p125 = por %p123, %p124
      %p126 = scmp.ne.s32.totalorder %s118, %s120
      %p127 = scmp.eq.s32.totalorder %s21, 7
      %p128 = por %p126, %p127
      %p129 = scmp.ne.s32.totalorder %s120, %s121
      %p130 = scmp.eq.s32.totalorder %s21, 0
      %p131 = por %p129, %p130
      %p132 = scmp.ne.s32.totalorder %s120, %s121
      %p133 = scmp.eq.s32.totalorder %s22, 7
      %p134 = por %p132, %p133
      %p136 = scmp.ne.s32.totalorder %s121, %s135
      %p137 = scmp.eq.s32.totalorder %s22, 0
      %p138 = por %p136, %p137
      %s140 = sadd.s32 %s139, 1
      %p143 = scmp.eq.s32.totalorder %s16, 7
      %p144 = scmp.ne.s32.totalorder %s139, %s141
      %p145 = scmp.eq.s32.totalorder %s16, 0
      %p146 = por %p144, %p145
      %p147 = scmp.ne.s32.totalorder %s139, %s141
      %p148 = scmp.eq.s32.totalorder %s21, 7
      %p149 = por %p147, %p148
      %p150 = scmp.ne.s32.totalorder %s141, %s142
      %p151 = scmp.eq.s32.totalorder %s21, 0
      %p152 = por %p150, %p151
      %p153 = scmp.ne.s32.totalorder %s141, %s142
      %p154 = scmp.eq.s32.totalorder %s22, 7
      %p155 = por %p153, %p154
      %p157 = scmp.ne.s32.totalorder %s142, %s156
      %p158 = scmp.eq.s32.totalorder %s22, 0
      %p159 = por %p157, %p158
      %s161 = sadd.s32 %s160, 1
      %p164 = scmp.eq.s32.totalorder %s16, 7
      %p165 = scmp.ne.s32.totalorder %s160, %s162
      %p166 = scmp.eq.s32.totalorder %s16, 0
      %p167 = por %p165, %p166
      %p168 = scmp.ne.s32.totalorder %s160, %s162
      %p169 = scmp.eq.s32.totalorder %s21, 7
      %p170 = por %p168, %p169
      %p171 = scmp.ne.s32.totalorder %s162, %s163
      %p172 = scmp.eq.s32.totalorder %s21, 0
      %p173 = por %p171, %p172
      %p174 = scmp.ne.s32.totalorder %s162, %s163
      %p175 = scmp.eq.s32.totalorder %s22, 7
      %p176 = por %p174, %p175
      %p178 = scmp.ne.s32.totalorder %s163, %s177
      %p179 = scmp.eq.s32.totalorder %s22, 0
      %p180 = por %p178, %p179
      %s182 = sadd.s32 %s181, 1
      %p185 = scmp.eq.s32.totalorder %s16, 7
      %p186 = scmp.ne.s32.totalorder %s181, %s183
      %p187 = scmp.eq.s32.totalorder %s16, 0
      %p188 = por %p186, %p187
      %p189 = scmp.ne.s32.totalorder %s181, %s183
      %p190 = scmp.eq.s32.totalorder %s21, 7
      %p191 = por %p189, %p190
      %p192 = scmp.ne.s32.totalorder %s183, %s184
      %p193 = scmp.eq.s32.totalorder %s21, 0
      %p194 = por %p192, %p193
      %p195 = scmp.ne.s32.totalorder %s183, %s184
      %p196 = scmp.eq.s32.totalorder %s22, 7
      %p197 = por %p195, %p196
      %p199 = scmp.ne.s32.totalorder %s184, %s198
      %p200 = scmp.eq.s32.totalorder %s22, 0
      %p201 = por %p199, %p200
      %s203 = sadd.s32 %s202, 1
      %p206 = scmp.eq.s32.totalorder %s16, 7
      %p207 = scmp.ne.s32.totalorder %s202, %s204
      %p208 = scmp.eq.s32.totalorder %s16, 0
      %p209 = por %p207, %p208
      %p210 = scmp.ne.s32.totalorder %s202, %s204
      %p211 = scmp.eq.s32.totalorder %s21, 7
      %p212 = por %p210, %p211
      %p213 = scmp.ne.s32.totalorder %s204, %s205
      %p214 = scmp.eq.s32.totalorder %s21, 0
      %p215 = por %p213, %p214
      %p216 = scmp.ne.s32.totalorder %s204, %s205
      %p217 = scmp.eq.s32.totalorder %s22, 7
      %p218 = por %p216, %p217
      %p220 = scmp.ne.s32.totalorder %s205, %s219
      %p221 = scmp.eq.s32.totalorder %s22, 0
      %p222 = por %p220, %p221
      %s224 = sadd.s32 %s223, 1
      %p227 = scmp.eq.s32.totalorder %s16, 7
      %p228 = scmp.ne.s32.totalorder %s223, %s225
      %p229 = scmp.eq.s32.totalorder %s16, 0
      %p230 = por %p228, %p229
      %p231 = scmp.ne.s32.totalorder %s223, %s225
      %p232 = scmp.eq.s32.totalorder %s21, 7
      %p233 = por %p231, %p232
      %p234 = scmp.ne.s32.totalorder %s225, %s226
      %p235 = scmp.eq.s32.totalorder %s21, 0
      %p236 = por %p234, %p235
      %p237 = scmp.ne.s32.totalorder %s225, %s226
      %p238 = scmp.eq.s32.totalorder %s22, 7
      %p239 = por %p237, %p238
      %p241 = scmp.ne.s32.totalorder %s226, %s240
      %p242 = scmp.eq.s32.totalorder %s22, 0
      %p243 = por %p241, %p242
      %p244 = scmp.le.s32.totalorder 1, %s16
      %p245 = scmp.lt.s32.totalorder %s16, 9
      %p246 = pnand %p244, %p245
      %p247 = pneg %p246
      // Predicated region
      $region9: #{pick_forward.7} parent=5 // pred_check
        _
      $region10: #{pick_forward.7} parent=5 // pred_check_branch
        %249 = sbr.rel (%p246) target = $region12
      $region11: #{pick_forward.7} parent=5 // pred_region
        %s250 = ssub.s32 %s16, 1
        // Predicated region
        $region13: #{pick_forward.7} parent=11 // pred_check
          %p251 = pneg %p89
        $region14: #{pick_forward.7} parent=11 // pred_check_branch
          %253 = sbr.rel (%p251) target = $region16
        $region15: #{pick_forward.7} parent=11 // pred_region
          _
        $region16: #{pick_forward.7} parent=11 // pred_fallthru
          _
        // Predicated region
        $region17: #{pick_forward.7} parent=11 // pred_check
          %p254 = pneg %p110
        $region18: #{pick_forward.7} parent=11 // pred_check_branch
          %256 = sbr.rel (%p254) target = $region20
        $region19: #{pick_forward.7} parent=11 // pred_region
          _
        $region20: #{pick_forward.7} parent=11 // pred_fallthru
          _
        // Predicated region
        $region21: #{pick_forward.7} parent=11 // pred_check
          %p257 = pneg %p131
        $region22: #{pick_forward.7} parent=11 // pred_check_branch
          %259 = sbr.rel (%p257) target = $region24
        $region23: #{pick_forward.7} parent=11 // pred_region
          _
        $region24: #{pick_forward.7} parent=11 // pred_fallthru
          _
        // Predicated region
        $region25: #{pick_forward.7} parent=11 // pred_check
          %p260 = pneg %p152
        $region26: #{pick_forward.7} parent=11 // pred_check_branch
          %262 = sbr.rel (%p260) target = $region28
        $region27: #{pick_forward.7} parent=11 // pred_region
          _
        $region28: #{pick_forward.7} parent=11 // pred_fallthru
          _
        // Predicated region
        $region29: #{pick_forward.7} parent=11 // pred_check
          %p263 = pneg %p173
        $region30: #{pick_forward.7} parent=11 // pred_check_branch
          %265 = sbr.rel (%p263) target = $region32
        $region31: #{pick_forward.7} parent=11 // pred_region
          _
        $region32: #{pick_forward.7} parent=11 // pred_fallthru
          _
        // Predicated region
        $region33: #{pick_forward.7} parent=11 // pred_check
          %p266 = pneg %p194
        $region34: #{pick_forward.7} parent=11 // pred_check_branch
          %268 = sbr.rel (%p266) target = $region36
        $region35: #{pick_forward.7} parent=11 // pred_region
          _
        $region36: #{pick_forward.7} parent=11 // pred_fallthru
          _
        // Predicated region
        $region37: #{pick_forward.7} parent=11 // pred_check
          %p269 = pneg %p215
        $region38: #{pick_forward.7} parent=11 // pred_check_branch
          %271 = sbr.rel (%p269) target = $region40
        $region39: #{pick_forward.7} parent=11 // pred_region
          _
        $region40: #{pick_forward.7} parent=11 // pred_fallthru
          _
      $region12: #{pick_forward.7} parent=5 // pred_fallthru
        _
      %p272 = scmp.lt.s32.totalorder %s16, 8
      // Predicated region
      $region41: #{pick_forward.7} parent=5 // pred_check
        %p273 = pneg %p272
      $region42: #{pick_forward.7} parent=5 // pred_check_branch
        %275 = sbr.rel (%p273) target = $region44
      $region43: #{pick_forward.7} parent=5 // pred_region
        // Predicated region
        $region45: #{pick_forward.7} parent=43 // pred_check
          %p276 = pneg %p36
        $region46: #{pick_forward.7} parent=43 // pred_check_branch
          %278 = sbr.rel (%p276) target = $region48
        $region47: #{pick_forward.7} parent=43 // pred_region
          %s279 = smul.u32 4, %s16
          %p280 = scmp.lt.s32.totalorder %s279, 31
          %s281 = scalar_select %p280, %s279, 31
          %s282 = scalar_lea.vmem %s0, %s281
          %s283 = smul.u32 4, %s16
        $region48: #{pick_forward.7} parent=43 // pred_fallthru
          _
        // Predicated region
        $region49: #{pick_forward.7} parent=43 // pred_check
          %p284 = pneg %p62
        $region50: #{pick_forward.7} parent=43 // pred_check_branch
          %286 = sbr.rel (%p284) target = $region52
        $region51: #{pick_forward.7} parent=43 // pred_region
          %s287 = smul.u32 64, %s16
          %p288 = scmp.lt.s32.totalorder %s287, 511
          %s289 = scalar_select %p288, %s287, 511
          %s290 = smul.addr %s289, 4
          %s291 = smul.addr %s290, 4
          %s292 = scalar_lea.vmem %s1, %s291
          %s293 = smul.u32 64, %s16
        $region52: #{pick_forward.7} parent=43 // pred_fallthru
          _
      $region44: #{pick_forward.7} parent=5 // pred_fallthru
        _
      %p294 = scmp.le.s32.totalorder 1, %s16
      %p295 = scmp.lt.s32.totalorder %s16, 9
      %p296 = pnand %p294, %p295
      %p297 = pneg %p296
      // Predicated region
      $region53: #{pick_forward.7} parent=5 // pred_check
        _
      $region54: #{pick_forward.7} parent=5 // pred_check_branch
        %299 = sbr.rel (%p296) target = $region56
      $region55: #{pick_forward.7} parent=5 // pred_region
        %s300 = ssub.s32 %s16, 1
        %s301 = smul.u32 4, %s21
        %p302 = scmp.lt.s32.totalorder %s301, 31
        %s303 = scalar_select %p302, %s301, 31
        %s304 = scalar_lea.vmem %s0, %s303
        %p305 = pneg %p42
        %p306 = pneg %p39
        %s307 = smul.u32 64, %s21
        %p308 = scmp.lt.s32.totalorder %s307, 511
        %s309 = scalar_select %p308, %s307, 511
        %s310 = smul.addr %s309, 4
        %s311 = smul.addr %s310, 4
        %s312 = scalar_lea.vmem %s1, %s311
        %p313 = pneg %p68
        %p314 = pneg %p65
        %p315 = pneg %p89
        %p316 = pneg %p86
        %p317 = pneg %p110
        %p318 = pneg %p107
        %p319 = pneg %p131
        %p320 = pneg %p128
        %p321 = pneg %p152
        %p322 = pneg %p149
        %p323 = pneg %p173
        %p324 = pneg %p170
        %p325 = pneg %p194
        %p326 = pneg %p191
        %p327 = pneg %p215
        %p328 = pneg %p212
        %p329 = pneg %p236
        %p330 = pneg %p233
        %s331 = smul.u32 4, %s21
        %p332 = scmp.lt.s32.totalorder %s331, 31
        %s333 = scalar_select %p332, %s331, 31
        %s334 = scalar_lea.vmem %s0, %s333
        %s335 = smul.u32 4, %s21
        %s336 = smul.u32 64, %s21
        %p337 = scmp.lt.s32.totalorder %s336, 511
        %s338 = scalar_select %p337, %s336, 511
        %s339 = smul.addr %s338, 4
        %s340 = smul.addr %s339, 4
        %s341 = scalar_lea.vmem %s1, %s340
        %s342 = smul.u32 64, %s21
        %p344 = scmp.eq.s32.totalorder %s21, 0
        // Predicated region
        $region57: #{pick_forward.7} parent=55 // pred_check
          %p345 = pneg %p344
        $region58: #{pick_forward.7} parent=55 // pred_check_branch
          %347 = sbr.rel (%p345) target = $region60
        $region59: #{pick_forward.7} parent=55 // pred_region
          %348 = vst [vmem:[#allocation2] sm:$0xff] 0.0
        $region60: #{pick_forward.7} parent=55 // pred_fallthru
          _
        %v349 = vld [vmem:[#allocation2] sm:$0xff]
        %v350 = vld [vmem:[%s334] sm:$0xf]
        %v351 = vld [vmem:[%s341] sm:$0xff]
        %v352 = vld [vmem:[%s341 + $0x8] sm:$0xff]
        %v353 = vld [vmem:[%s341 + $0x10] sm:$0xff]
        %v354 = vld [vmem:[%s341 + $0x18] sm:$0xff]
        %v355 = vld [vmem:[%s341 + $0x20] sm:$0xff]
        %v356 = vld [vmem:[%s341 + $0x28] sm:$0xff]
        %v357 = vld [vmem:[%s341 + $0x30] sm:$0xff]
        %v358 = vld [vmem:[%s341 + $0x38] sm:$0xff]
        %v359 = vld [vmem:[%s341 + $0x40] sm:$0xff]
        %v360 = vld [vmem:[%s341 + $0x48] sm:$0xff]
        %v361 = vld [vmem:[%s341 + $0x50] sm:$0xff]
        %v362 = vld [vmem:[%s341 + $0x58] sm:$0xff]
        %v363 = vld [vmem:[%s341 + $0x60] sm:$0xff]
        %v364 = vld [vmem:[%s341 + $0x68] sm:$0xff]
        %v365 = vld [vmem:[%s341 + $0x70] sm:$0xff]
        %v366 = vld [vmem:[%s341 + $0x78] sm:$0xff]
        %v367 = vld [vmem:[%s341 + $0x80] sm:$0xff]
        %v368 = vld [vmem:[%s341 + $0x88] sm:$0xff]
        %v369 = vld [vmem:[%s341 + $0x90] sm:$0xff]
        %v370 = vld [vmem:[%s341 + $0x98] sm:$0xff]
        %v371 = vld [vmem:[%s341 + $0xa0] sm:$0xff]
        %v372 = vld [vmem:[%s341 + $0xa8] sm:$0xff]
        %v373 = vld [vmem:[%s341 + $0xb0] sm:$0xff]
        %v374 = vld [vmem:[%s341 + $0xb8] sm:$0xff]
        %v375 = vld [vmem:[%s341 + $0xc0] sm:$0xff]
        %v376 = vld [vmem:[%s341 + $0xc8] sm:$0xff]
        %v377 = vld [vmem:[%s341 + $0xd0] sm:$0xff]
        %v378 = vld [vmem:[%s341 + $0xd8] sm:$0xff]
        %v379 = vld [vmem:[%s341 + $0xe0] sm:$0xff]
        %v380 = vld [vmem:[%s341 + $0xe8] sm:$0xff]
        %v381 = vld [vmem:[%s341 + $0xf0] sm:$0xff]
        %v382 = vld [vmem:[%s341 + $0xf8] sm:$0xff]
        %v383 = vld [vmem:[%s341 + $0x100] sm:$0xff]
        %v384 = vld [vmem:[%s341 + $0x108] sm:$0xff]
        %v385 = vld [vmem:[%s341 + $0x110] sm:$0xff]
        %v386 = vld [vmem:[%s341 + $0x118] sm:$0xff]
        %v387 = vld [vmem:[%s341 + $0x120] sm:$0xff]
        %v388 = vld [vmem:[%s341 + $0x128] sm:$0xff]
        %v389 = vld [vmem:[%s341 + $0x130] sm:$0xff]
        %v390 = vld [vmem:[%s341 + $0x138] sm:$0xff]
        %v391 = vld [vmem:[%s341 + $0x140] sm:$0xff]
        %v392 = vld [vmem:[%s341 + $0x148] sm:$0xff]
        %v393 = vld [vmem:[%s341 + $0x150] sm:$0xff]
        %v394 = vld [vmem:[%s341 + $0x158] sm:$0xff]
        %v395 = vld [vmem:[%s341 + $0x160] sm:$0xff]
        %v396 = vld [vmem:[%s341 + $0x168] sm:$0xff]
        %v397 = vld [vmem:[%s341 + $0x170] sm:$0xff]
        %v398 = vld [vmem:[%s341 + $0x178] sm:$0xff]
        %v399 = vld [vmem:[%s341 + $0x180] sm:$0xff]
        %v400 = vld [vmem:[%s341 + $0x188] sm:$0xff]
        %v401 = vld [vmem:[%s341 + $0x190] sm:$0xff]
        %v402 = vld [vmem:[%s341 + $0x198] sm:$0xff]
        %v403 = vld [vmem:[%s341 + $0x1a0] sm:$0xff]
        %v404 = vld [vmem:[%s341 + $0x1a8] sm:$0xff]
        %v405 = vld [vmem:[%s341 + $0x1b0] sm:$0xff]
        %v406 = vld [vmem:[%s341 + $0x1b8] sm:$0xff]
        %v407 = vld [vmem:[%s341 + $0x1c0] sm:$0xff]
        %v408 = vld [vmem:[%s341 + $0x1c8] sm:$0xff]
        %v409 = vld [vmem:[%s341 + $0x1d0] sm:$0xff]
        %v410 = vld [vmem:[%s341 + $0x1d8] sm:$0xff]
        %v411 = vld [vmem:[%s341 + $0x1e0] sm:$0xff]
        %v412 = vld [vmem:[%s341 + $0x1e8] sm:$0xff]
        %v413 = vld [vmem:[%s341 + $0x1f0] sm:$0xff]
        %v414 = vld [vmem:[%s341 + $0x1f8] sm:$0xff]
        %v415 = vld [vmem:[%s341 + $0x200] sm:$0xff]
        %v416 = vld [vmem:[%s341 + $0x208] sm:$0xff]
        %v417 = vld [vmem:[%s341 + $0x210] sm:$0xff]
        %v418 = vld [vmem:[%s341 + $0x218] sm:$0xff]
        %v419 = vld [vmem:[%s341 + $0x220] sm:$0xff]
        %v420 = vld [vmem:[%s341 + $0x228] sm:$0xff]
        %v421 = vld [vmem:[%s341 + $0x230] sm:$0xff]
        %v422 = vld [vmem:[%s341 + $0x238] sm:$0xff]
        %v423 = vld [vmem:[%s341 + $0x240] sm:$0xff]
        %v424 = vld [vmem:[%s341 + $0x248] sm:$0xff]
        %v425 = vld [vmem:[%s341 + $0x250] sm:$0xff]
        %v426 = vld [vmem:[%s341 + $0x258] sm:$0xff]
        %v427 = vld [vmem:[%s341 + $0x260] sm:$0xff]
        %v428 = vld [vmem:[%s341 + $0x268] sm:$0xff]
        %v429 = vld [vmem:[%s341 + $0x270] sm:$0xff]
        %v430 = vld [vmem:[%s341 + $0x278] sm:$0xff]
        %v431 = vld [vmem:[%s341 + $0x280] sm:$0xff]
        %v432 = vld [vmem:[%s341 + $0x288] sm:$0xff]
        %v433 = vld [vmem:[%s341 + $0x290] sm:$0xff]
        %v434 = vld [vmem:[%s341 + $0x298] sm:$0xff]
        %v435 = vld [vmem:[%s341 + $0x2a0] sm:$0xff]
        %v436 = vld [vmem:[%s341 + $0x2a8] sm:$0xff]
        %v437 = vld [vmem:[%s341 + $0x2b0] sm:$0xff]
        %v438 = vld [vmem:[%s341 + $0x2b8] sm:$0xff]
        %v439 = vld [vmem:[%s341 + $0x2c0] sm:$0xff]
        %v440 = vld [vmem:[%s341 + $0x2c8] sm:$0xff]
        %v441 = vld [vmem:[%s341 + $0x2d0] sm:$0xff]
        %v442 = vld [vmem:[%s341 + $0x2d8] sm:$0xff]
        %v443 = vld [vmem:[%s341 + $0x2e0] sm:$0xff]
        %v444 = vld [vmem:[%s341 + $0x2e8] sm:$0xff]
        %v445 = vld [vmem:[%s341 + $0x2f0] sm:$0xff]
        %v446 = vld [vmem:[%s341 + $0x2f8] sm:$0xff]
        %v447 = vld [vmem:[%s341 + $0x300] sm:$0xff]
        %v448 = vld [vmem:[%s341 + $0x308] sm:$0xff]
        %v449 = vld [vmem:[%s341 + $0x310] sm:$0xff]
        %v450 = vld [vmem:[%s341 + $0x318] sm:$0xff]
        %v451 = vld [vmem:[%s341 + $0x320] sm:$0xff]
        %v452 = vld [vmem:[%s341 + $0x328] sm:$0xff]
        %v453 = vld [vmem:[%s341 + $0x330] sm:$0xff]
        %v454 = vld [vmem:[%s341 + $0x338] sm:$0xff]
        %v455 = vld [vmem:[%s341 + $0x340] sm:$0xff]
        %v456 = vld [vmem:[%s341 + $0x348] sm:$0xff]
        %v457 = vld [vmem:[%s341 + $0x350] sm:$0xff]
        %v458 = vld [vmem:[%s341 + $0x358] sm:$0xff]
        %v459 = vld [vmem:[%s341 + $0x360] sm:$0xff]
        %v460 = vld [vmem:[%s341 + $0x368] sm:$0xff]
        %v461 = vld [vmem:[%s341 + $0x370] sm:$0xff]
        %v462 = vld [vmem:[%s341 + $0x378] sm:$0xff]
        %v463 = vld [vmem:[%s341 + $0x380] sm:$0xff]
        %v464 = vld [vmem:[%s341 + $0x388] sm:$0xff]
        %v465 = vld [vmem:[%s341 + $0x390] sm:$0xff]
        %v466 = vld [vmem:[%s341 + $0x398] sm:$0xff]
        %v467 = vld [vmem:[%s341 + $0x3a0] sm:$0xff]
        %v468 = vld [vmem:[%s341 + $0x3a8] sm:$0xff]
        %v469 = vld [vmem:[%s341 + $0x3b0] sm:$0xff]
        %v470 = vld [vmem:[%s341 + $0x3b8] sm:$0xff]
        %v471 = vld [vmem:[%s341 + $0x3c0] sm:$0xff]
        %v472 = vld [vmem:[%s341 + $0x3c8] sm:$0xff]
        %v473 = vld [vmem:[%s341 + $0x3d0] sm:$0xff]
        %v474 = vld [vmem:[%s341 + $0x3d8] sm:$0xff]
        %v475 = vld [vmem:[%s341 + $0x3e0] sm:$0xff]
        %v476 = vld [vmem:[%s341 + $0x3e8] sm:$0xff]
        %v477 = vld [vmem:[%s341 + $0x3f0] sm:$0xff]
        %v478 = vld [vmem:[%s341 + $0x3f8] sm:$0xff]
        %480 = vst [vmem:[#allocation1] ss:$9 sm:$0xff] %v350
        %v481 = vld [vmem:[#allocation1] sm:$0xff]
        %v482 = vld [vmem:[#allocation1 + $0x9] sm:$0xff]
        %v483 = vld [vmem:[#allocation1 + $0x12] sm:$0xff]
        %v484 = vld [vmem:[#allocation1 + $0x1b] sm:$0xff]
        %v617 = vunpack.c.l.b16 %v351
        %v618 = vunpack.c.h.b16 %v351
        %v619 = vunpack.c.l.b16 %v352
        %v620 = vunpack.c.h.b16 %v352
        %v621 = vunpack.c.l.b16 %v353
        %v622 = vunpack.c.h.b16 %v353
        %v623 = vunpack.c.l.b16 %v354
        %v624 = vunpack.c.h.b16 %v354
        %v625 = vunpack.c.l.b16 %v355
        %v626 = vunpack.c.h.b16 %v355
        %v627 = vunpack.c.l.b16 %v356
        %v628 = vunpack.c.h.b16 %v356
        %v629 = vunpack.c.l.b16 %v357
        %v630 = vunpack.c.h.b16 %v357
        %v631 = vunpack.c.l.b16 %v358
        %v632 = vunpack.c.h.b16 %v358
        %v633 = vunpack.c.l.b16 %v359
        %v634 = vunpack.c.h.b16 %v359
        %v635 = vunpack.c.l.b16 %v360
        %v636 = vunpack.c.h.b16 %v360
        %v637 = vunpack.c.l.b16 %v361
        %v638 = vunpack.c.h.b16 %v361
        %v639 = vunpack.c.l.b16 %v362
        %v640 = vunpack.c.h.b16 %v362
        %v641 = vunpack.c.l.b16 %v363
        %v642 = vunpack.c.h.b16 %v363
        %v643 = vunpack.c.l.b16 %v364
        %v644 = vunpack.c.h.b16 %v364
        %v645 = vunpack.c.l.b16 %v365
        %v646 = vunpack.c.h.b16 %v365
        %v647 = vunpack.c.l.b16 %v366
        %v648 = vunpack.c.h.b16 %v366
        %v649 = vunpack.c.l.b16 %v367
        %v650 = vunpack.c.h.b16 %v367
        %v651 = vunpack.c.l.b16 %v368
        %v652 = vunpack.c.h.b16 %v368
        %v653 = vunpack.c.l.b16 %v369
        %v654 = vunpack.c.h.b16 %v369
        %v655 = vunpack.c.l.b16 %v370
        %v656 = vunpack.c.h.b16 %v370
        %v657 = vunpack.c.l.b16 %v371
        %v658 = vunpack.c.h.b16 %v371
        %v659 = vunpack.c.l.b16 %v372
        %v660 = vunpack.c.h.b16 %v372
        %v661 = vunpack.c.l.b16 %v373
        %v662 = vunpack.c.h.b16 %v373
        %v663 = vunpack.c.l.b16 %v374
        %v664 = vunpack.c.h.b16 %v374
        %v665 = vunpack.c.l.b16 %v375
        %v666 = vunpack.c.h.b16 %v375
        %v667 = vunpack.c.l.b16 %v376
        %v668 = vunpack.c.h.b16 %v376
        %v669 = vunpack.c.l.b16 %v377
        %v670 = vunpack.c.h.b16 %v377
        %v671 = vunpack.c.l.b16 %v378
        %v672 = vunpack.c.h.b16 %v378
        %v673 = vunpack.c.l.b16 %v379
        %v674 = vunpack.c.h.b16 %v379
        %v675 = vunpack.c.l.b16 %v380
        %v676 = vunpack.c.h.b16 %v380
        %v677 = vunpack.c.l.b16 %v381
        %v678 = vunpack.c.h.b16 %v381
        %v679 = vunpack.c.l.b16 %v382
        %v680 = vunpack.c.h.b16 %v382
        %v681 = vunpack.c.l.b16 %v383
        %v682 = vunpack.c.h.b16 %v383
        %v683 = vunpack.c.l.b16 %v384
        %v684 = vunpack.c.h.b16 %v384
        %v685 = vunpack.c.l.b16 %v385
        %v686 = vunpack.c.h.b16 %v385
        %v687 = vunpack.c.l.b16 %v386
        %v688 = vunpack.c.h.b16 %v386
        %v689 = vunpack.c.l.b16 %v387
        %v690 = vunpack.c.h.b16 %v387
        %v691 = vunpack.c.l.b16 %v388
        %v692 = vunpack.c.h.b16 %v388
        %v693 = vunpack.c.l.b16 %v389
        %v694 = vunpack.c.h.b16 %v389
        %v695 = vunpack.c.l.b16 %v390
        %v696 = vunpack.c.h.b16 %v390
        %v697 = vunpack.c.l.b16 %v391
        %v698 = vunpack.c.h.b16 %v391
        %v699 = vunpack.c.l.b16 %v392
        %v700 = vunpack.c.h.b16 %v392
        %v701 = vunpack.c.l.b16 %v393
        %v702 = vunpack.c.h.b16 %v393
        %v703 = vunpack.c.l.b16 %v394
        %v704 = vunpack.c.h.b16 %v394
        %v705 = vunpack.c.l.b16 %v395
        %v706 = vunpack.c.h.b16 %v395
        %v707 = vunpack.c.l.b16 %v396
        %v708 = vunpack.c.h.b16 %v396
        %v709 = vunpack.c.l.b16 %v397
        %v710 = vunpack.c.h.b16 %v397
        %v711 = vunpack.c.l.b16 %v398
        %v712 = vunpack.c.h.b16 %v398
        %v713 = vunpack.c.l.b16 %v399
        %v714 = vunpack.c.h.b16 %v399
        %v715 = vunpack.c.l.b16 %v400
        %v716 = vunpack.c.h.b16 %v400
        %v717 = vunpack.c.l.b16 %v401
        %v718 = vunpack.c.h.b16 %v401
        %v719 = vunpack.c.l.b16 %v402
        %v720 = vunpack.c.h.b16 %v402
        %v721 = vunpack.c.l.b16 %v403
        %v722 = vunpack.c.h.b16 %v403
        %v723 = vunpack.c.l.b16 %v404
        %v724 = vunpack.c.h.b16 %v404
        %v725 = vunpack.c.l.b16 %v405
        %v726 = vunpack.c.h.b16 %v405
        %v727 = vunpack.c.l.b16 %v406
        %v728 = vunpack.c.h.b16 %v406
        %v729 = vunpack.c.l.b16 %v407
        %v730 = vunpack.c.h.b16 %v407
        %v731 = vunpack.c.l.b16 %v408
        %v732 = vunpack.c.h.b16 %v408
        %v733 = vunpack.c.l.b16 %v409
        %v734 = vunpack.c.h.b16 %v409
        %v735 = vunpack.c.l.b16 %v410
        %v736 = vunpack.c.h.b16 %v410
        %v737 = vunpack.c.l.b16 %v411
        %v738 = vunpack.c.h.b16 %v411
        %v739 = vunpack.c.l.b16 %v412
        %v740 = vunpack.c.h.b16 %v412
        %v741 = vunpack.c.l.b16 %v413
        %v742 = vunpack.c.h.b16 %v413
        %v743 = vunpack.c.l.b16 %v414
        %v744 = vunpack.c.h.b16 %v414
        %v745 = vunpack.c.l.b16 %v415
        %v746 = vunpack.c.h.b16 %v415
        %v747 = vunpack.c.l.b16 %v416
        %v748 = vunpack.c.h.b16 %v416
        %v749 = vunpack.c.l.b16 %v417
        %v750 = vunpack.c.h.b16 %v417
        %v751 = vunpack.c.l.b16 %v418
        %v752 = vunpack.c.h.b16 %v418
        %v753 = vunpack.c.l.b16 %v419
        %v754 = vunpack.c.h.b16 %v419
        %v755 = vunpack.c.l.b16 %v420
        %v756 = vunpack.c.h.b16 %v420
        %v757 = vunpack.c.l.b16 %v421
        %v758 = vunpack.c.h.b16 %v421
        %v759 = vunpack.c.l.b16 %v422
        %v760 = vunpack.c.h.b16 %v422
        %v761 = vunpack.c.l.b16 %v423
        %v762 = vunpack.c.h.b16 %v423
        %v763 = vunpack.c.l.b16 %v424
        %v764 = vunpack.c.h.b16 %v424
        %v765 = vunpack.c.l.b16 %v425
        %v766 = vunpack.c.h.b16 %v425
        %v767 = vunpack.c.l.b16 %v426
        %v768 = vunpack.c.h.b16 %v426
        %v769 = vunpack.c.l.b16 %v427
        %v770 = vunpack.c.h.b16 %v427
        %v771 = vunpack.c.l.b16 %v428
        %v772 = vunpack.c.h.b16 %v428
        %v773 = vunpack.c.l.b16 %v429
        %v774 = vunpack.c.h.b16 %v429
        %v775 = vunpack.c.l.b16 %v430
        %v776 = vunpack.c.h.b16 %v430
        %v777 = vunpack.c.l.b16 %v431
        %v778 = vunpack.c.h.b16 %v431
        %v779 = vunpack.c.l.b16 %v432
        %v780 = vunpack.c.h.b16 %v432
        %v781 = vunpack.c.l.b16 %v433
        %v782 = vunpack.c.h.b16 %v433
        %v783 = vunpack.c.l.b16 %v434
        %v784 = vunpack.c.h.b16 %v434
        %v785 = vunpack.c.l.b16 %v435
        %v786 = vunpack.c.h.b16 %v435
        %v787 = vunpack.c.l.b16 %v436
        %v788 = vunpack.c.h.b16 %v436
        %v789 = vunpack.c.l.b16 %v437
        %v790 = vunpack.c.h.b16 %v437
        %v791 = vunpack.c.l.b16 %v438
        %v792 = vunpack.c.h.b16 %v438
        %v793 = vunpack.c.l.b16 %v439
        %v794 = vunpack.c.h.b16 %v439
        %v795 = vunpack.c.l.b16 %v440
        %v796 = vunpack.c.h.b16 %v440
        %v797 = vunpack.c.l.b16 %v441
        %v798 = vunpack.c.h.b16 %v441
        %v799 = vunpack.c.l.b16 %v442
        %v800 = vunpack.c.h.b16 %v442
        %v801 = vunpack.c.l.b16 %v443
        %v802 = vunpack.c.h.b16 %v443
        %v803 = vunpack.c.l.b16 %v444
        %v804 = vunpack.c.h.b16 %v444
        %v805 = vunpack.c.l.b16 %v445
        %v806 = vunpack.c.h.b16 %v445
        %v807 = vunpack.c.l.b16 %v446
        %v808 = vunpack.c.h.b16 %v446
        %v809 = vunpack.c.l.b16 %v447
        %v810 = vunpack.c.h.b16 %v447
        %v811 = vunpack.c.l.b16 %v448
        %v812 = vunpack.c.h.b16 %v448
        %v813 = vunpack.c.l.b16 %v449
        %v814 = vunpack.c.h.b16 %v449
        %v815 = vunpack.c.l.b16 %v450
        %v816 = vunpack.c.h.b16 %v450
        %v817 = vunpack.c.l.b16 %v451
        %v818 = vunpack.c.h.b16 %v451
        %v819 = vunpack.c.l.b16 %v452
        %v820 = vunpack.c.h.b16 %v452
        %v821 = vunpack.c.l.b16 %v453
        %v822 = vunpack.c.h.b16 %v453
        %v823 = vunpack.c.l.b16 %v454
        %v824 = vunpack.c.h.b16 %v454
        %v825 = vunpack.c.l.b16 %v455
        %v826 = vunpack.c.h.b16 %v455
        %v827 = vunpack.c.l.b16 %v456
        %v828 = vunpack.c.h.b16 %v456
        %v829 = vunpack.c.l.b16 %v457
        %v830 = vunpack.c.h.b16 %v457
        %v831 = vunpack.c.l.b16 %v458
        %v832 = vunpack.c.h.b16 %v458
        %v833 = vunpack.c.l.b16 %v459
        %v834 = vunpack.c.h.b16 %v459
        %v835 = vunpack.c.l.b16 %v460
        %v836 = vunpack.c.h.b16 %v460
        %v837 = vunpack.c.l.b16 %v461
        %v838 = vunpack.c.h.b16 %v461
        %v839 = vunpack.c.l.b16 %v462
        %v840 = vunpack.c.h.b16 %v462
        %v841 = vunpack.c.l.b16 %v463
        %v842 = vunpack.c.h.b16 %v463
        %v843 = vunpack.c.l.b16 %v464
        %v844 = vunpack.c.h.b16 %v464
        %v845 = vunpack.c.l.b16 %v465
        %v846 = vunpack.c.h.b16 %v465
        %v847 = vunpack.c.l.b16 %v466
        %v848 = vunpack.c.h.b16 %v466
        %v849 = vunpack.c.l.b16 %v467
        %v850 = vunpack.c.h.b16 %v467
        %v851 = vunpack.c.l.b16 %v468
        %v852 = vunpack.c.h.b16 %v468
        %v853 = vunpack.c.l.b16 %v469
        %v854 = vunpack.c.h.b16 %v469
        %v855 = vunpack.c.l.b16 %v470
        %v856 = vunpack.c.h.b16 %v470
        %v857 = vunpack.c.l.b16 %v471
        %v858 = vunpack.c.h.b16 %v471
        %v859 = vunpack.c.l.b16 %v472
        %v860 = vunpack.c.h.b16 %v472
        %v861 = vunpack.c.l.b16 %v473
        %v862 = vunpack.c.h.b16 %v473
        %v863 = vunpack.c.l.b16 %v474
        %v864 = vunpack.c.h.b16 %v474
        %v865 = vunpack.c.l.b16 %v475
        %v866 = vunpack.c.h.b16 %v475
        %v867 = vunpack.c.l.b16 %v476
        %v868 = vunpack.c.h.b16 %v476
        %v869 = vunpack.c.l.b16 %v477
        %v870 = vunpack.c.h.b16 %v477
        %v871 = vunpack.c.l.b16 %v478
        %v872 = vunpack.c.h.b16 %v478
        %v873 = vpack.c.b16 %v621, %v617
        %v874 = vpack.c.b16 %v622, %v618
        %v875 = vpack.c.b16 %v623, %v619
        %v876 = vpack.c.b16 %v624, %v620
        %v877 = vpack.c.b16 %v629, %v625
        %v878 = vpack.c.b16 %v630, %v626
        %v879 = vpack.c.b16 %v631, %v627
        %v880 = vpack.c.b16 %v632, %v628
        %v881 = vpack.c.b16 %v637, %v633
        %v882 = vpack.c.b16 %v638, %v634
        %v883 = vpack.c.b16 %v639, %v635
        %v884 = vpack.c.b16 %v640, %v636
        %v885 = vpack.c.b16 %v645, %v641
        %v886 = vpack.c.b16 %v646, %v642
        %v887 = vpack.c.b16 %v647, %v643
        %v888 = vpack.c.b16 %v648, %v644
        %v889 = vpack.c.b16 %v653, %v649
        %v890 = vpack.c.b16 %v654, %v650
        %v891 = vpack.c.b16 %v655, %v651
        %v892 = vpack.c.b16 %v656, %v652
        %v893 = vpack.c.b16 %v661, %v657
        %v894 = vpack.c.b16 %v662, %v658
        %v895 = vpack.c.b16 %v663, %v659
        %v896 = vpack.c.b16 %v664, %v660
        %v897 = vpack.c.b16 %v669, %v665
        %v898 = vpack.c.b16 %v670, %v666
        %v899 = vpack.c.b16 %v671, %v667
        %v900 = vpack.c.b16 %v672, %v668
        %v901 = vpack.c.b16 %v677, %v673
        %v902 = vpack.c.b16 %v678, %v674
        %v903 = vpack.c.b16 %v679, %v675
        %v904 = vpack.c.b16 %v680, %v676
        %v905 = vpack.c.b16 %v685, %v681
        %v906 = vpack.c.b16 %v686, %v682
        %v907 = vpack.c.b16 %v687, %v683
        %v908 = vpack.c.b16 %v688, %v684
        %v909 = vpack.c.b16 %v693, %v689
        %v910 = vpack.c.b16 %v694, %v690
        %v911 = vpack.c.b16 %v695, %v691
        %v912 = vpack.c.b16 %v696, %v692
        %v913 = vpack.c.b16 %v701, %v697
        %v914 = vpack.c.b16 %v702, %v698
        %v915 = vpack.c.b16 %v703, %v699
        %v916 = vpack.c.b16 %v704, %v700
        %v917 = vpack.c.b16 %v709, %v705
        %v918 = vpack.c.b16 %v710, %v706
        %v919 = vpack.c.b16 %v711, %v707
        %v920 = vpack.c.b16 %v712, %v708
        %v921 = vpack.c.b16 %v717, %v713
        %v922 = vpack.c.b16 %v718, %v714
        %v923 = vpack.c.b16 %v719, %v715
        %v924 = vpack.c.b16 %v720, %v716
        %v925 = vpack.c.b16 %v725, %v721
        %v926 = vpack.c.b16 %v726, %v722
        %v927 = vpack.c.b16 %v727, %v723
        %v928 = vpack.c.b16 %v728, %v724
        %v929 = vpack.c.b16 %v733, %v729
        %v930 = vpack.c.b16 %v734, %v730
        %v931 = vpack.c.b16 %v735, %v731
        %v932 = vpack.c.b16 %v736, %v732
        %v933 = vpack.c.b16 %v741, %v737
        %v934 = vpack.c.b16 %v742, %v738
        %v935 = vpack.c.b16 %v743, %v739
        %v936 = vpack.c.b16 %v744, %v740
        %v937 = vpack.c.b16 %v749, %v745
        %v938 = vpack.c.b16 %v750, %v746
        %v939 = vpack.c.b16 %v751, %v747
        %v940 = vpack.c.b16 %v752, %v748
        %v941 = vpack.c.b16 %v757, %v753
        %v942 = vpack.c.b16 %v758, %v754
        %v943 = vpack.c.b16 %v759, %v755
        %v944 = vpack.c.b16 %v760, %v756
        %v945 = vpack.c.b16 %v765, %v761
        %v946 = vpack.c.b16 %v766, %v762
        %v947 = vpack.c.b16 %v767, %v763
        %v948 = vpack.c.b16 %v768, %v764
        %v949 = vpack.c.b16 %v773, %v769
        %v950 = vpack.c.b16 %v774, %v770
        %v951 = vpack.c.b16 %v775, %v771
        %v952 = vpack.c.b16 %v776, %v772
        %v953 = vpack.c.b16 %v781, %v777
        %v954 = vpack.c.b16 %v782, %v778
        %v955 = vpack.c.b16 %v783, %v779
        %v956 = vpack.c.b16 %v784, %v780
        %v957 = vpack.c.b16 %v789, %v785
        %v958 = vpack.c.b16 %v790, %v786
        %v959 = vpack.c.b16 %v791, %v787
        %v960 = vpack.c.b16 %v792, %v788
        %v961 = vpack.c.b16 %v797, %v793
        %v962 = vpack.c.b16 %v798, %v794
        %v963 = vpack.c.b16 %v799, %v795
        %v964 = vpack.c.b16 %v800, %v796
        %v965 = vpack.c.b16 %v805, %v801
        %v966 = vpack.c.b16 %v806, %v802
        %v967 = vpack.c.b16 %v807, %v803
        %v968 = vpack.c.b16 %v808, %v804
        %v969 = vpack.c.b16 %v813, %v809
        %v970 = vpack.c.b16 %v814, %v810
        %v971 = vpack.c.b16 %v815, %v811
        %v972 = vpack.c.b16 %v816, %v812
        %v973 = vpack.c.b16 %v821, %v817
        %v974 = vpack.c.b16 %v822, %v818
        %v975 = vpack.c.b16 %v823, %v819
        %v976 = vpack.c.b16 %v824, %v820
        %v977 = vpack.c.b16 %v829, %v825
        %v978 = vpack.c.b16 %v830, %v826
        %v979 = vpack.c.b16 %v831, %v827
        %v980 = vpack.c.b16 %v832, %v828
        %v981 = vpack.c.b16 %v837, %v833
        %v982 = vpack.c.b16 %v838, %v834
        %v983 = vpack.c.b16 %v839, %v835
        %v984 = vpack.c.b16 %v840, %v836
        %v985 = vpack.c.b16 %v845, %v841
        %v986 = vpack.c.b16 %v846, %v842
        %v987 = vpack.c.b16 %v847, %v843
        %v988 = vpack.c.b16 %v848, %v844
        %v989 = vpack.c.b16 %v853, %v849
        %v990 = vpack.c.b16 %v854, %v850
        %v991 = vpack.c.b16 %v855, %v851
        %v992 = vpack.c.b16 %v856, %v852
        %v993 = vpack.c.b16 %v861, %v857
        %v994 = vpack.c.b16 %v862, %v858
        %v995 = vpack.c.b16 %v863, %v859
        %v996 = vpack.c.b16 %v864, %v860
        %v997 = vpack.c.b16 %v869, %v865
        %v998 = vpack.c.b16 %v870, %v866
        %v999 = vpack.c.b16 %v871, %v867
        %v1000 = vpack.c.b16 %v872, %v868
        %1129 = vmatpush.bf16.msra.mxu0 %v901
        %1130 = vmatpush.bf16.msra.mxu0 %v897
        %1131 = vmatpush.bf16.msra.mxu0 %v893
        %1132 = vmatpush.bf16.msra.mxu0 %v889
        %1133 = vmatpush.bf16.msra.mxu0 %v885
        %1134 = vmatpush.bf16.msra.mxu0 %v881
        %1135 = vmatpush.bf16.msra.mxu0 %v877
        %1136 = vmatpush.bf16.msra.mxu0 %v873
        %1137 = vmatmul.bf16.gmra.mxu0 %v481
        %v1138 = vpop.f32.mrf.mxu0
        %v1139 = vadd.f32 0.0, %v1138
        %v1140 = vpop.f32.mrf.mxu0
        %1141 = vdwg.mxu0
        %1142 = vmatpush.bf16.msra.mxu0 %v933
        %1143 = vmatpush.bf16.msra.mxu0 %v929
        %1144 = vmatpush.bf16.msra.mxu0 %v925
        %1145 = vmatpush.bf16.msra.mxu0 %v921
        %1146 = vmatpush.bf16.msra.mxu0 %v917
        %1147 = vmatpush.bf16.msra.mxu0 %v913
        %1148 = vmatpush.bf16.msra.mxu0 %v909
        %1149 = vmatpush.bf16.msra.mxu0 %v905
        %1150 = vmatmul.bf16.gmra.mxu0 %v482
        %v1151 = vpop.f32.mrf.mxu0
        %v1152 = vadd.f32 %v1139, %v1151
        %v1153 = vpop.f32.mrf.mxu0
        %1154 = vdwg.mxu0
        %1155 = vmatpush.bf16.msra.mxu0 %v965
        %1156 = vmatpush.bf16.msra.mxu0 %v961
        %1157 = vmatpush.bf16.msra.mxu0 %v957
        %1158 = vmatpush.bf16.msra.mxu0 %v953
        %1159 = vmatpush.bf16.msra.mxu0 %v949
        %1160 = vmatpush.bf16.msra.mxu0 %v945
        %1161 = vmatpush.bf16.msra.mxu0 %v941
        %1162 = vmatpush.bf16.msra.mxu0 %v937
        %1163 = vmatmul.bf16.gmra.mxu0 %v483
        %v1164 = vpop.f32.mrf.mxu0
        %v1165 = vadd.f32 %v1152, %v1164
        %v1166 = vpop.f32.mrf.mxu0
        %1167 = vdwg.mxu0
        %1168 = vmatpush.bf16.msra.mxu0 %v997
        %1169 = vmatpush.bf16.msra.mxu0 %v993
        %1170 = vmatpush.bf16.msra.mxu0 %v989
        %1171 = vmatpush.bf16.msra.mxu0 %v985
        %1172 = vmatpush.bf16.msra.mxu0 %v981
        %1173 = vmatpush.bf16.msra.mxu0 %v977
        %1174 = vmatpush.bf16.msra.mxu0 %v973
        %1175 = vmatpush.bf16.msra.mxu0 %v969
        %1176 = vmatmul.bf16.gmra.mxu0 %v484
        %v1177 = vpop.f32.mrf.mxu0
        %v1178 = vadd.f32 %v1165, %v1177
        %v1179 = vpop.f32.mrf.mxu0
        %1180 = vdwg.mxu0
        %1181 = vmatpush.bf16.msra.mxu0 %v902
        %1182 = vmatpush.bf16.msra.mxu0 %v898
        %1183 = vmatpush.bf16.msra.mxu0 %v894
        %1184 = vmatpush.bf16.msra.mxu0 %v890
        %1185 = vmatpush.bf16.msra.mxu0 %v886
        %1186 = vmatpush.bf16.msra.mxu0 %v882
        %1187 = vmatpush.bf16.msra.mxu0 %v878
        %1188 = vmatpush.bf16.msra.mxu0 %v874
        %1189 = vmatmul.bf16.gmra.mxu0 %v481
        %v1190 = vpop.f32.mrf.mxu0
        %v1191 = vadd.f32 0.0, %v1190
        %v1192 = vpop.f32.mrf.mxu0
        %1193 = vdwg.mxu0
        %1194 = vmatpush.bf16.msra.mxu0 %v934
        %1195 = vmatpush.bf16.msra.mxu0 %v930
        %1196 = vmatpush.bf16.msra.mxu0 %v926
        %1197 = vmatpush.bf16.msra.mxu0 %v922
        %1198 = vmatpush.bf16.msra.mxu0 %v918
        %1199 = vmatpush.bf16.msra.mxu0 %v914
        %1200 = vmatpush.bf16.msra.mxu0 %v910
        %1201 = vmatpush.bf16.msra.mxu0 %v906
        %1202 = vmatmul.bf16.gmra.mxu0 %v482
        %v1203 = vpop.f32.mrf.mxu0
        %v1204 = vadd.f32 %v1191, %v1203
        %v1205 = vpop.f32.mrf.mxu0
        %1206 = vdwg.mxu0
        %1207 = vmatpush.bf16.msra.mxu0 %v966
        %1208 = vmatpush.bf16.msra.mxu0 %v962
        %1209 = vmatpush.bf16.msra.mxu0 %v958
        %1210 = vmatpush.bf16.msra.mxu0 %v954
        %1211 = vmatpush.bf16.msra.mxu0 %v950
        %1212 = vmatpush.bf16.msra.mxu0 %v946
        %1213 = vmatpush.bf16.msra.mxu0 %v942
        %1214 = vmatpush.bf16.msra.mxu0 %v938
        %1215 = vmatmul.bf16.gmra.mxu0 %v483
        %v1216 = vpop.f32.mrf.mxu0
        %v1217 = vadd.f32 %v1204, %v1216
        %v1218 = vpop.f32.mrf.mxu0
        %1219 = vdwg.mxu0
        %1220 = vmatpush.bf16.msra.mxu0 %v998
        %1221 = vmatpush.bf16.msra.mxu0 %v994
        %1222 = vmatpush.bf16.msra.mxu0 %v990
        %1223 = vmatpush.bf16.msra.mxu0 %v986
        %1224 = vmatpush.bf16.msra.mxu0 %v982
        %1225 = vmatpush.bf16.msra.mxu0 %v978
        %1226 = vmatpush.bf16.msra.mxu0 %v974
        %1227 = vmatpush.bf16.msra.mxu0 %v970
        %1228 = vmatmul.bf16.gmra.mxu0 %v484
        %v1229 = vpop.f32.mrf.mxu0
        %v1230 = vadd.f32 %v1217, %v1229
        %v1231 = vpop.f32.mrf.mxu0
        %1232 = vdwg.mxu0
        %1233 = vmatpush.bf16.msra.mxu0 %v903
        %1234 = vmatpush.bf16.msra.mxu0 %v899
        %1235 = vmatpush.bf16.msra.mxu0 %v895
        %1236 = vmatpush.bf16.msra.mxu0 %v891
        %1237 = vmatpush.bf16.msra.mxu0 %v887
        %1238 = vmatpush.bf16.msra.mxu0 %v883
        %1239 = vmatpush.bf16.msra.mxu0 %v879
        %1240 = vmatpush.bf16.msra.mxu0 %v875
        %1241 = vmatmul.bf16.gmra.mxu0 %v481
        %v1242 = vpop.f32.mrf.mxu0
        %v1243 = vadd.f32 0.0, %v1242
        %v1244 = vpop.f32.mrf.mxu0
        %1245 = vdwg.mxu0
        %1246 = vmatpush.bf16.msra.mxu0 %v935
        %1247 = vmatpush.bf16.msra.mxu0 %v931
        %1248 = vmatpush.bf16.msra.mxu0 %v927
        %1249 = vmatpush.bf16.msra.mxu0 %v923
        %1250 = vmatpush.bf16.msra.mxu0 %v919
        %1251 = vmatpush.bf16.msra.mxu0 %v915
        %1252 = vmatpush.bf16.msra.mxu0 %v911
        %1253 = vmatpush.bf16.msra.mxu0 %v907
        %1254 = vmatmul.bf16.gmra.mxu0 %v482
        %v1255 = vpop.f32.mrf.mxu0
        %v1256 = vadd.f32 %v1243, %v1255
        %v1257 = vpop.f32.mrf.mxu0
        %1258 = vdwg.mxu0
        %1259 = vmatpush.bf16.msra.mxu0 %v967
        %1260 = vmatpush.bf16.msra.mxu0 %v963
        %1261 = vmatpush.bf16.msra.mxu0 %v959
        %1262 = vmatpush.bf16.msra.mxu0 %v955
        %1263 = vmatpush.bf16.msra.mxu0 %v951
        %1264 = vmatpush.bf16.msra.mxu0 %v947
        %1265 = vmatpush.bf16.msra.mxu0 %v943
        %1266 = vmatpush.bf16.msra.mxu0 %v939
        %1267 = vmatmul.bf16.gmra.mxu0 %v483
        %v1268 = vpop.f32.mrf.mxu0
        %v1269 = vadd.f32 %v1256, %v1268
        %v1270 = vpop.f32.mrf.mxu0
        %1271 = vdwg.mxu0
        %1272 = vmatpush.bf16.msra.mxu0 %v999
        %1273 = vmatpush.bf16.msra.mxu0 %v995
        %1274 = vmatpush.bf16.msra.mxu0 %v991
        %1275 = vmatpush.bf16.msra.mxu0 %v987
        %1276 = vmatpush.bf16.msra.mxu0 %v983
        %1277 = vmatpush.bf16.msra.mxu0 %v979
        %1278 = vmatpush.bf16.msra.mxu0 %v975
        %1279 = vmatpush.bf16.msra.mxu0 %v971
        %1280 = vmatmul.bf16.gmra.mxu0 %v484
        %v1281 = vpop.f32.mrf.mxu0
        %v1282 = vadd.f32 %v1269, %v1281
        %v1283 = vpop.f32.mrf.mxu0
        %1284 = vdwg.mxu0
        %1285 = vmatpush.bf16.msra.mxu0 %v904
        %1286 = vmatpush.bf16.msra.mxu0 %v900
        %1287 = vmatpush.bf16.msra.mxu0 %v896
        %1288 = vmatpush.bf16.msra.mxu0 %v892
        %1289 = vmatpush.bf16.msra.mxu0 %v888
        %1290 = vmatpush.bf16.msra.mxu0 %v884
        %1291 = vmatpush.bf16.msra.mxu0 %v880
        %1292 = vmatpush.bf16.msra.mxu0 %v876
        %1293 = vmatmul.bf16.gmra.mxu0 %v481
        %v1294 = vpop.f32.mrf.mxu0
        %v1295 = vadd.f32 0.0, %v1294
        %v1296 = vpop.f32.mrf.mxu0
        %1297 = vdwg.mxu0
        %1298 = vmatpush.bf16.msra.mxu0 %v936
        %1299 = vmatpush.bf16.msra.mxu0 %v932
        %1300 = vmatpush.bf16.msra.mxu0 %v928
        %1301 = vmatpush.bf16.msra.mxu0 %v924
        %1302 = vmatpush.bf16.msra.mxu0 %v920
        %1303 = vmatpush.bf16.msra.mxu0 %v916
        %1304 = vmatpush.bf16.msra.mxu0 %v912
        %1305 = vmatpush.bf16.msra.mxu0 %v908
        %1306 = vmatmul.bf16.gmra.mxu0 %v482
        %v1307 = vpop.f32.mrf.mxu0
        %v1308 = vadd.f32 %v1295, %v1307
        %v1309 = vpop.f32.mrf.mxu0
        %1310 = vdwg.mxu0
        %1311 = vmatpush.bf16.msra.mxu0 %v968
        %1312 = vmatpush.bf16.msra.mxu0 %v964
        %1313 = vmatpush.bf16.msra.mxu0 %v960
        %1314 = vmatpush.bf16.msra.mxu0 %v956
        %1315 = vmatpush.bf16.msra.mxu0 %v952
        %1316 = vmatpush.bf16.msra.mxu0 %v948
        %1317 = vmatpush.bf16.msra.mxu0 %v944
        %1318 = vmatpush.bf16.msra.mxu0 %v940
        %1319 = vmatmul.bf16.gmra.mxu0 %v483
        %v1320 = vpop.f32.mrf.mxu0
        %v1321 = vadd.f32 %v1308, %v1320
        %v1322 = vpop.f32.mrf.mxu0
        %1323 = vdwg.mxu0
        %1324 = vmatpush.bf16.msra.mxu0 %v1000
        %1325 = vmatpush.bf16.msra.mxu0 %v996
        %1326 = vmatpush.bf16.msra.mxu0 %v992
        %1327 = vmatpush.bf16.msra.mxu0 %v988
        %1328 = vmatpush.bf16.msra.mxu0 %v984
        %1329 = vmatpush.bf16.msra.mxu0 %v980
        %1330 = vmatpush.bf16.msra.mxu0 %v976
        %1331 = vmatpush.bf16.msra.mxu0 %v972
        %1332 = vmatmul.bf16.gmra.mxu0 %v484
        %v1333 = vpop.f32.mrf.mxu0
        %v1334 = vadd.f32 %v1321, %v1333
        %v1335 = vpop.f32.mrf.mxu0
        %1336 = vdwg.mxu0
        %v1341 = vrot.slane %v1230, 6
        %v1342 = vrot.slane %v1282, 4
        %v1343 = vrot.slane %v1334, 2
        %vm1344 = vcmask 1041408
        %v1345 = vsel %vm1344, %v1178, %v1341
        %vm1346 = vcmask 1045508
        %v1347 = vsel %vm1346, %v1342, %v1343
        %vm1348 = vcmask 1043456
        %v1349 = vsel %vm1348, %v1345, %v1347
        %v1351 = vadd.f32 %v349, %v1349
        %1352 = vst [vmem:[#allocation2] sm:$0xff] %v1351
        %p1353 = scmp.eq.s32.totalorder %s21, 7
        // Predicated region
        $region61: #{pick_forward.7} parent=55 // pred_check
          %p1354 = pneg %p1353
        $region62: #{pick_forward.7} parent=55 // pred_check_branch
          %1356 = sbr.rel (%p1354) target = $region64
        $region63: #{pick_forward.7} parent=55 // pred_region
          %v1357 = vld [vmem:[#allocation2] sm:$0xff]
          %v1358 = vld [vmem:[%s2] sm:$0xf]
          %v1360 = vperm.slane %v1358, 0
          %v1361 = vperm.slane %v1358, 1
          %v1362 = vperm.slane %v1358, 2
          %v1363 = vperm.slane %v1358, 3
          %v1364 = vrot.slane %v1361, 6
          %v1365 = vrot.slane %v1362, 4
          %v1366 = vrot.slane %v1363, 2
          %v1367 = vsel %vm1344, %v1360, %v1364
          %v1368 = vsel %vm1346, %v1365, %v1366
          %v1369 = vsel %vm1348, %v1367, %v1368
          %v1371 = vadd.f32 %v1357, %v1369
          %v1372 = vmax.f32 %v1371, 0.0
          %1374 = vst [vmem:[#allocation1] ss:$4 sm:$0xff] %v1372
          %v1375 = vld.sshfl [vmem:[#allocation1] sm:$0xff pattern:$0x73625140]
          %v1376 = vld.sshfl [vmem:[#allocation1 + $0x8] sm:$0xff pattern:$0x73625140]
          %v1377 = vld.sshfl [vmem:[#allocation1 + $0x10] sm:$0xff pattern:$0x73625140]
          %v1378 = vld.sshfl [vmem:[#allocation1 + $0x18] sm:$0xff pattern:$0x73625140]
          %v1383 = vpack.c.bf16 %v1375, %v1375
          %v1384 = vpack.c.bf16 %v1376, %v1376
          %v1385 = vpack.c.bf16 %v1377, %v1377
          %v1386 = vpack.c.bf16 %v1378, %v1378
          %v1387 = vld [vmem:[%s3] sm:$0xf]
          %v1388 = vld [vmem:[%s3 + $0x4] sm:$0xf]
          %v1389 = vld [vmem:[%s3 + $0x8] sm:$0xf]
          %v1390 = vld [vmem:[%s3 + $0xc] sm:$0xf]
          %v1391 = vld [vmem:[%s3 + $0x10] sm:$0xf]
          %v1392 = vld [vmem:[%s3 + $0x14] sm:$0xf]
          %v1393 = vld [vmem:[%s3 + $0x18] sm:$0xf]
          %v1394 = vld [vmem:[%s3 + $0x1c] sm:$0xf]
          %v1395 = vld [vmem:[%s3 + $0x20] sm:$0xf]
          %v1396 = vld [vmem:[%s3 + $0x24] sm:$0xf]
          %v1397 = vld [vmem:[%s3 + $0x28] sm:$0xf]
          %v1398 = vld [vmem:[%s3 + $0x2c] sm:$0xf]
          %v1399 = vld [vmem:[%s3 + $0x30] sm:$0xf]
          %v1400 = vld [vmem:[%s3 + $0x34] sm:$0xf]
          %v1401 = vld [vmem:[%s3 + $0x38] sm:$0xf]
          %v1402 = vld [vmem:[%s3 + $0x3c] sm:$0xf]
          %v1403 = vld [vmem:[%s3 + $0x40] sm:$0xf]
          %v1404 = vld [vmem:[%s3 + $0x44] sm:$0xf]
          %v1405 = vld [vmem:[%s3 + $0x48] sm:$0xf]
          %v1406 = vld [vmem:[%s3 + $0x4c] sm:$0xf]
          %v1407 = vld [vmem:[%s3 + $0x50] sm:$0xf]
          %v1408 = vld [vmem:[%s3 + $0x54] sm:$0xf]
          %v1409 = vld [vmem:[%s3 + $0x58] sm:$0xf]
          %v1410 = vld [vmem:[%s3 + $0x5c] sm:$0xf]
          %v1411 = vld [vmem:[%s3 + $0x60] sm:$0xf]
          %v1412 = vld [vmem:[%s3 + $0x64] sm:$0xf]
          %v1413 = vld [vmem:[%s3 + $0x68] sm:$0xf]
          %v1414 = vld [vmem:[%s3 + $0x6c] sm:$0xf]
          %v1415 = vld [vmem:[%s3 + $0x70] sm:$0xf]
          %v1416 = vld [vmem:[%s3 + $0x74] sm:$0xf]
          %v1417 = vld [vmem:[%s3 + $0x78] sm:$0xf]
          %v1418 = vld [vmem:[%s3 + $0x7c] sm:$0xf]
          %v1419 = vld [vmem:[%s3 + $0x80] sm:$0xf]
          %v1420 = vld [vmem:[%s3 + $0x84] sm:$0xf]
          %v1421 = vld [vmem:[%s3 + $0x88] sm:$0xf]
          %v1422 = vld [vmem:[%s3 + $0x8c] sm:$0xf]
          %v1423 = vld [vmem:[%s3 + $0x90] sm:$0xf]
          %v1424 = vld [vmem:[%s3 + $0x94] sm:$0xf]
          %v1425 = vld [vmem:[%s3 + $0x98] sm:$0xf]
          %v1426 = vld [vmem:[%s3 + $0x9c] sm:$0xf]
          %v1427 = vld [vmem:[%s3 + $0xa0] sm:$0xf]
          %v1428 = vld [vmem:[%s3 + $0xa4] sm:$0xf]
          %v1429 = vld [vmem:[%s3 + $0xa8] sm:$0xf]
          %v1430 = vld [vmem:[%s3 + $0xac] sm:$0xf]
          %v1431 = vld [vmem:[%s3 + $0xb0] sm:$0xf]
          %v1432 = vld [vmem:[%s3 + $0xb4] sm:$0xf]
          %v1433 = vld [vmem:[%s3 + $0xb8] sm:$0xf]
          %v1434 = vld [vmem:[%s3 + $0xbc] sm:$0xf]
          %v1435 = vld [vmem:[%s3 + $0xc0] sm:$0xf]
          %v1436 = vld [vmem:[%s3 + $0xc4] sm:$0xf]
          %v1437 = vld [vmem:[%s3 + $0xc8] sm:$0xf]
          %v1438 = vld [vmem:[%s3 + $0xcc] sm:$0xf]
          %v1439 = vld [vmem:[%s3 + $0xd0] sm:$0xf]
          %v1440 = vld [vmem:[%s3 + $0xd4] sm:$0xf]
          %v1441 = vld [vmem:[%s3 + $0xd8] sm:$0xf]
          %v1442 = vld [vmem:[%s3 + $0xdc] sm:$0xf]
          %v1443 = vld [vmem:[%s3 + $0xe0] sm:$0xf]
          %v1444 = vld [vmem:[%s3 + $0xe4] sm:$0xf]
          %v1445 = vld [vmem:[%s3 + $0xe8] sm:$0xf]
          %v1446 = vld [vmem:[%s3 + $0xec] sm:$0xf]
          %v1447 = vld [vmem:[%s3 + $0xf0] sm:$0xf]
          %v1448 = vld [vmem:[%s3 + $0xf4] sm:$0xf]
          %v1449 = vld [vmem:[%s3 + $0xf8] sm:$0xf]
          %v1450 = vld [vmem:[%s3 + $0xfc] sm:$0xf]
          %v1451 = vld [vmem:[%s4] sm:$0x1]
          %v1453 = vperm.slane %v1451, 0
          %v1519 = vunpack.c.l.b16 %v1387
          %v1520 = vunpack.c.l.b16 %v1388
          %v1521 = vunpack.c.l.b16 %v1389
          %v1522 = vunpack.c.l.b16 %v1390
          %v1523 = vunpack.c.l.b16 %v1391
          %v1524 = vunpack.c.l.b16 %v1392
          %v1525 = vunpack.c.l.b16 %v1393
          %v1526 = vunpack.c.l.b16 %v1394
          %v1527 = vunpack.c.l.b16 %v1395
          %v1528 = vunpack.c.l.b16 %v1396
          %v1529 = vunpack.c.l.b16 %v1397
          %v1530 = vunpack.c.l.b16 %v1398
          %v1531 = vunpack.c.l.b16 %v1399
          %v1532 = vunpack.c.l.b16 %v1400
          %v1533 = vunpack.c.l.b16 %v1401
          %v1534 = vunpack.c.l.b16 %v1402
          %v1535 = vunpack.c.l.b16 %v1403
          %v1536 = vunpack.c.l.b16 %v1404
          %v1537 = vunpack.c.l.b16 %v1405
          %v1538 = vunpack.c.l.b16 %v1406
          %v1539 = vunpack.c.l.b16 %v1407
          %v1540 = vunpack.c.l.b16 %v1408
          %v1541 = vunpack.c.l.b16 %v1409
          %v1542 = vunpack.c.l.b16 %v1410
          %v1543 = vunpack.c.l.b16 %v1411
          %v1544 = vunpack.c.l.b16 %v1412
          %v1545 = vunpack.c.l.b16 %v1413
          %v1546 = vunpack.c.l.b16 %v1414
          %v1547 = vunpack.c.l.b16 %v1415
          %v1548 = vunpack.c.l.b16 %v1416
          %v1549 = vunpack.c.l.b16 %v1417
          %v1550 = vunpack.c.l.b16 %v1418
          %v1551 = vunpack.c.l.b16 %v1419
          %v1552 = vunpack.c.l.b16 %v1420
          %v1553 = vunpack.c.l.b16 %v1421
          %v1554 = vunpack.c.l.b16 %v1422
          %v1555 = vunpack.c.l.b16 %v1423
          %v1556 = vunpack.c.l.b16 %v1424
          %v1557 = vunpack.c.l.b16 %v1425
          %v1558 = vunpack.c.l.b16 %v1426
          %v1559 = vunpack.c.l.b16 %v1427
          %v1560 = vunpack.c.l.b16 %v1428
          %v1561 = vunpack.c.l.b16 %v1429
          %v1562 = vunpack.c.l.b16 %v1430
          %v1563 = vunpack.c.l.b16 %v1431
          %v1564 = vunpack.c.l.b16 %v1432
          %v1565 = vunpack.c.l.b16 %v1433
          %v1566 = vunpack.c.l.b16 %v1434
          %v1567 = vunpack.c.l.b16 %v1435
          %v1568 = vunpack.c.l.b16 %v1436
          %v1569 = vunpack.c.l.b16 %v1437
          %v1570 = vunpack.c.l.b16 %v1438
          %v1571 = vunpack.c.l.b16 %v1439
          %v1572 = vunpack.c.l.b16 %v1440
          %v1573 = vunpack.c.l.b16 %v1441
          %v1574 = vunpack.c.l.b16 %v1442
          %v1575 = vunpack.c.l.b16 %v1443
          %v1576 = vunpack.c.l.b16 %v1444
          %v1577 = vunpack.c.l.b16 %v1445
          %v1578 = vunpack.c.l.b16 %v1446
          %v1579 = vunpack.c.l.b16 %v1447
          %v1580 = vunpack.c.l.b16 %v1448
          %v1581 = vunpack.c.l.b16 %v1449
          %v1582 = vunpack.c.l.b16 %v1450
          %v1583 = vpack.c.b16 %v1520, %v1519
          %v1584 = vpack.c.b16 %v1522, %v1521
          %v1585 = vpack.c.b16 %v1524, %v1523
          %v1586 = vpack.c.b16 %v1526, %v1525
          %v1587 = vpack.c.b16 %v1528, %v1527
          %v1588 = vpack.c.b16 %v1530, %v1529
          %v1589 = vpack.c.b16 %v1532, %v1531
          %v1590 = vpack.c.b16 %v1534, %v1533
          %v1591 = vpack.c.b16 %v1536, %v1535
          %v1592 = vpack.c.b16 %v1538, %v1537
          %v1593 = vpack.c.b16 %v1540, %v1539
          %v1594 = vpack.c.b16 %v1542, %v1541
          %v1595 = vpack.c.b16 %v1544, %v1543
          %v1596 = vpack.c.b16 %v1546, %v1545
          %v1597 = vpack.c.b16 %v1548, %v1547
          %v1598 = vpack.c.b16 %v1550, %v1549
          %v1599 = vpack.c.b16 %v1552, %v1551
          %v1600 = vpack.c.b16 %v1554, %v1553
          %v1601 = vpack.c.b16 %v1556, %v1555
          %v1602 = vpack.c.b16 %v1558, %v1557
          %v1603 = vpack.c.b16 %v1560, %v1559
          %v1604 = vpack.c.b16 %v1562, %v1561
          %v1605 = vpack.c.b16 %v1564, %v1563
          %v1606 = vpack.c.b16 %v1566, %v1565
          %v1607 = vpack.c.b16 %v1568, %v1567
          %v1608 = vpack.c.b16 %v1570, %v1569
          %v1609 = vpack.c.b16 %v1572, %v1571
          %v1610 = vpack.c.b16 %v1574, %v1573
          %v1611 = vpack.c.b16 %v1576, %v1575
          %v1612 = vpack.c.b16 %v1578, %v1577
          %v1613 = vpack.c.b16 %v1580, %v1579
          %v1614 = vpack.c.b16 %v1582, %v1581
          %1647 = vmatpush.bf16.msra.mxu0 %v1590
          %1648 = vmatpush.bf16.msra.mxu0 %v1589
          %1649 = vmatpush.bf16.msra.mxu0 %v1588
          %1650 = vmatpush.bf16.msra.mxu0 %v1587
          %1651 = vmatpush.bf16.msra.mxu0 %v1586
          %1652 = vmatpush.bf16.msra.mxu0 %v1585
          %1653 = vmatpush.bf16.msra.mxu0 %v1584
          %1654 = vmatpush.bf16.msra.mxu0 %v1583
          %1655 = vmatmul.bf16.gmra.mxu0 %v1383
          %v1656 = vpop.f32.mrf.mxu0
          %v1657 = vadd.f32 %v1453, %v1656
          %v1658 = vpop.f32.mrf.mxu0
          %1659 = vdwg.mxu0
          %1660 = vmatpush.bf16.msra.mxu0 %v1598
          %1661 = vmatpush.bf16.msra.mxu0 %v1597
          %1662 = vmatpush.bf16.msra.mxu0 %v1596
          %1663 = vmatpush.bf16.msra.mxu0 %v1595
          %1664 = vmatpush.bf16.msra.mxu0 %v1594
          %1665 = vmatpush.bf16.msra.mxu0 %v1593
          %1666 = vmatpush.bf16.msra.mxu0 %v1592
          %1667 = vmatpush.bf16.msra.mxu0 %v1591
          %1668 = vmatmul.bf16.gmra.mxu0 %v1384
          %v1669 = vpop.f32.mrf.mxu0
          %v1670 = vadd.f32 %v1657, %v1669
          %v1671 = vpop.f32.mrf.mxu0
          %1672 = vdwg.mxu0
          %1673 = vmatpush.bf16.msra.mxu0 %v1606
          %1674 = vmatpush.bf16.msra.mxu0 %v1605
          %1675 = vmatpush.bf16.msra.mxu0 %v1604
          %1676 = vmatpush.bf16.msra.mxu0 %v1603
          %1677 = vmatpush.bf16.msra.mxu0 %v1602
          %1678 = vmatpush.bf16.msra.mxu0 %v1601
          %1679 = vmatpush.bf16.msra.mxu0 %v1600
          %1680 = vmatpush.bf16.msra.mxu0 %v1599
          %1681 = vmatmul.bf16.gmra.mxu0 %v1385
          %v1682 = vpop.f32.mrf.mxu0
          %v1683 = vadd.f32 %v1670, %v1682
          %v1684 = vpop.f32.mrf.mxu0
          %1685 = vdwg.mxu0
          %1686 = vmatpush.bf16.msra.mxu0 %v1614
          %1687 = vmatpush.bf16.msra.mxu0 %v1613
          %1688 = vmatpush.bf16.msra.mxu0 %v1612
          %1689 = vmatpush.bf16.msra.mxu0 %v1611
          %1690 = vmatpush.bf16.msra.mxu0 %v1610
          %1691 = vmatpush.bf16.msra.mxu0 %v1609
          %1692 = vmatpush.bf16.msra.mxu0 %v1608
          %1693 = vmatpush.bf16.msra.mxu0 %v1607
          %1694 = vmatmul.bf16.gmra.mxu0 %v1386
          %v1695 = vpop.f32.mrf.mxu0
          %v1696 = vadd.f32 %v1683, %v1695
          %v1697 = vpop.f32.mrf.mxu0
          %1698 = vdwg.mxu0
          %v1699 = vmax.f32 %v1696, 0.0
          %v1700 = vpack.c.bf16 %v1699, %v1699
          %v1701 = vld [vmem:[%s5] sm:$0xf]
          %v1702 = vld [vmem:[%s5 + $0x4] sm:$0xf]
          %v1703 = vld [vmem:[%s5 + $0x8] sm:$0xf]
          %v1704 = vld [vmem:[%s5 + $0xc] sm:$0xf]
          %v1705 = vld [vmem:[%s5 + $0x10] sm:$0xf]
          %v1706 = vld [vmem:[%s5 + $0x14] sm:$0xf]
          %v1707 = vld [vmem:[%s5 + $0x18] sm:$0xf]
          %v1708 = vld [vmem:[%s5 + $0x1c] sm:$0xf]
          %v1709 = vld [vmem:[%s5 + $0x20] sm:$0xf]
          %v1710 = vld [vmem:[%s5 + $0x24] sm:$0xf]
          %v1711 = vld [vmem:[%s5 + $0x28] sm:$0xf]
          %v1712 = vld [vmem:[%s5 + $0x2c] sm:$0xf]
          %v1713 = vld [vmem:[%s5 + $0x30] sm:$0xf]
          %v1714 = vld [vmem:[%s5 + $0x34] sm:$0xf]
          %v1715 = vld [vmem:[%s5 + $0x38] sm:$0xf]
          %v1716 = vld [vmem:[%s5 + $0x3c] sm:$0xf]
          %v1717 = vld [vmem:[%s6] sm:$0x1]
          %v1719 = vperm.slane %v1717, 0
          %v1737 = vunpack.c.l.b16 %v1701
          %v1738 = vunpack.c.l.b16 %v1702
          %v1739 = vunpack.c.l.b16 %v1703
          %v1740 = vunpack.c.l.b16 %v1704
          %v1741 = vunpack.c.l.b16 %v1705
          %v1742 = vunpack.c.l.b16 %v1706
          %v1743 = vunpack.c.l.b16 %v1707
          %v1744 = vunpack.c.l.b16 %v1708
          %v1745 = vunpack.c.l.b16 %v1709
          %v1746 = vunpack.c.l.b16 %v1710
          %v1747 = vunpack.c.l.b16 %v1711
          %v1748 = vunpack.c.l.b16 %v1712
          %v1749 = vunpack.c.l.b16 %v1713
          %v1750 = vunpack.c.l.b16 %v1714
          %v1751 = vunpack.c.l.b16 %v1715
          %v1752 = vunpack.c.l.b16 %v1716
          %v1753 = vpack.c.b16 %v1738, %v1737
          %v1754 = vpack.c.b16 %v1740, %v1739
          %v1755 = vpack.c.b16 %v1742, %v1741
          %v1756 = vpack.c.b16 %v1744, %v1743
          %v1757 = vpack.c.b16 %v1746, %v1745
          %v1758 = vpack.c.b16 %v1748, %v1747
          %v1759 = vpack.c.b16 %v1750, %v1749
          %v1760 = vpack.c.b16 %v1752, %v1751
          %1769 = vmatpush.bf16.msra.mxu0 %v1760
          %1770 = vmatpush.bf16.msra.mxu0 %v1759
          %1771 = vmatpush.bf16.msra.mxu0 %v1758
          %1772 = vmatpush.bf16.msra.mxu0 %v1757
          %1773 = vmatpush.bf16.msra.mxu0 %v1756
          %1774 = vmatpush.bf16.msra.mxu0 %v1755
          %1775 = vmatpush.bf16.msra.mxu0 %v1754
          %1776 = vmatpush.bf16.msra.mxu0 %v1753
          %1777 = vmatmul.bf16.gmra.mxu0 %v1700
          %v1778 = vpop.f32.mrf.mxu0
          %v1779 = vadd.f32 %v1719, %v1778
          %v1780 = vpop.f32.mrf.mxu0
          %1781 = vdwg.mxu0
          %v1782 = vmax.f32 %v1779, 0.0
          %v1783 = vpack.c.bf16 %v1782, %v1782
          %v1784 = vld [vmem:[%s7] sm:$0xf]
          %v1785 = vld [vmem:[%s7 + $0x4] sm:$0xf]
          %v1786 = vld [vmem:[%s7 + $0x8] sm:$0xf]
          %v1787 = vld [vmem:[%s7 + $0xc] sm:$0xf]
          %v1788 = vld [vmem:[%s8] sm:$0x1]
          %v1790 = vperm.slane %v1788, 0
          %v1796 = vunpack.c.l.b16 %v1784
          %v1797 = vunpack.c.l.b16 %v1785
          %v1798 = vunpack.c.l.b16 %v1786
          %v1799 = vunpack.c.l.b16 %v1787
          %v1800 = vpack.c.b16 %v1797, %v1796
          %v1801 = vpack.c.b16 %v1799, %v1798
          %vm1804 = vcmask 261120
          %v1806 = vsel %vm1804, %v1783, 0
          %1808 = vmatpush.bf16.msra.mxu0 0
          %1809 = vmatpush.bf16.msra.mxu0 0
          %1810 = vmatpush.bf16.msra.mxu0 0
          %1811 = vmatpush.bf16.msra.mxu0 0
          %1812 = vmatpush.bf16.msra.mxu0 0
          %1813 = vmatpush.bf16.msra.mxu0 0
          %1814 = vmatpush.bf16.msra.mxu0 %v1801
          %1815 = vmatpush.bf16.msra.mxu0 %v1800
          %1816 = vmatmul.bf16.gmra.mxu0 %v1806
          %v1817 = vpop.f32.mrf.mxu0
          %v1818 = vadd.f32 %v1790, %v1817
          %v1819 = vpop.f32.mrf.mxu0
          %1820 = vdwg.mxu0
          %vm1821 = vcmask 41984
          %v1822 = vsel %vm1821, %v1818, -inf
          %1823 = vmax.xlane.f32.xlu0 %v1822
          %v1824 = vpop.xlane.xlu0 %1823
          %v1825 = vsub.f32 %v1818, %v1824
          %v1826 = vmul.f32 %v1825, 1.442695
          %v1827 = vpow.pop %v1826
          %v1828 = vsel %vm1821, %v1827, 0.0
          %1829 = vadd.xlane.f32.xlu0 %v1828
          %v1830 = vpop.xlane.xlu0 %1829
          %v1831 = vrcp.pop %v1830
          %v1832 = vmul.f32 %v1830, %v1831
          %v1833 = vsub.f32 1.0, %v1832
          %v1834 = vmul.f32 %v1831, %v1833
          %v1835 = vadd.f32 %v1831, %v1834
          %vm1836 = vweird.f32 %v1830
          %vm1837 = vweird.f32 %v1831
          %vm1838 = vmor %vm1836, %vm1837
          %v1839 = vsel %vm1838, %v1831, %v1835
          %v1840 = vand.u32 2147483647, %v1830
          %vm1841 = vcmp.eq.f32.partialorder %v1840, 8.507059e+37
          %v1842 = vand.u32 %v1830, 2147483648
          %v1843 = vor.u32 1.1754944e-38, %v1842
          %v1844 = vsel %vm1841, %v1843, %v1839
          %v1845 = vmul.f32 %v1827, %v1844
          %1846 = vst.msk [vmem:[#allocation3] sm:$0x3] %vm1821, %v1845
        $region64: #{pick_forward.7} parent=55 // pred_fallthru
          _
        // Predicated region
        $region65: #{pick_forward.7} parent=55 // pred_check
          %p1847 = pneg %p233
        $region66: #{pick_forward.7} parent=55 // pred_check_branch
          %1849 = sbr.rel (%p1847) target = $region68
        $region67: #{pick_forward.7} parent=55 // pred_region
          %1851 = vsyncadd [#allocation4], 0
          %s1853 = sshll.u32 [#allocation3], 4
          %s1854 = int_to_ptr.vmem [resolvable:$true] %s1853
          %s1855 = sshll.u32 %s9, 4
          %s1856 = int_to_ptr.hbm [resolvable:$true] %s1855
          %1858 = dma.vmem_to_hbm [thread:$0]  %s1854, 32, %s1856, [#allocation4]
        $region68: #{pick_forward.7} parent=55 // pred_fallthru
          _
        // Predicated region
        $region69: #{pick_forward.7} parent=55 // pred_check
          %p1859 = pneg %p233
        $region70: #{pick_forward.7} parent=55 // pred_check_branch
          %1861 = sbr.rel (%p1859) target = $region72
        $region71: #{pick_forward.7} parent=55 // pred_region
          %1863 = dma.done [#allocation4], 32
        $region72: #{pick_forward.7} parent=55 // pred_fallthru
          _
      $region56: #{pick_forward.7} parent=5 // pred_fallthru
        _
      %p1864 = scmp.le.s32.totalorder 2, %s16
      // Predicated region
      $region73: #{pick_forward.7} parent=5 // pred_check
        %p1865 = pneg %p1864
      $region74: #{pick_forward.7} parent=5 // pred_check_branch
        %1867 = sbr.rel (%p1865) target = $region76
      $region75: #{pick_forward.7} parent=5 // pred_region
        %s1868 = ssub.s32 %s16, 2
      $region76: #{pick_forward.7} parent=5 // pred_fallthru
        _
    $region6: #{pick_forward.7} parent=1 // loop_footer
      %s20 = sadd.s32 1, %s16
    $region7: #{pick_forward.7} parent=1 // loop_footer_branch
      %15 = sbr.rel target = $region3
    $region8: #{pick_forward.7} parent=1 // loop_exit
      _
    %1869 = vsyncpa [#allocation4], 1
    %s1870 = scalar_lea.sflag [#allocation4], 1
    %1871 = vsyncpa %s1870, 1

</llo_original>
